<compile_context>
chip_gen: v5e
topology: v5e:2x2
jax: 0.10.0
libtpu: 0.0.40
codegen_flags: <defaults>
</compile_context>

<pallas_src>
import functools

import jax
import jax.numpy as jnp
from jax import lax
from jax.experimental import pallas as pl
from jax.experimental.pallas import tpu as pltpu

# Matmul-operand dtype.  bf16 is the native MXU format on v5e/v6e/v7x and
# halves operand VMEM/DMA traffic; accumulation stays f32 via
# preferred_element_type.  Set to jnp.float32 to reproduce the f32 reference
# bit-closely (the verification tolerance below adapts automatically).
MATMUL_DTYPE = jnp.bfloat16


# --------------------------- BN + FiLM folding ------------------------------

def fuse_bn_film(bn_w, bn_b, mean, var, f_g, f_b, eps=1e-5):
    """Fold eval-mode BatchNorm + FiLM into a single per-channel affine."""
    inv = bn_w / jnp.sqrt(var + eps)
    scale = f_g * inv
    bias = f_g * (bn_b - mean * inv) + f_b
    return scale, bias


# ----------------------------- fused kernel ---------------------------------

def _make_kernel(H, W, planes, stride, has_shortcut, fuse_sc):
    """One grid step processes one image; everything stays in VMEM."""
    HW = H * W
    P = planes
    Ho = H // stride
    PADB = ((W + 1 + 7) // 8) * 8      # zero border rows of the staging bufs
    sep_sc = has_shortcut and not fuse_sc        # stride>1 shortcut path
    n_in = 11 if sep_sc else 10
    f32 = jnp.float32
    TAPS = [(dh, dw) for dh in (-1, 0, 1) for dw in (-1, 0, 1)]

    def h_sub(v):
        """Keep only rows with h % stride == 0 (free reshapes + aligned slice)."""
        if stride == 1:
            return v
        c = v.shape[-1]
        return v.reshape(Ho, stride * W, c)[:, :W, :].reshape(Ho * W, c)

    def kernel(*refs):
        (x_ref, s1_ref, b1_ref, w1_ref, s2_ref, b2_ref, w2_ref,
         s3_ref, b3_ref, w3_ref) = refs[:10]
        wsc_ref = refs[10] if sep_sc else None
        o_ref = refs[n_in]
        bl_ref, bc_ref, br_ref, col_ref = refs[n_in + 1:]

        x = x_ref[0]                                              # (HW, Cin) f32
        pre1 = jnp.maximum(x * s1_ref[...] + b1_ref[...], 0.0)
        p1m = pre1.astype(MATMUL_DTYPE)

        # conv1 (1x1) [+ fused shortcut 1x1].  The shortcut is written straight
        # into o_ref so its live range is a single statement.
        if fuse_sc:
            both = jnp.dot(p1m, w1_ref[...], preferred_element_type=f32)
            out1 = both[:, :P]
            o_ref[0] = both[:, P:]
        else:
            out1 = jnp.dot(p1m, w1_ref[...], preferred_element_type=f32)
            if sep_sc:                       # stride>1: shortcut on H/s rows
                o_ref[0] = jnp.dot(h_sub(p1m), wsc_ref[...],
                                   preferred_element_type=f32)
            else:                            # identity (stride==1, Cin==Cout)
                o_ref[0] = x

        pre2 = jnp.maximum(out1 * s2_ref[...] + b2_ref[...], 0.0)    # (HW, P)

        # conv2 (3x3, pad 1) as ONE K=9*planes matmul.  Stage pre2 plus two
        # wrap-masked copies (for the dw=+-1 taps) into zero-bordered VMEM
        # buffers, gather the 9 shifted windows (sublane-aligned starts only
        # need the buffer reads to be offset by +-1) into the im2col scratch,
        # then contract once against the (9P, P) weight.
        wi = lax.broadcasted_iota(jnp.int32, (HW, 1), 0) % W
        src_c = pre2
        src_l = jnp.where(wi <= W - 2, pre2, 0.0)       # used by dw = -1 taps
        src_r = jnp.where(wi >= 1, pre2, 0.0)           # used by dw = +1 taps
        zero_pad = jnp.zeros((PADB, P), f32)
        for b_ref, src in ((bl_ref, src_l), (bc_ref, src_c), (br_ref, src_r)):
            b_ref[0:PADB, :] = zero_pad                         # top border
            b_ref[PADB + HW:PADB + HW + PADB, :] = zero_pad     # bottom border
            b_ref[PADB:PADB + HW, :] = src                      # interior
        for t, (dh, dw) in enumerate(TAPS):
            b_ref = (bl_ref, bc_ref, br_ref)[dw + 1]
            start = PADB + dh * W + dw
            col_ref[:, t * P:(t + 1) * P] = (
                b_ref[start:start + HW, :].astype(col_ref.dtype))
        acc = jnp.dot(col_ref[...], w2_ref[...], preferred_element_type=f32)

        # in-kernel h-direction stride subsample (w handled in the wrapper).
        acc = h_sub(acc)

        # affine3 + relu, conv3 (1x1), residual add into the already-written
        # shortcut.
        pre3 = jnp.maximum(acc * s3_ref[...] + b3_ref[...], 0.0)
        out3 = jnp.dot(pre3.astype(MATMUL_DTYPE), w3_ref[...],
                       preferred_element_type=f32)
        o_ref[0] = o_ref[0] + out3

    return kernel, PADB


# ------------------------- Bottleneck forward -------------------------------

def bottleneck_forward(x_nchw, p, stride):
    """Pallas-kernel forward.  Input/output NCHW (PyTorch convention).

    NOTE: when chaining blocks, keep activations NHWC between blocks and only
    transpose at network entry/exit; the transposes here are interface glue.
    """
    x = jnp.transpose(x_nchw, (0, 2, 3, 1)).astype(jnp.float32)     # -> NHWC
    N, H, W, Cin = x.shape
    HW = H * W
    planes = p["w1"].shape[0]
    Cout = p["w3"].shape[0]
    has_shortcut = "w_sc" in p
    assert W % 8 == 0, "W must be a multiple of 8 (sublane-aligned rows)"
    assert H % stride == 0 and W % stride == 0
    assert has_shortcut or (stride == 1 and Cin == Cout)
    Ho = H // stride
    M = Ho * W if stride > 1 else HW         # rows after in-kernel h-stride
    fuse_sc = has_shortcut and stride == 1
    sep_sc = has_shortcut and not fuse_sc
    mdt = MATMUL_DTYPE
    msz = jnp.dtype(mdt).itemsize

    # Weights as channel-matmul matrices (tiny; computed once under jit).
    w1m = p["w1"].reshape(planes, Cin).T.astype(mdt)                 # (Cin, P)
    w2m = jnp.transpose(p["w2"], (2, 3, 1, 0)).reshape(9 * planes, planes)
    w2m = w2m.astype(mdt)                                            # (9P, P)
    w3m = p["w3"].reshape(Cout, planes).T.astype(mdt)                # (P, Cout)
    wscm = (p["w_sc"].reshape(Cout, Cin).T.astype(mdt)
            if has_shortcut else None)                               # (Cin, Cout)
    w1_arg = jnp.concatenate([w1m, wscm], axis=1) if fuse_sc else w1m

    kernel, PADB = _make_kernel(H, W, planes, stride, has_shortcut, fuse_sc)

    def full_spec(shape):
        return pl.BlockSpec(shape, lambda n, _nd=len(shape): (0,) * _nd)

    in_specs = [
        pl.BlockSpec((1, HW, Cin), lambda n: (n, 0, 0)),             # x
        full_spec((1, Cin)), full_spec((1, Cin)),                    # s1, b1
        full_spec(tuple(w1_arg.shape)),                              # w1[|w_sc]
        full_spec((1, planes)), full_spec((1, planes)),              # s2, b2
        full_spec((9 * planes, planes)),                             # w2 (im2col)
        full_spec((1, planes)), full_spec((1, planes)),              # s3, b3
        full_spec((planes, Cout)),                                   # w3
    ]
    args = [
        x.reshape(N, HW, Cin),
        p["s1"].reshape(1, Cin), p["b1"].reshape(1, Cin), w1_arg,
        p["s2"].reshape(1, planes), p["b2"].reshape(1, planes), w2m,
        p["s3"].reshape(1, planes), p["b3"].reshape(1, planes), w3m,
    ]
    if sep_sc:
        in_specs.append(full_spec((Cin, Cout)))
        args.append(wscm)

    # Advisory cost estimate so XLA schedules the custom call sensibly.
    flops = (2 * HW * Cin * planes + 2 * HW * (9 * planes) * planes
             + 2 * M * planes * Cout)
    if has_shortcut:
        flops += 2 * (HW if fuse_sc else M) * Cin * Cout
    flops *= N
    w_bytes = msz * (w1_arg.shape[0] * w1_arg.shape[1]
                     + 9 * planes * planes + planes * Cout
                     + (Cin * Cout if sep_sc else 0))
    bytes_accessed = (4 * N * HW * Cin + 4 * N * M * Cout + w_bytes
                      + 4 * 2 * (Cin + 2 * planes))
    cost = pl.CostEstimate(flops=int(flops), transcendentals=0,
                           bytes_accessed=int(bytes_accessed))

    # VMEM budget: double-buffered x/out blocks + staging/im2col scratch +
    # headroom for live f32 temporaries; clamped to fit every generation.
    vmem_est = (2 * 4 * HW * Cin + 2 * 4 * M * Cout
                + 3 * 4 * (HW + 2 * PADB) * planes
                + msz * HW * 9 * planes
                + 4 * 4 * HW * max(Cin, Cout, 3 * planes))
    vmem_limit = int(min(96 * 2 ** 20, max(32 * 2 ** 20, 2 * vmem_est)))

    y_full = pl.pallas_call(
        kernel,
        out_shape=jax.ShapeDtypeStruct((N, M, Cout), jnp.float32),
        grid=(N,),
        in_specs=in_specs,
        out_specs=pl.BlockSpec((1, M, Cout), lambda n: (n, 0, 0)),
        scratch_shapes=[
            pltpu.VMEM((HW + 2 * PADB, planes), jnp.float32),   # dw=-1 staging
            pltpu.VMEM((HW + 2 * PADB, planes), jnp.float32),   # dw= 0 staging
            pltpu.VMEM((HW + 2 * PADB, planes), jnp.float32),   # dw=+1 staging
            pltpu.VMEM((HW, 9 * planes), mdt),                  # im2col buffer
        ],
        compiler_params=pltpu.CompilerParams(
            dimension_semantics=("parallel",),
            vmem_limit_bytes=vmem_limit),
        cost_estimate=cost,
    )(*args)

    y = y_full.reshape(N, Ho if stride > 1 else H, W, Cout)
    if stride > 1:
        # TODO(synk): w-direction stride subsample left to XLA (tiny slice).
        y = y[:, :, ::stride, :]
    return jnp.transpose(y, (0, 3, 1, 2))                            # -> NCHW


# ----------------------------- pure-JAX reference ---------------------------

def ref_forward(x, p, stride):
    def pre(x, s, b):
        return jnp.maximum(x * s[None, :, None, None] + b[None, :, None, None],
                           0.0)

    def conv(x, w, s, pad):
        return lax.conv_general_dilated(
            x, w, (s, s), pad, dimension_numbers=("NCHW", "OIHW", "NCHW"))

    out = pre(x, p["s1"], p["b1"])
    shortcut = conv(out, p["w_sc"], stride, "VALID") if "w_sc" in p else x
    out = conv(out, p["w1"], 1, "VALID")
    out = conv(pre(out, p["s2"], p["b2"]), p["w2"], stride, [(1, 1), (1, 1)])
    out = conv(pre(out, p["s3"], p["b3"]), p["w3"], 1, "VALID")
    return out + shortcut


# --------------------------------- main --------------------------------------

def make_params(key, in_planes, planes, stride, expansion=4):
    ks = jax.random.split(key, 16)
    out_planes = expansion * planes
    p = {}

    def bn_film(k, c):
        k1, k2, k3, k4, k5, k6 = jax.random.split(k, 6)
        bn_w = 1.0 + 0.1 * jax.random.normal(k1, (c,), jnp.float32)
        bn_b = 0.1 * jax.random.normal(k2, (c,), jnp.float32)
        mean = 0.1 * jax.random.normal(k3, (c,), jnp.float32)
        var = jnp.abs(jax.random.normal(k4, (c,), jnp.float32)) + 0.5
        f_g = 1.0 + 0.1 * jax.random.normal(k5, (c,), jnp.float32)
        f_b = 0.1 * jax.random.normal(k6, (c,), jnp.float32)
        return fuse_bn_film(bn_w, bn_b, mean, var, f_g, f_b)

    p["s1"], p["b1"] = bn_film(ks[0], in_planes)
    p["s2"], p["b2"] = bn_film(ks[1], planes)
    p["s3"], p["b3"] = bn_film(ks[2], planes)
    p["w1"] = 0.2 * jax.random.normal(ks[3], (planes, in_planes, 1, 1), jnp.float32)
    p["w2"] = 0.2 * jax.random.normal(ks[4], (planes, planes, 3, 3), jnp.float32)
    p["w3"] = 0.2 * jax.random.normal(ks[5], (out_planes, planes, 1, 1), jnp.float32)
    if stride != 1 or in_planes != out_planes:
        p["w_sc"] = 0.2 * jax.random.normal(
            ks[6], (out_planes, in_planes, 1, 1), jnp.float32)
    return p


def _run_case(name, key, N, in_planes, planes, H, W, stride):
    k_x, k_p = jax.random.split(key)
    x = jax.random.normal(k_x, (N, in_planes, H, W), jnp.float32)    # NCHW
    params = make_params(k_p, in_planes, planes, stride)
    fwd = jax.jit(functools.partial(bottleneck_forward, stride=stride))
    out = jax.block_until_ready(fwd(x, params))
    ref = ref_forward(x, params, stride)
    assert out.shape == ref.shape, (name, out.shape, ref.shape)
    if MATMUL_DTYPE == jnp.float32:
        atol = rtol = 2e-4
    else:                       # bf16 matmul operands vs f32 reference
        atol = rtol = 5e-2
    err = float(jnp.max(jnp.abs(out - ref)))
    assert jnp.allclose(out, ref, atol=atol, rtol=rtol), (name, err)


if __name__ == "__main__":
    key = jax.random.PRNGKey(0)
    k1, k2, k3 = jax.random.split(key, 3)

    # small shapes consistent with the module (expansion = 4):
    #   1) strided block with 1x1-conv shortcut (separate, h-subsampled path)
    _run_case("stride2_conv_shortcut", k1, N=2, in_planes=16, planes=8,
              H=16, W=16, stride=2)
    #   2) stride-1 block with 1x1-conv shortcut (fused [w1|w_sc] dot path)
    _run_case("stride1_conv_shortcut", k2, N=2, in_planes=16, planes=8,
              H=16, W=16, stride=1)
    #   3) stride-1 block with identity shortcut (in_planes == 4*planes)
    _run_case("stride1_identity", k3, N=2, in_planes=32, planes=8,
              H=16, W=16, stride=1)

    print("KERNEL_OK")
</pallas_src>

<mosaic_0001>
module attributes {stable_mosaic.version = 11 : i64} {
  func.func @kernel(%arg0: i32, %arg1: memref<1x256x16xf32, #tpu.memory_space<vmem>>, %arg2: memref<1x16xf32, #tpu.memory_space<vmem>>, %arg3: memref<1x16xf32, #tpu.memory_space<vmem>>, %arg4: memref<16x8xbf16, #tpu.memory_space<vmem>>, %arg5: memref<1x8xf32, #tpu.memory_space<vmem>>, %arg6: memref<1x8xf32, #tpu.memory_space<vmem>>, %arg7: memref<72x8xbf16, #tpu.memory_space<vmem>>, %arg8: memref<1x8xf32, #tpu.memory_space<vmem>>, %arg9: memref<1x8xf32, #tpu.memory_space<vmem>>, %arg10: memref<8x32xbf16, #tpu.memory_space<vmem>>, %arg11: memref<16x32xbf16, #tpu.memory_space<vmem>>, %arg12: memref<1x128x32xf32, #tpu.memory_space<vmem>>, %arg13: memref<304x8xf32, #tpu.memory_space<vmem>>, %arg14: memref<304x8xf32, #tpu.memory_space<vmem>>, %arg15: memref<304x8xf32, #tpu.memory_space<vmem>>, %arg16: memref<256x72xbf16, #tpu.memory_space<vmem>>) attributes {dimension_semantics = [#tpu.dimension_semantics<parallel>], iteration_bounds = array<i64: 2>, scalar_prefetch = 0 : i64, scratch_operands = 4 : i64, tpu.core_type = #tpu.core_type<tc>, window_params = [{transform_indices = @transform_0, window_bounds = array<i64: 1, 256, 16>}, {pipeline_mode = #tpu.pipeline_mode<synchronous>, transform_indices = @transform_1, window_bounds = array<i64: 1, 16>}, {pipeline_mode = #tpu.pipeline_mode<synchronous>, transform_indices = @transform_2, window_bounds = array<i64: 1, 16>}, {pipeline_mode = #tpu.pipeline_mode<synchronous>, transform_indices = @transform_3, window_bounds = array<i64: 16, 8>}, {pipeline_mode = #tpu.pipeline_mode<synchronous>, transform_indices = @transform_4, window_bounds = array<i64: 1, 8>}, {pipeline_mode = #tpu.pipeline_mode<synchronous>, transform_indices = @transform_5, window_bounds = array<i64: 1, 8>}, {pipeline_mode = #tpu.pipeline_mode<synchronous>, transform_indices = @transform_6, window_bounds = array<i64: 72, 8>}, {pipeline_mode = #tpu.pipeline_mode<synchronous>, transform_indices = @transform_7, window_bounds = array<i64: 1, 8>}, {pipeline_mode = #tpu.pipeline_mode<synchronous>, transform_indices = @transform_8, window_bounds = array<i64: 1, 8>}, {pipeline_mode = #tpu.pipeline_mode<synchronous>, transform_indices = @transform_9, window_bounds = array<i64: 8, 32>}, {pipeline_mode = #tpu.pipeline_mode<synchronous>, transform_indices = @transform_10, window_bounds = array<i64: 16, 32>}, {transform_indices = @transform_11, window_bounds = array<i64: 1, 128, 32>}]} {
    %c0 = arith.constant 0 : index
    %c0_0 = arith.constant 0 : index
    %c0_1 = arith.constant 0 : index
    %0 = vector.load %arg1[%c0, %c0_0, %c0_1] : memref<1x256x16xf32, #tpu.memory_space<vmem>>, vector<1x256x16xf32>
    %1 = vector.shape_cast %0 : vector<1x256x16xf32> to vector<256x16xf32>
    %c0_2 = arith.constant 0 : index
    %c0_3 = arith.constant 0 : index
    %2 = vector.load %arg2[%c0_2, %c0_3] : memref<1x16xf32, #tpu.memory_space<vmem>>, vector<1x16xf32>
    %3 = vector.broadcast %2 : vector<1x16xf32> to vector<256x16xf32>
    %4 = arith.mulf %1, %3 : vector<256x16xf32>
    %c0_4 = arith.constant 0 : index
    %c0_5 = arith.constant 0 : index
    %5 = vector.load %arg3[%c0_4, %c0_5] : memref<1x16xf32, #tpu.memory_space<vmem>>, vector<1x16xf32>
    %6 = vector.broadcast %5 : vector<1x16xf32> to vector<256x16xf32>
    %7 = arith.addf %4, %6 : vector<256x16xf32>
    %cst = arith.constant 0.000000e+00 : f32
    %8 = vector.broadcast %cst : f32 to vector<256x16xf32>
    %9 = arith.maximumf %7, %8 : vector<256x16xf32>
    %10 = arith.truncf %9 : vector<256x16xf32> to vector<256x16xbf16>
    %c0_6 = arith.constant 0 : index
    %c0_7 = arith.constant 0 : index
    %11 = vector.load %arg4[%c0_6, %c0_7] : memref<16x8xbf16, #tpu.memory_space<vmem>>, vector<16x8xbf16>
    %cst_8 = arith.constant dense<0.000000e+00> : vector<256x8xf32>
    %12 = tpu.matmul %10, %11, %cst_8 {dimension_numbers = #tpu.dot_dimension_numbers<[1], [0], [0], [1], [0, 0, 1, 1], [], []>} : vector<256x16xbf16>, vector<16x8xbf16>, vector<256x8xf32> -> vector<256x8xf32>
    %13 = vector.shape_cast %10 : vector<256x16xbf16> to vector<8x32x16xbf16>
    %14 = vector.extract_strided_slice %13 {offsets = [0, 0, 0], sizes = [8, 16, 16], strides = [1, 1, 1]} : vector<8x32x16xbf16> to vector<8x16x16xbf16>
    %15 = vector.shape_cast %14 : vector<8x16x16xbf16> to vector<128x16xbf16>
    %c0_9 = arith.constant 0 : index
    %c0_10 = arith.constant 0 : index
    %16 = vector.load %arg11[%c0_9, %c0_10] : memref<16x32xbf16, #tpu.memory_space<vmem>>, vector<16x32xbf16>
    %cst_11 = arith.constant dense<0.000000e+00> : vector<128x32xf32>
    %17 = tpu.matmul %15, %16, %cst_11 {dimension_numbers = #tpu.dot_dimension_numbers<[1], [0], [0], [1], [0, 0, 1, 1], [], []>} : vector<128x16xbf16>, vector<16x32xbf16>, vector<128x32xf32> -> vector<128x32xf32>
    %c0_12 = arith.constant 0 : index
    %c0_13 = arith.constant 0 : index
    %c0_14 = arith.constant 0 : index
    %18 = vector.load %arg12[%c0_12, %c0_13, %c0_14] : memref<1x128x32xf32, #tpu.memory_space<vmem>>, vector<1x128x32xf32>
    %19 = vector.shape_cast %18 : vector<1x128x32xf32> to vector<128x32xf32>
    %20 = vector.shape_cast %17 : vector<128x32xf32> to vector<1x128x32xf32>
    tpu.vector_store %arg12[%c0_12, %c0_13, %c0_14], %20 {strides = array<i32>} : memref<1x128x32xf32, #tpu.memory_space<vmem>>, vector<1x128x32xf32>,
    %c0_15 = arith.constant 0 : index
    %c0_16 = arith.constant 0 : index
    %21 = vector.load %arg5[%c0_15, %c0_16] : memref<1x8xf32, #tpu.memory_space<vmem>>, vector<1x8xf32>
    %22 = vector.broadcast %21 : vector<1x8xf32> to vector<256x8xf32>
    %23 = arith.mulf %12, %22 : vector<256x8xf32>
    %c0_17 = arith.constant 0 : index
    %c0_18 = arith.constant 0 : index
    %24 = vector.load %arg6[%c0_17, %c0_18] : memref<1x8xf32, #tpu.memory_space<vmem>>, vector<1x8xf32>
    %25 = vector.broadcast %24 : vector<1x8xf32> to vector<256x8xf32>
    %26 = arith.addf %23, %25 : vector<256x8xf32>
    %cst_19 = arith.constant 0.000000e+00 : f32
    %27 = vector.broadcast %cst_19 : f32 to vector<256x8xf32>
    %28 = arith.maximumf %26, %27 : vector<256x8xf32>
    %29 = tpu.iota {dimensions = array<i32: 0>} : vector<256x1xi32>
    %c16_i32 = arith.constant 16 : i32
    %c0_i32 = arith.constant 0 : i32
    %30 = arith.cmpi eq, %c16_i32, %c0_i32 : i32
    %c1_i32 = arith.constant 1 : i32
    %31 = arith.select %30, %c1_i32, %c16_i32 : i32
    %32 = vector.broadcast %31 : i32 to vector<256x1xi32>
    %33 = arith.remsi %29, %32 : vector<256x1xi32>
    %c0_i32_20 = arith.constant 0 : i32
    %34 = vector.broadcast %c0_i32_20 : i32 to vector<256x1xi32>
    %35 = arith.cmpi ne, %33, %34 : vector<256x1xi32>
    %c0_i32_21 = arith.constant 0 : i32
    %36 = vector.broadcast %c0_i32_21 : i32 to vector<256x1xi32>
    %37 = arith.cmpi slt, %33, %36 : vector<256x1xi32>
    %c0_i32_22 = arith.constant 0 : i32
    %38 = arith.cmpi slt, %31, %c0_i32_22 : i32
    %39 = vector.broadcast %38 : i1 to vector<256x1xi1>
    %40 = vector.broadcast %39 : vector<256x1xi1> to vector<256x1xi1>
    %41 = arith.xori %37, %40 : vector<256x1xi1>
    %42 = arith.andi %41, %35 : vector<256x1xi1>
    %43 = vector.broadcast %31 : i32 to vector<256x1xi32>
    %44 = arith.addi %33, %43 : vector<256x1xi32>
    %45 = arith.select %42, %44, %33 : vector<256x1xi1>, vector<256x1xi32>
    %c14_i32 = arith.constant 14 : i32
    %46 = vector.broadcast %c14_i32 : i32 to vector<256x1xi32>
    %47 = arith.cmpi sle, %45, %46 : vector<256x1xi32>
    %cst_23 = arith.constant 0.000000e+00 : f32
    %48 = vector.shape_cast %47 : vector<256x1xi1> to vector<256x1xi1>
    %49 = vector.broadcast %48 : vector<256x1xi1> to vector<256x8xi1>
    %50 = vector.broadcast %cst_23 : f32 to vector<256x8xf32>
    %51 = arith.select %49, %28, %50 : vector<256x8xi1>, vector<256x8xf32>
    %c1_i32_24 = arith.constant 1 : i32
    %52 = vector.broadcast %c1_i32_24 : i32 to vector<256x1xi32>
    %53 = arith.cmpi sge, %45, %52 : vector<256x1xi32>
    %cst_25 = arith.constant 0.000000e+00 : f32
    %54 = vector.shape_cast %53 : vector<256x1xi1> to vector<256x1xi1>
    %55 = vector.broadcast %54 : vector<256x1xi1> to vector<256x8xi1>
    %56 = vector.broadcast %cst_25 : f32 to vector<256x8xf32>
    %57 = arith.select %55, %28, %56 : vector<256x8xi1>, vector<256x8xf32>
    %cst_26 = arith.constant 0.000000e+00 : f32
    %58 = vector.broadcast %cst_26 : f32 to vector<24x8xf32>
    %c0_27 = arith.constant 0 : index
    %c0_28 = arith.constant 0 : index
    %59 = vector.load %arg13[%c0_27, %c0_28] : memref<304x8xf32, #tpu.memory_space<vmem>>, vector<24x8xf32>
    tpu.vector_store %arg13[%c0_27, %c0_28], %58 {strides = array<i32>} : memref<304x8xf32, #tpu.memory_space<vmem>>, vector<24x8xf32>,
    %c280 = arith.constant 280 : index
    %c0_29 = arith.constant 0 : index
    %60 = vector.load %arg13[%c280, %c0_29] : memref<304x8xf32, #tpu.memory_space<vmem>>, vector<24x8xf32>
    tpu.vector_store %arg13[%c280, %c0_29], %58 {strides = array<i32>} : memref<304x8xf32, #tpu.memory_space<vmem>>, vector<24x8xf32>,
    %c24 = arith.constant 24 : index
    %c0_30 = arith.constant 0 : index
    %61 = vector.load %arg13[%c24, %c0_30] : memref<304x8xf32, #tpu.memory_space<vmem>>, vector<256x8xf32>
    tpu.vector_store %arg13[%c24, %c0_30], %51 {strides = array<i32>} : memref<304x8xf32, #tpu.memory_space<vmem>>, vector<256x8xf32>,
    %c0_31 = arith.constant 0 : index
    %c0_32 = arith.constant 0 : index
    %62 = vector.load %arg14[%c0_31, %c0_32] : memref<304x8xf32, #tpu.memory_space<vmem>>, vector<24x8xf32>
    tpu.vector_store %arg14[%c0_31, %c0_32], %58 {strides = array<i32>} : memref<304x8xf32, #tpu.memory_space<vmem>>, vector<24x8xf32>,
    %c280_33 = arith.constant 280 : index
    %c0_34 = arith.constant 0 : index
    %63 = vector.load %arg14[%c280_33, %c0_34] : memref<304x8xf32, #tpu.memory_space<vmem>>, vector<24x8xf32>
    tpu.vector_store %arg14[%c280_33, %c0_34], %58 {strides = array<i32>} : memref<304x8xf32, #tpu.memory_space<vmem>>, vector<24x8xf32>,
    %c24_35 = arith.constant 24 : index
    %c0_36 = arith.constant 0 : index
    %64 = vector.load %arg14[%c24_35, %c0_36] : memref<304x8xf32, #tpu.memory_space<vmem>>, vector<256x8xf32>
    tpu.vector_store %arg14[%c24_35, %c0_36], %28 {strides = array<i32>} : memref<304x8xf32, #tpu.memory_space<vmem>>, vector<256x8xf32>,
    %c0_37 = arith.constant 0 : index
    %c0_38 = arith.constant 0 : index
    %65 = vector.load %arg15[%c0_37, %c0_38] : memref<304x8xf32, #tpu.memory_space<vmem>>, vector<24x8xf32>
    tpu.vector_store %arg15[%c0_37, %c0_38], %58 {strides = array<i32>} : memref<304x8xf32, #tpu.memory_space<vmem>>, vector<24x8xf32>,
    %c280_39 = arith.constant 280 : index
    %c0_40 = arith.constant 0 : index
    %66 = vector.load %arg15[%c280_39, %c0_40] : memref<304x8xf32, #tpu.memory_space<vmem>>, vector<24x8xf32>
    tpu.vector_store %arg15[%c280_39, %c0_40], %58 {strides = array<i32>} : memref<304x8xf32, #tpu.memory_space<vmem>>, vector<24x8xf32>,
    %c24_41 = arith.constant 24 : index
    %c0_42 = arith.constant 0 : index
    %67 = vector.load %arg15[%c24_41, %c0_42] : memref<304x8xf32, #tpu.memory_space<vmem>>, vector<256x8xf32>
    tpu.vector_store %arg15[%c24_41, %c0_42], %57 {strides = array<i32>} : memref<304x8xf32, #tpu.memory_space<vmem>>, vector<256x8xf32>,
    %c7 = arith.constant 7 : index
    %c0_43 = arith.constant 0 : index
    %68 = vector.load %arg13[%c7, %c0_43] : memref<304x8xf32, #tpu.memory_space<vmem>>, vector<256x8xf32>
    %69 = arith.truncf %68 : vector<256x8xf32> to vector<256x8xbf16>
    %c0_44 = arith.constant 0 : index
    %c0_45 = arith.constant 0 : index
    %70 = vector.load %arg16[%c0_44, %c0_45] : memref<256x72xbf16, #tpu.memory_space<vmem>>, vector<256x8xbf16>
    tpu.vector_store %arg16[%c0_44, %c0_45], %69 {strides = array<i32>} : memref<256x72xbf16, #tpu.memory_space<vmem>>, vector<256x8xbf16>,
    %c8 = arith.constant 8 : index
    %c0_46 = arith.constant 0 : index
    %71 = vector.load %arg14[%c8, %c0_46] : memref<304x8xf32, #tpu.memory_space<vmem>>, vector<256x8xf32>
    %72 = arith.truncf %71 : vector<256x8xf32> to vector<256x8xbf16>
    %c0_47 = arith.constant 0 : index
    %c8_48 = arith.constant 8 : index
    %73 = vector.load %arg16[%c0_47, %c8_48] : memref<256x72xbf16, #tpu.memory_space<vmem>>, vector<256x8xbf16>
    tpu.vector_store %arg16[%c0_47, %c8_48], %72 {strides = array<i32>} : memref<256x72xbf16, #tpu.memory_space<vmem>>, vector<256x8xbf16>,
    %c9 = arith.constant 9 : index
    %c0_49 = arith.constant 0 : index
    %74 = vector.load %arg15[%c9, %c0_49] : memref<304x8xf32, #tpu.memory_space<vmem>>, vector<256x8xf32>
    %75 = arith.truncf %74 : vector<256x8xf32> to vector<256x8xbf16>
    %c0_50 = arith.constant 0 : index
    %c16 = arith.constant 16 : index
    %76 = vector.load %arg16[%c0_50, %c16] : memref<256x72xbf16, #tpu.memory_space<vmem>>, vector<256x8xbf16>
    tpu.vector_store %arg16[%c0_50, %c16], %75 {strides = array<i32>} : memref<256x72xbf16, #tpu.memory_space<vmem>>, vector<256x8xbf16>,
    %c23 = arith.constant 23 : index
    %c0_51 = arith.constant 0 : index
    %77 = vector.load %arg13[%c23, %c0_51] : memref<304x8xf32, #tpu.memory_space<vmem>>, vector<256x8xf32>
    %78 = arith.truncf %77 : vector<256x8xf32> to vector<256x8xbf16>
    %c0_52 = arith.constant 0 : index
    %c24_53 = arith.constant 24 : index
    %79 = vector.load %arg16[%c0_52, %c24_53] : memref<256x72xbf16, #tpu.memory_space<vmem>>, vector<256x8xbf16>
    tpu.vector_store %arg16[%c0_52, %c24_53], %78 {strides = array<i32>} : memref<256x72xbf16, #tpu.memory_space<vmem>>, vector<256x8xbf16>,
    %c24_54 = arith.constant 24 : index
    %c0_55 = arith.constant 0 : index
    %80 = vector.load %arg14[%c24_54, %c0_55] : memref<304x8xf32, #tpu.memory_space<vmem>>, vector<256x8xf32>
    %81 = arith.truncf %80 : vector<256x8xf32> to vector<256x8xbf16>
    %c0_56 = arith.constant 0 : index
    %c32 = arith.constant 32 : index
    %82 = vector.load %arg16[%c0_56, %c32] : memref<256x72xbf16, #tpu.memory_space<vmem>>, vector<256x8xbf16>
    tpu.vector_store %arg16[%c0_56, %c32], %81 {strides = array<i32>} : memref<256x72xbf16, #tpu.memory_space<vmem>>, vector<256x8xbf16>,
    %c25 = arith.constant 25 : index
    %c0_57 = arith.constant 0 : index
    %83 = vector.load %arg15[%c25, %c0_57] : memref<304x8xf32, #tpu.memory_space<vmem>>, vector<256x8xf32>
    %84 = arith.truncf %83 : vector<256x8xf32> to vector<256x8xbf16>
    %c0_58 = arith.constant 0 : index
    %c40 = arith.constant 40 : index
    %85 = vector.load %arg16[%c0_58, %c40] : memref<256x72xbf16, #tpu.memory_space<vmem>>, vector<256x8xbf16>
    tpu.vector_store %arg16[%c0_58, %c40], %84 {strides = array<i32>} : memref<256x72xbf16, #tpu.memory_space<vmem>>, vector<256x8xbf16>,
    %c39 = arith.constant 39 : index
    %c0_59 = arith.constant 0 : index
    %86 = vector.load %arg13[%c39, %c0_59] : memref<304x8xf32, #tpu.memory_space<vmem>>, vector<256x8xf32>
    %87 = arith.truncf %86 : vector<256x8xf32> to vector<256x8xbf16>
    %c0_60 = arith.constant 0 : index
    %c48 = arith.constant 48 : index
    %88 = vector.load %arg16[%c0_60, %c48] : memref<256x72xbf16, #tpu.memory_space<vmem>>, vector<256x8xbf16>
    tpu.vector_store %arg16[%c0_60, %c48], %87 {strides = array<i32>} : memref<256x72xbf16, #tpu.memory_space<vmem>>, vector<256x8xbf16>,
    %c40_61 = arith.constant 40 : index
    %c0_62 = arith.constant 0 : index
    %89 = vector.load %arg14[%c40_61, %c0_62] : memref<304x8xf32, #tpu.memory_space<vmem>>, vector<256x8xf32>
    %90 = arith.truncf %89 : vector<256x8xf32> to vector<256x8xbf16>
    %c0_63 = arith.constant 0 : index
    %c56 = arith.constant 56 : index
    %91 = vector.load %arg16[%c0_63, %c56] : memref<256x72xbf16, #tpu.memory_space<vmem>>, vector<256x8xbf16>
    tpu.vector_store %arg16[%c0_63, %c56], %90 {strides = array<i32>} : memref<256x72xbf16, #tpu.memory_space<vmem>>, vector<256x8xbf16>,
    %c41 = arith.constant 41 : index
    %c0_64 = arith.constant 0 : index
    %92 = vector.load %arg15[%c41, %c0_64] : memref<304x8xf32, #tpu.memory_space<vmem>>, vector<256x8xf32>
    %93 = arith.truncf %92 : vector<256x8xf32> to vector<256x8xbf16>
    %c0_65 = arith.constant 0 : index
    %c64 = arith.constant 64 : index
    %94 = vector.load %arg16[%c0_65, %c64] : memref<256x72xbf16, #tpu.memory_space<vmem>>, vector<256x8xbf16>
    tpu.vector_store %arg16[%c0_65, %c64], %93 {strides = array<i32>} : memref<256x72xbf16, #tpu.memory_space<vmem>>, vector<256x8xbf16>,
    %c0_66 = arith.constant 0 : index
    %c0_67 = arith.constant 0 : index
    %95 = vector.load %arg16[%c0_66, %c0_67] : memref<256x72xbf16, #tpu.memory_space<vmem>>, vector<256x72xbf16>
    %c0_68 = arith.constant 0 : index
    %c0_69 = arith.constant 0 : index
    %96 = vector.load %arg7[%c0_68, %c0_69] : memref<72x8xbf16, #tpu.memory_space<vmem>>, vector<72x8xbf16>
    %cst_70 = arith.constant dense<0.000000e+00> : vector<256x8xf32>
    %97 = tpu.matmul %95, %96, %cst_70 {dimension_numbers = #tpu.dot_dimension_numbers<[1], [0], [0], [1], [0, 0, 1, 1], [], []>} : vector<256x72xbf16>, vector<72x8xbf16>, vector<256x8xf32> -> vector<256x8xf32>
    %98 = vector.shape_cast %97 : vector<256x8xf32> to vector<8x32x8xf32>
    %99 = vector.extract_strided_slice %98 {offsets = [0, 0, 0], sizes = [8, 16, 8], strides = [1, 1, 1]} : vector<8x32x8xf32> to vector<8x16x8xf32>
    %100 = vector.shape_cast %99 : vector<8x16x8xf32> to vector<128x8xf32>
    %c0_71 = arith.constant 0 : index
    %c0_72 = arith.constant 0 : index
    %101 = vector.load %arg8[%c0_71, %c0_72] : memref<1x8xf32, #tpu.memory_space<vmem>>, vector<1x8xf32>
    %102 = vector.broadcast %101 : vector<1x8xf32> to vector<128x8xf32>
    %103 = arith.mulf %100, %102 : vector<128x8xf32>
    %c0_73 = arith.constant 0 : index
    %c0_74 = arith.constant 0 : index
    %104 = vector.load %arg9[%c0_73, %c0_74] : memref<1x8xf32, #tpu.memory_space<vmem>>, vector<1x8xf32>
    %105 = vector.broadcast %104 : vector<1x8xf32> to vector<128x8xf32>
    %106 = arith.addf %103, %105 : vector<128x8xf32>
    %cst_75 = arith.constant 0.000000e+00 : f32
    %107 = vector.broadcast %cst_75 : f32 to vector<128x8xf32>
    %108 = arith.maximumf %106, %107 : vector<128x8xf32>
    %109 = arith.truncf %108 : vector<128x8xf32> to vector<128x8xbf16>
    %c0_76 = arith.constant 0 : index
    %c0_77 = arith.constant 0 : index
    %110 = vector.load %arg10[%c0_76, %c0_77] : memref<8x32xbf16, #tpu.memory_space<vmem>>, vector<8x32xbf16>
    %cst_78 = arith.constant dense<0.000000e+00> : vector<128x32xf32>
    %111 = tpu.matmul %109, %110, %cst_78 {dimension_numbers = #tpu.dot_dimension_numbers<[1], [0], [0], [1], [0, 0, 1, 1], [], []>} : vector<128x8xbf16>, vector<8x32xbf16>, vector<128x32xf32> -> vector<128x32xf32>
    %c0_79 = arith.constant 0 : index
    %c0_80 = arith.constant 0 : index
    %c0_81 = arith.constant 0 : index
    %112 = vector.load %arg12[%c0_79, %c0_80, %c0_81] : memref<1x128x32xf32, #tpu.memory_space<vmem>>, vector<1x128x32xf32>
    %113 = vector.shape_cast %112 : vector<1x128x32xf32> to vector<128x32xf32>
    %114 = arith.addf %113, %111 : vector<128x32xf32>
    %c0_82 = arith.constant 0 : index
    %c0_83 = arith.constant 0 : index
    %c0_84 = arith.constant 0 : index
    %115 = vector.load %arg12[%c0_82, %c0_83, %c0_84] : memref<1x128x32xf32, #tpu.memory_space<vmem>>, vector<1x128x32xf32>
    %116 = vector.shape_cast %115 : vector<1x128x32xf32> to vector<128x32xf32>
    %117 = vector.shape_cast %114 : vector<128x32xf32> to vector<1x128x32xf32>
    tpu.vector_store %arg12[%c0_82, %c0_83, %c0_84], %117 {strides = array<i32>} : memref<1x128x32xf32, #tpu.memory_space<vmem>>, vector<1x128x32xf32>,
    return
  }
  func.func @transform_0(%arg0: i32) -> (i32, i32, i32) {
    %c0_i32 = arith.constant 0 : i32
    %c0_i32_0 = arith.constant 0 : i32
    %c0_i32_1 = arith.constant 0 : i32
    return %arg0, %c0_i32, %c0_i32_0 : i32, i32, i32
  }
  func.func @transform_1(%arg0: i32) -> (i32, i32) {
    %c0_i32 = arith.constant 0 : i32
    %c0_i32_0 = arith.constant 0 : i32
    %c0_i32_1 = arith.constant 0 : i32
    return %c0_i32, %c0_i32_0 : i32, i32
  }
  func.func @transform_2(%arg0: i32) -> (i32, i32) {
    %c0_i32 = arith.constant 0 : i32
    %c0_i32_0 = arith.constant 0 : i32
    %c0_i32_1 = arith.constant 0 : i32
    return %c0_i32, %c0_i32_0 : i32, i32
  }
  func.func @transform_3(%arg0: i32) -> (i32, i32) {
    %c0_i32 = arith.constant 0 : i32
    %c0_i32_0 = arith.constant 0 : i32
    %c0_i32_1 = arith.constant 0 : i32
    return %c0_i32, %c0_i32_0 : i32, i32
  }
  func.func @transform_4(%arg0: i32) -> (i32, i32) {
    %c0_i32 = arith.constant 0 : i32
    %c0_i32_0 = arith.constant 0 : i32
    %c0_i32_1 = arith.constant 0 : i32
    return %c0_i32, %c0_i32_0 : i32, i32
  }
  func.func @transform_5(%arg0: i32) -> (i32, i32) {
    %c0_i32 = arith.constant 0 : i32
    %c0_i32_0 = arith.constant 0 : i32
    %c0_i32_1 = arith.constant 0 : i32
    return %c0_i32, %c0_i32_0 : i32, i32
  }
  func.func @transform_6(%arg0: i32) -> (i32, i32) {
    %c0_i32 = arith.constant 0 : i32
    %c0_i32_0 = arith.constant 0 : i32
    %c0_i32_1 = arith.constant 0 : i32
    return %c0_i32, %c0_i32_0 : i32, i32
  }
  func.func @transform_7(%arg0: i32) -> (i32, i32) {
    %c0_i32 = arith.constant 0 : i32
    %c0_i32_0 = arith.constant 0 : i32
    %c0_i32_1 = arith.constant 0 : i32
    return %c0_i32, %c0_i32_0 : i32, i32
  }
  func.func @transform_8(%arg0: i32) -> (i32, i32) {
    %c0_i32 = arith.constant 0 : i32
    %c0_i32_0 = arith.constant 0 : i32
    %c0_i32_1 = arith.constant 0 : i32
    return %c0_i32, %c0_i32_0 : i32, i32
  }
  func.func @transform_9(%arg0: i32) -> (i32, i32) {
    %c0_i32 = arith.constant 0 : i32
    %c0_i32_0 = arith.constant 0 : i32
    %c0_i32_1 = arith.constant 0 : i32
    return %c0_i32, %c0_i32_0 : i32, i32
  }
  func.func @transform_10(%arg0: i32) -> (i32, i32) {
    %c0_i32 = arith.constant 0 : i32
    %c0_i32_0 = arith.constant 0 : i32
    %c0_i32_1 = arith.constant 0 : i32
    return %c0_i32, %c0_i32_0 : i32, i32
  }
  func.func @transform_11(%arg0: i32) -> (i32, i32, i32) {
    %c0_i32 = arith.constant 0 : i32
    %c0_i32_0 = arith.constant 0 : i32
    %c0_i32_1 = arith.constant 0 : i32
    return %arg0, %c0_i32, %c0_i32_0 : i32, i32, i32
  }
}

</mosaic_0001>

<llo_original>
// kernel: bottleneck_forward.1
$region0: #{bottleneck_forward.1}
  #allocation0 [shape = 'u32[]', space=smem, size = 0x4, offset = 0x4, fixed_abs, tag = 'smem constant byte address 0x4 - core index']
  #allocation1 [shape = 'u32[72,128]{1,0:T(1,128)}', space=vmem, size = 0x9000, scoped, tag = 'internal scratch']
  #allocation2 [shape = 'f32[304,8]{1,0:T(8,128)}', space=vmem, size = 0x26000, scoped, tag = 'scratch operand']
  #allocation3 [shape = 'f32[304,8]{1,0:T(8,128)}', space=vmem, size = 0x26000, scoped, tag = 'scratch operand']
  #allocation4 [shape = 'f32[304,8]{1,0:T(8,128)}', space=vmem, size = 0x26000, scoped, tag = 'scratch operand']
  #allocation5 [shape = 'bf16[256,72]{1,0:T(8,128)(2,1)}', space=vmem, size = 0x10000, scoped, tag = 'scratch operand']
  %s0 = inlined_call_operand.vmem [shape: f32[2,256,16], index: 0, kind: input, shape index: {}]
  %s1 = inlined_call_operand.vmem [shape: f32[1,16], index: 1, kind: input, shape index: {}]
  %s2 = inlined_call_operand.vmem [shape: f32[1,16], index: 2, kind: input, shape index: {}]
  %s3 = inlined_call_operand.vmem [shape: bf16[16,8], index: 3, kind: input, shape index: {}]
  %s4 = inlined_call_operand.vmem [shape: f32[1,8], index: 4, kind: input, shape index: {}]
  %s5 = inlined_call_operand.vmem [shape: f32[1,8], index: 5, kind: input, shape index: {}]
  %s6 = inlined_call_operand.vmem [shape: bf16[72,8], index: 6, kind: input, shape index: {}]
  %s7 = inlined_call_operand.vmem [shape: f32[1,8], index: 7, kind: input, shape index: {}]
  %s8 = inlined_call_operand.vmem [shape: f32[1,8], index: 8, kind: input, shape index: {}]
  %s9 = inlined_call_operand.vmem [shape: bf16[8,32], index: 9, kind: input, shape index: {}]
  %s10 = inlined_call_operand.vmem [shape: bf16[16,32], index: 10, kind: input, shape index: {}]
  %s11 = inlined_call_operand.vmem [shape: f32[2,128,32], index: 11, kind: output, shape index: {}]
  %s12 = sld [smem:[#allocation0]]
  $region77: #{bottleneck_forward.1} parent=0
    _
  %s14 = ssub.s32 1, %s12
  %s15 = scalar_select 0, %s14, %s12
  loop: start=0, step=1, limit=4
  $region2: #{bottleneck_forward.1} parent=0 // loop_pre_header
    _
  $region3: #{bottleneck_forward.1} parent=0 // loop_header
    %s17 = sphi 0, %s21
    %p18 = scmp.ge.s32.totalorder %s17, 4
    %s27 = sphi 0, %s29
    %s30 = sphi 0, %s27
    %s31 = sphi 0, %s30
    %s47 = sphi 0, %s31
    %s51 = sphi 0, %s51
    %s53 = sphi 0, %s51
    %s54 = sphi 0, %s53
    %s68 = sphi 0, %s54
    %s72 = sphi 0, %s72
    %s74 = sphi 0, %s72
    %s75 = sphi 0, %s74
    %s89 = sphi 0, %s75
    %s93 = sphi 0, %s93
    %s95 = sphi 0, %s93
    %s96 = sphi 0, %s95
    %s110 = sphi 0, %s96
    %s114 = sphi 0, %s114
    %s116 = sphi 0, %s114
    %s117 = sphi 0, %s116
    %s131 = sphi 0, %s117
    %s135 = sphi 0, %s135
    %s137 = sphi 0, %s135
    %s138 = sphi 0, %s137
    %s152 = sphi 0, %s138
    %s156 = sphi 0, %s156
    %s158 = sphi 0, %s156
    %s159 = sphi 0, %s158
    %s173 = sphi 0, %s159
    %s177 = sphi 0, %s177
    %s179 = sphi 0, %s177
    %s180 = sphi 0, %s179
    %s194 = sphi 0, %s180
    %s198 = sphi 0, %s198
    %s200 = sphi 0, %s198
    %s201 = sphi 0, %s200
    %s215 = sphi 0, %s201
    %s219 = sphi 0, %s219
    %s221 = sphi 0, %s219
    %s222 = sphi 0, %s221
    %s236 = sphi 0, %s222
    %s240 = sphi 0, %s240
    %s242 = sphi 0, %s240
    %s243 = sphi 0, %s242
    %s257 = sphi 0, %s243
    %s263 = sphi 0, %s265
    %s266 = sphi 0, %s263
    %s267 = sphi 0, %s266
    %s283 = sphi 0, %s267
  $region4: #{bottleneck_forward.1} parent=0 // loop_header_branch
    %20 = sbr.rel (%p18) target = $region8
  $region5: #{bottleneck_forward.1} parent=0 // loop_body
    %s22 = ssub.s32 %s17, 1
    %s23 = ssub.s32 %s17, 2
    %s24 = sadd.s32 %s17, 1
    %s25 = ssub.s32 %s17, %s24
    %p26 = scmp.eq.s32.totalorder %s25, 0
    %s28 = sadd.s32 %s27, 1
    %s29 = scalar_select %p26, %s27, %s28
    %p32 = pneg %p26
    %p33 = scmp.eq.s32.totalorder %s17, 1
    %p34 = por %p32, %p33
    %p35 = scmp.ne.s32.totalorder %s27, %s30
    %p36 = scmp.eq.s32.totalorder %s17, 0
    %p37 = por %p35, %p36
    %p38 = scmp.ne.s32.totalorder %s27, %s30
    %p39 = scmp.eq.s32.totalorder %s22, 1
    %p40 = por %p38, %p39
    %p41 = scmp.ne.s32.totalorder %s30, %s31
    %p42 = scmp.eq.s32.totalorder %s22, 0
    %p43 = por %p41, %p42
    %p44 = scmp.ne.s32.totalorder %s30, %s31
    %p45 = scmp.eq.s32.totalorder %s23, 1
    %p46 = por %p44, %p45
    %p48 = scmp.ne.s32.totalorder %s31, %s47
    %p49 = scmp.eq.s32.totalorder %s23, 0
    %p50 = por %p48, %p49
    %s52 = sadd.s32 %s51, 1
    %p55 = scmp.eq.s32.totalorder %s17, 1
    %p56 = scmp.ne.s32.totalorder %s51, %s53
    %p57 = scmp.eq.s32.totalorder %s17, 0
    %p58 = por %p56, %p57
    %p59 = scmp.ne.s32.totalorder %s51, %s53
    %p60 = scmp.eq.s32.totalorder %s22, 1
    %p61 = por %p59, %p60
    %p62 = scmp.ne.s32.totalorder %s53, %s54
    %p63 = scmp.eq.s32.totalorder %s22, 0
    %p64 = por %p62, %p63
    %p65 = scmp.ne.s32.totalorder %s53, %s54
    %p66 = scmp.eq.s32.totalorder %s23, 1
    %p67 = por %p65, %p66
    %p69 = scmp.ne.s32.totalorder %s54, %s68
    %p70 = scmp.eq.s32.totalorder %s23, 0
    %p71 = por %p69, %p70
    %s73 = sadd.s32 %s72, 1
    %p76 = scmp.eq.s32.totalorder %s17, 1
    %p77 = scmp.ne.s32.totalorder %s72, %s74
    %p78 = scmp.eq.s32.totalorder %s17, 0
    %p79 = por %p77, %p78
    %p80 = scmp.ne.s32.totalorder %s72, %s74
    %p81 = scmp.eq.s32.totalorder %s22, 1
    %p82 = por %p80, %p81
    %p83 = scmp.ne.s32.totalorder %s74, %s75
    %p84 = scmp.eq.s32.totalorder %s22, 0
    %p85 = por %p83, %p84
    %p86 = scmp.ne.s32.totalorder %s74, %s75
    %p87 = scmp.eq.s32.totalorder %s23, 1
    %p88 = por %p86, %p87
    %p90 = scmp.ne.s32.totalorder %s75, %s89
    %p91 = scmp.eq.s32.totalorder %s23, 0
    %p92 = por %p90, %p91
    %s94 = sadd.s32 %s93, 1
    %p97 = scmp.eq.s32.totalorder %s17, 1
    %p98 = scmp.ne.s32.totalorder %s93, %s95
    %p99 = scmp.eq.s32.totalorder %s17, 0
    %p100 = por %p98, %p99
    %p101 = scmp.ne.s32.totalorder %s93, %s95
    %p102 = scmp.eq.s32.totalorder %s22, 1
    %p103 = por %p101, %p102
    %p104 = scmp.ne.s32.totalorder %s95, %s96
    %p105 = scmp.eq.s32.totalorder %s22, 0
    %p106 = por %p104, %p105
    %p107 = scmp.ne.s32.totalorder %s95, %s96
    %p108 = scmp.eq.s32.totalorder %s23, 1
    %p109 = por %p107, %p108
    %p111 = scmp.ne.s32.totalorder %s96, %s110
    %p112 = scmp.eq.s32.totalorder %s23, 0
    %p113 = por %p111, %p112
    %s115 = sadd.s32 %s114, 1
    %p118 = scmp.eq.s32.totalorder %s17, 1
    %p119 = scmp.ne.s32.totalorder %s114, %s116
    %p120 = scmp.eq.s32.totalorder %s17, 0
    %p121 = por %p119, %p120
    %p122 = scmp.ne.s32.totalorder %s114, %s116
    %p123 = scmp.eq.s32.totalorder %s22, 1
    %p124 = por %p122, %p123
    %p125 = scmp.ne.s32.totalorder %s116, %s117
    %p126 = scmp.eq.s32.totalorder %s22, 0
    %p127 = por %p125, %p126
    %p128 = scmp.ne.s32.totalorder %s116, %s117
    %p129 = scmp.eq.s32.totalorder %s23, 1
    %p130 = por %p128, %p129
    %p132 = scmp.ne.s32.totalorder %s117, %s131
    %p133 = scmp.eq.s32.totalorder %s23, 0
    %p134 = por %p132, %p133
    %s136 = sadd.s32 %s135, 1
    %p139 = scmp.eq.s32.totalorder %s17, 1
    %p140 = scmp.ne.s32.totalorder %s135, %s137
    %p141 = scmp.eq.s32.totalorder %s17, 0
    %p142 = por %p140, %p141
    %p143 = scmp.ne.s32.totalorder %s135, %s137
    %p144 = scmp.eq.s32.totalorder %s22, 1
    %p145 = por %p143, %p144
    %p146 = scmp.ne.s32.totalorder %s137, %s138
    %p147 = scmp.eq.s32.totalorder %s22, 0
    %p148 = por %p146, %p147
    %p149 = scmp.ne.s32.totalorder %s137, %s138
    %p150 = scmp.eq.s32.totalorder %s23, 1
    %p151 = por %p149, %p150
    %p153 = scmp.ne.s32.totalorder %s138, %s152
    %p154 = scmp.eq.s32.totalorder %s23, 0
    %p155 = por %p153, %p154
    %s157 = sadd.s32 %s156, 1
    %p160 = scmp.eq.s32.totalorder %s17, 1
    %p161 = scmp.ne.s32.totalorder %s156, %s158
    %p162 = scmp.eq.s32.totalorder %s17, 0
    %p163 = por %p161, %p162
    %p164 = scmp.ne.s32.totalorder %s156, %s158
    %p165 = scmp.eq.s32.totalorder %s22, 1
    %p166 = por %p164, %p165
    %p167 = scmp.ne.s32.totalorder %s158, %s159
    %p168 = scmp.eq.s32.totalorder %s22, 0
    %p169 = por %p167, %p168
    %p170 = scmp.ne.s32.totalorder %s158, %s159
    %p171 = scmp.eq.s32.totalorder %s23, 1
    %p172 = por %p170, %p171
    %p174 = scmp.ne.s32.totalorder %s159, %s173
    %p175 = scmp.eq.s32.totalorder %s23, 0
    %p176 = por %p174, %p175
    %s178 = sadd.s32 %s177, 1
    %p181 = scmp.eq.s32.totalorder %s17, 1
    %p182 = scmp.ne.s32.totalorder %s177, %s179
    %p183 = scmp.eq.s32.totalorder %s17, 0
    %p184 = por %p182, %p183
    %p185 = scmp.ne.s32.totalorder %s177, %s179
    %p186 = scmp.eq.s32.totalorder %s22, 1
    %p187 = por %p185, %p186
    %p188 = scmp.ne.s32.totalorder %s179, %s180
    %p189 = scmp.eq.s32.totalorder %s22, 0
    %p190 = por %p188, %p189
    %p191 = scmp.ne.s32.totalorder %s179, %s180
    %p192 = scmp.eq.s32.totalorder %s23, 1
    %p193 = por %p191, %p192
    %p195 = scmp.ne.s32.totalorder %s180, %s194
    %p196 = scmp.eq.s32.totalorder %s23, 0
    %p197 = por %p195, %p196
    %s199 = sadd.s32 %s198, 1
    %p202 = scmp.eq.s32.totalorder %s17, 1
    %p203 = scmp.ne.s32.totalorder %s198, %s200
    %p204 = scmp.eq.s32.totalorder %s17, 0
    %p205 = por %p203, %p204
    %p206 = scmp.ne.s32.totalorder %s198, %s200
    %p207 = scmp.eq.s32.totalorder %s22, 1
    %p208 = por %p206, %p207
    %p209 = scmp.ne.s32.totalorder %s200, %s201
    %p210 = scmp.eq.s32.totalorder %s22, 0
    %p211 = por %p209, %p210
    %p212 = scmp.ne.s32.totalorder %s200, %s201
    %p213 = scmp.eq.s32.totalorder %s23, 1
    %p214 = por %p212, %p213
    %p216 = scmp.ne.s32.totalorder %s201, %s215
    %p217 = scmp.eq.s32.totalorder %s23, 0
    %p218 = por %p216, %p217
    %s220 = sadd.s32 %s219, 1
    %p223 = scmp.eq.s32.totalorder %s17, 1
    %p224 = scmp.ne.s32.totalorder %s219, %s221
    %p225 = scmp.eq.s32.totalorder %s17, 0
    %p226 = por %p224, %p225
    %p227 = scmp.ne.s32.totalorder %s219, %s221
    %p228 = scmp.eq.s32.totalorder %s22, 1
    %p229 = por %p227, %p228
    %p230 = scmp.ne.s32.totalorder %s221, %s222
    %p231 = scmp.eq.s32.totalorder %s22, 0
    %p232 = por %p230, %p231
    %p233 = scmp.ne.s32.totalorder %s221, %s222
    %p234 = scmp.eq.s32.totalorder %s23, 1
    %p235 = por %p233, %p234
    %p237 = scmp.ne.s32.totalorder %s222, %s236
    %p238 = scmp.eq.s32.totalorder %s23, 0
    %p239 = por %p237, %p238
    %s241 = sadd.s32 %s240, 1
    %p244 = scmp.eq.s32.totalorder %s17, 1
    %p245 = scmp.ne.s32.totalorder %s240, %s242
    %p246 = scmp.eq.s32.totalorder %s17, 0
    %p247 = por %p245, %p246
    %p248 = scmp.ne.s32.totalorder %s240, %s242
    %p249 = scmp.eq.s32.totalorder %s22, 1
    %p250 = por %p248, %p249
    %p251 = scmp.ne.s32.totalorder %s242, %s243
    %p252 = scmp.eq.s32.totalorder %s22, 0
    %p253 = por %p251, %p252
    %p254 = scmp.ne.s32.totalorder %s242, %s243
    %p255 = scmp.eq.s32.totalorder %s23, 1
    %p256 = por %p254, %p255
    %p258 = scmp.ne.s32.totalorder %s243, %s257
    %p259 = scmp.eq.s32.totalorder %s23, 0
    %p260 = por %p258, %p259
    %s261 = ssub.s32 %s17, %s24
    %p262 = scmp.eq.s32.totalorder %s261, 0
    %s264 = sadd.s32 %s263, 1
    %s265 = scalar_select %p262, %s263, %s264
    %p268 = pneg %p262
    %p269 = scmp.eq.s32.totalorder %s17, 1
    %p270 = por %p268, %p269
    %p271 = scmp.ne.s32.totalorder %s263, %s266
    %p272 = scmp.eq.s32.totalorder %s17, 0
    %p273 = por %p271, %p272
    %p274 = scmp.ne.s32.totalorder %s263, %s266
    %p275 = scmp.eq.s32.totalorder %s22, 1
    %p276 = por %p274, %p275
    %p277 = scmp.ne.s32.totalorder %s266, %s267
    %p278 = scmp.eq.s32.totalorder %s22, 0
    %p279 = por %p277, %p278
    %p280 = scmp.ne.s32.totalorder %s266, %s267
    %p281 = scmp.eq.s32.totalorder %s23, 1
    %p282 = por %p280, %p281
    %p284 = scmp.ne.s32.totalorder %s267, %s283
    %p285 = scmp.eq.s32.totalorder %s23, 0
    %p286 = por %p284, %p285
    %p287 = scmp.le.s32.totalorder 1, %s17
    %p288 = scmp.lt.s32.totalorder %s17, 3
    %p289 = pnand %p287, %p288
    %p290 = pneg %p289
    // Predicated region
    $region9: #{bottleneck_forward.1} parent=5 // pred_check
      _
    $region10: #{bottleneck_forward.1} parent=5 // pred_check_branch
      %292 = sbr.rel (%p289) target = $region12
    $region11: #{bottleneck_forward.1} parent=5 // pred_region
      %s293 = ssub.s32 %s17, 1
      // Predicated region
      $region13: #{bottleneck_forward.1} parent=11 // pred_check
        %p294 = pneg %p64
      $region14: #{bottleneck_forward.1} parent=11 // pred_check_branch
        %296 = sbr.rel (%p294) target = $region16
      $region15: #{bottleneck_forward.1} parent=11 // pred_region
        _
      $region16: #{bottleneck_forward.1} parent=11 // pred_fallthru
        _
      // Predicated region
      $region17: #{bottleneck_forward.1} parent=11 // pred_check
        %p297 = pneg %p85
      $region18: #{bottleneck_forward.1} parent=11 // pred_check_branch
        %299 = sbr.rel (%p297) target = $region20
      $region19: #{bottleneck_forward.1} parent=11 // pred_region
        _
      $region20: #{bottleneck_forward.1} parent=11 // pred_fallthru
        _
      // Predicated region
      $region21: #{bottleneck_forward.1} parent=11 // pred_check
        %p300 = pneg %p106
      $region22: #{bottleneck_forward.1} parent=11 // pred_check_branch
        %302 = sbr.rel (%p300) target = $region24
      $region23: #{bottleneck_forward.1} parent=11 // pred_region
        _
      $region24: #{bottleneck_forward.1} parent=11 // pred_fallthru
        _
      // Predicated region
      $region25: #{bottleneck_forward.1} parent=11 // pred_check
        %p303 = pneg %p127
      $region26: #{bottleneck_forward.1} parent=11 // pred_check_branch
        %305 = sbr.rel (%p303) target = $region28
      $region27: #{bottleneck_forward.1} parent=11 // pred_region
        _
      $region28: #{bottleneck_forward.1} parent=11 // pred_fallthru
        _
      // Predicated region
      $region29: #{bottleneck_forward.1} parent=11 // pred_check
        %p306 = pneg %p148
      $region30: #{bottleneck_forward.1} parent=11 // pred_check_branch
        %308 = sbr.rel (%p306) target = $region32
      $region31: #{bottleneck_forward.1} parent=11 // pred_region
        _
      $region32: #{bottleneck_forward.1} parent=11 // pred_fallthru
        _
      // Predicated region
      $region33: #{bottleneck_forward.1} parent=11 // pred_check
        %p309 = pneg %p169
      $region34: #{bottleneck_forward.1} parent=11 // pred_check_branch
        %311 = sbr.rel (%p309) target = $region36
      $region35: #{bottleneck_forward.1} parent=11 // pred_region
        _
      $region36: #{bottleneck_forward.1} parent=11 // pred_fallthru
        _
      // Predicated region
      $region37: #{bottleneck_forward.1} parent=11 // pred_check
        %p312 = pneg %p190
      $region38: #{bottleneck_forward.1} parent=11 // pred_check_branch
        %314 = sbr.rel (%p312) target = $region40
      $region39: #{bottleneck_forward.1} parent=11 // pred_region
        _
      $region40: #{bottleneck_forward.1} parent=11 // pred_fallthru
        _
      // Predicated region
      $region41: #{bottleneck_forward.1} parent=11 // pred_check
        %p315 = pneg %p211
      $region42: #{bottleneck_forward.1} parent=11 // pred_check_branch
        %317 = sbr.rel (%p315) target = $region44
      $region43: #{bottleneck_forward.1} parent=11 // pred_region
        _
      $region44: #{bottleneck_forward.1} parent=11 // pred_fallthru
        _
      // Predicated region
      $region45: #{bottleneck_forward.1} parent=11 // pred_check
        %p318 = pneg %p232
      $region46: #{bottleneck_forward.1} parent=11 // pred_check_branch
        %320 = sbr.rel (%p318) target = $region48
      $region47: #{bottleneck_forward.1} parent=11 // pred_region
        _
      $region48: #{bottleneck_forward.1} parent=11 // pred_fallthru
        _
      // Predicated region
      $region49: #{bottleneck_forward.1} parent=11 // pred_check
        %p321 = pneg %p253
      $region50: #{bottleneck_forward.1} parent=11 // pred_check_branch
        %323 = sbr.rel (%p321) target = $region52
      $region51: #{bottleneck_forward.1} parent=11 // pred_region
        _
      $region52: #{bottleneck_forward.1} parent=11 // pred_fallthru
        _
    $region12: #{bottleneck_forward.1} parent=5 // pred_fallthru
      _
    %p324 = scmp.lt.s32.totalorder %s17, 2
    // Predicated region
    $region53: #{bottleneck_forward.1} parent=5 // pred_check
      %p325 = pneg %p324
    $region54: #{bottleneck_forward.1} parent=5 // pred_check_branch
      %327 = sbr.rel (%p325) target = $region56
    $region55: #{bottleneck_forward.1} parent=5 // pred_region
      // Predicated region
      $region57: #{bottleneck_forward.1} parent=55 // pred_check
        %p328 = pneg %p37
      $region58: #{bottleneck_forward.1} parent=55 // pred_check_branch
        %330 = sbr.rel (%p328) target = $region60
      $region59: #{bottleneck_forward.1} parent=55 // pred_region
        %p331 = scmp.lt.s32.totalorder %s17, 1
        %s332 = scalar_select %p331, %s17, 1
        %s333 = smul.addr %s332, 32
        %s334 = smul.addr %s333, 8
        %s335 = scalar_lea.vmem %s0, %s334
      $region60: #{bottleneck_forward.1} parent=55 // pred_fallthru
        _
    $region56: #{bottleneck_forward.1} parent=5 // pred_fallthru
      _
    %p336 = scmp.le.s32.totalorder 1, %s17
    %p337 = scmp.lt.s32.totalorder %s17, 3
    %p338 = pnand %p336, %p337
    %p339 = pneg %p338
    // Predicated region
    $region61: #{bottleneck_forward.1} parent=5 // pred_check
      _
    $region62: #{bottleneck_forward.1} parent=5 // pred_check_branch
      %341 = sbr.rel (%p338) target = $region64
    $region63: #{bottleneck_forward.1} parent=5 // pred_region
      %s342 = ssub.s32 %s17, 1
      %p343 = scmp.lt.s32.totalorder %s22, 1
      %s344 = scalar_select %p343, %s22, 1
      %s345 = smul.addr %s344, 32
      %s346 = smul.addr %s345, 8
      %s347 = scalar_lea.vmem %s0, %s346
      %p348 = pneg %p43
      %p349 = pneg %p40
      %p350 = pneg %p64
      %p351 = pneg %p61
      %p352 = pneg %p85
      %p353 = pneg %p82
      %p354 = pneg %p106
      %p355 = pneg %p103
      %p356 = pneg %p127
      %p357 = pneg %p124
      %p358 = pneg %p148
      %p359 = pneg %p145
      %p360 = pneg %p169
      %p361 = pneg %p166
      %p362 = pneg %p190
      %p363 = pneg %p187
      %p364 = pneg %p211
      %p365 = pneg %p208
      %p366 = pneg %p232
      %p367 = pneg %p229
      %p368 = pneg %p253
      %p369 = pneg %p250
      %p370 = pneg %p279
      %p371 = pneg %p276
      %p372 = scmp.lt.s32.totalorder %s22, 1
      %s373 = scalar_select %p372, %s22, 1
      %s374 = smul.addr %s373, 16
      %s375 = smul.addr %s374, 8
      %s376 = scalar_lea.vmem %s11, %s375
      %p377 = scmp.lt.s32.totalorder %s22, 1
      %s378 = scalar_select %p377, %s22, 1
      %s379 = smul.addr %s378, 32
      %s380 = smul.addr %s379, 8
      %s381 = scalar_lea.vmem %s0, %s380
      %p382 = scmp.lt.s32.totalorder %s22, 1
      %s383 = scalar_select %p382, %s22, 1
      %s384 = smul.addr %s383, 16
      %s385 = smul.addr %s384, 8
      %s386 = scalar_lea.vmem %s11, %s385
      %v388 = vld [vmem:[%s381] sm:$0xff]
      %v389 = vld [vmem:[%s381 + $0x8] sm:$0xff]
      %v390 = vld [vmem:[%s381 + $0x10] sm:$0xff]
      %v391 = vld [vmem:[%s381 + $0x18] sm:$0xff]
      %v392 = vld [vmem:[%s381 + $0x20] sm:$0xff]
      %v393 = vld [vmem:[%s381 + $0x28] sm:$0xff]
      %v394 = vld [vmem:[%s381 + $0x30] sm:$0xff]
      %v395 = vld [vmem:[%s381 + $0x38] sm:$0xff]
      %v396 = vld [vmem:[%s381 + $0x40] sm:$0xff]
      %v397 = vld [vmem:[%s381 + $0x48] sm:$0xff]
      %v398 = vld [vmem:[%s381 + $0x50] sm:$0xff]
      %v399 = vld [vmem:[%s381 + $0x58] sm:$0xff]
      %v400 = vld [vmem:[%s381 + $0x60] sm:$0xff]
      %v401 = vld [vmem:[%s381 + $0x68] sm:$0xff]
      %v402 = vld [vmem:[%s381 + $0x70] sm:$0xff]
      %v403 = vld [vmem:[%s381 + $0x78] sm:$0xff]
      %v404 = vld [vmem:[%s381 + $0x80] sm:$0xff]
      %v405 = vld [vmem:[%s381 + $0x88] sm:$0xff]
      %v406 = vld [vmem:[%s381 + $0x90] sm:$0xff]
      %v407 = vld [vmem:[%s381 + $0x98] sm:$0xff]
      %v408 = vld [vmem:[%s381 + $0xa0] sm:$0xff]
      %v409 = vld [vmem:[%s381 + $0xa8] sm:$0xff]
      %v410 = vld [vmem:[%s381 + $0xb0] sm:$0xff]
      %v411 = vld [vmem:[%s381 + $0xb8] sm:$0xff]
      %v412 = vld [vmem:[%s381 + $0xc0] sm:$0xff]
      %v413 = vld [vmem:[%s381 + $0xc8] sm:$0xff]
      %v414 = vld [vmem:[%s381 + $0xd0] sm:$0xff]
      %v415 = vld [vmem:[%s381 + $0xd8] sm:$0xff]
      %v416 = vld [vmem:[%s381 + $0xe0] sm:$0xff]
      %v417 = vld [vmem:[%s381 + $0xe8] sm:$0xff]
      %v418 = vld [vmem:[%s381 + $0xf0] sm:$0xff]
      %v419 = vld [vmem:[%s381 + $0xf8] sm:$0xff]
      %v420 = vld [vmem:[%s1] sm:$0x1]
      %v422 = vperm.slane %v420, 0
      %v424 = vmul.f32 %v388, %v422
      %v425 = vmul.f32 %v389, %v422
      %v426 = vmul.f32 %v390, %v422
      %v427 = vmul.f32 %v391, %v422
      %v428 = vmul.f32 %v392, %v422
      %v429 = vmul.f32 %v393, %v422
      %v430 = vmul.f32 %v394, %v422
      %v431 = vmul.f32 %v395, %v422
      %v432 = vmul.f32 %v396, %v422
      %v433 = vmul.f32 %v397, %v422
      %v434 = vmul.f32 %v398, %v422
      %v435 = vmul.f32 %v399, %v422
      %v436 = vmul.f32 %v400, %v422
      %v437 = vmul.f32 %v401, %v422
      %v438 = vmul.f32 %v402, %v422
      %v439 = vmul.f32 %v403, %v422
      %v440 = vmul.f32 %v404, %v422
      %v441 = vmul.f32 %v405, %v422
      %v442 = vmul.f32 %v406, %v422
      %v443 = vmul.f32 %v407, %v422
      %v444 = vmul.f32 %v408, %v422
      %v445 = vmul.f32 %v409, %v422
      %v446 = vmul.f32 %v410, %v422
      %v447 = vmul.f32 %v411, %v422
      %v448 = vmul.f32 %v412, %v422
      %v449 = vmul.f32 %v413, %v422
      %v450 = vmul.f32 %v414, %v422
      %v451 = vmul.f32 %v415, %v422
      %v452 = vmul.f32 %v416, %v422
      %v453 = vmul.f32 %v417, %v422
      %v454 = vmul.f32 %v418, %v422
      %v455 = vmul.f32 %v419, %v422
      %v456 = vld [vmem:[%s2] sm:$0x1]
      %v458 = vperm.slane %v456, 0
      %v460 = vadd.f32 %v424, %v458
      %v461 = vadd.f32 %v425, %v458
      %v462 = vadd.f32 %v426, %v458
      %v463 = vadd.f32 %v427, %v458
      %v464 = vadd.f32 %v428, %v458
      %v465 = vadd.f32 %v429, %v458
      %v466 = vadd.f32 %v430, %v458
      %v467 = vadd.f32 %v431, %v458
      %v468 = vadd.f32 %v432, %v458
      %v469 = vadd.f32 %v433, %v458
      %v470 = vadd.f32 %v434, %v458
      %v471 = vadd.f32 %v435, %v458
      %v472 = vadd.f32 %v436, %v458
      %v473 = vadd.f32 %v437, %v458
      %v474 = vadd.f32 %v438, %v458
      %v475 = vadd.f32 %v439, %v458
      %v476 = vadd.f32 %v440, %v458
      %v477 = vadd.f32 %v441, %v458
      %v478 = vadd.f32 %v442, %v458
      %v479 = vadd.f32 %v443, %v458
      %v480 = vadd.f32 %v444, %v458
      %v481 = vadd.f32 %v445, %v458
      %v482 = vadd.f32 %v446, %v458
      %v483 = vadd.f32 %v447, %v458
      %v484 = vadd.f32 %v448, %v458
      %v485 = vadd.f32 %v449, %v458
      %v486 = vadd.f32 %v450, %v458
      %v487 = vadd.f32 %v451, %v458
      %v488 = vadd.f32 %v452, %v458
      %v489 = vadd.f32 %v453, %v458
      %v490 = vadd.f32 %v454, %v458
      %v491 = vadd.f32 %v455, %v458
      %v492 = vmax.f32 %v460, 0.0
      %v493 = vmax.f32 %v461, 0.0
      %v494 = vmax.f32 %v462, 0.0
      %v495 = vmax.f32 %v463, 0.0
      %v496 = vmax.f32 %v464, 0.0
      %v497 = vmax.f32 %v465, 0.0
      %v498 = vmax.f32 %v466, 0.0
      %v499 = vmax.f32 %v467, 0.0
      %v500 = vmax.f32 %v468, 0.0
      %v501 = vmax.f32 %v469, 0.0
      %v502 = vmax.f32 %v470, 0.0
      %v503 = vmax.f32 %v471, 0.0
      %v504 = vmax.f32 %v472, 0.0
      %v505 = vmax.f32 %v473, 0.0
      %v506 = vmax.f32 %v474, 0.0
      %v507 = vmax.f32 %v475, 0.0
      %v508 = vmax.f32 %v476, 0.0
      %v509 = vmax.f32 %v477, 0.0
      %v510 = vmax.f32 %v478, 0.0
      %v511 = vmax.f32 %v479, 0.0
      %v512 = vmax.f32 %v480, 0.0
      %v513 = vmax.f32 %v481, 0.0
      %v514 = vmax.f32 %v482, 0.0
      %v515 = vmax.f32 %v483, 0.0
      %v516 = vmax.f32 %v484, 0.0
      %v517 = vmax.f32 %v485, 0.0
      %v518 = vmax.f32 %v486, 0.0
      %v519 = vmax.f32 %v487, 0.0
      %v520 = vmax.f32 %v488, 0.0
      %v521 = vmax.f32 %v489, 0.0
      %v522 = vmax.f32 %v490, 0.0
      %v523 = vmax.f32 %v491, 0.0
      %v524 = vpack.c.bf16 %v492, %v492
      %v525 = vpack.c.bf16 %v493, %v493
      %v526 = vpack.c.bf16 %v494, %v494
      %v527 = vpack.c.bf16 %v495, %v495
      %v528 = vpack.c.bf16 %v496, %v496
      %v529 = vpack.c.bf16 %v497, %v497
      %v530 = vpack.c.bf16 %v498, %v498
      %v531 = vpack.c.bf16 %v499, %v499
      %v532 = vpack.c.bf16 %v500, %v500
      %v533 = vpack.c.bf16 %v501, %v501
      %v534 = vpack.c.bf16 %v502, %v502
      %v535 = vpack.c.bf16 %v503, %v503
      %v536 = vpack.c.bf16 %v504, %v504
      %v537 = vpack.c.bf16 %v505, %v505
      %v538 = vpack.c.bf16 %v506, %v506
      %v539 = vpack.c.bf16 %v507, %v507
      %v540 = vpack.c.bf16 %v508, %v508
      %v541 = vpack.c.bf16 %v509, %v509
      %v542 = vpack.c.bf16 %v510, %v510
      %v543 = vpack.c.bf16 %v511, %v511
      %v544 = vpack.c.bf16 %v512, %v512
      %v545 = vpack.c.bf16 %v513, %v513
      %v546 = vpack.c.bf16 %v514, %v514
      %v547 = vpack.c.bf16 %v515, %v515
      %v548 = vpack.c.bf16 %v516, %v516
      %v549 = vpack.c.bf16 %v517, %v517
      %v550 = vpack.c.bf16 %v518, %v518
      %v551 = vpack.c.bf16 %v519, %v519
      %v552 = vpack.c.bf16 %v520, %v520
      %v553 = vpack.c.bf16 %v521, %v521
      %v554 = vpack.c.bf16 %v522, %v522
      %v555 = vpack.c.bf16 %v523, %v523
      %v556 = vld [vmem:[%s3] sm:$0xf]
      %v557 = vld [vmem:[%s3 + $0x4] sm:$0xf]
      %v590 = vunpack.c.l.b16 %v524
      %v591 = vunpack.c.l.b16 %v525
      %v592 = vunpack.c.l.b16 %v526
      %v593 = vunpack.c.l.b16 %v527
      %v594 = vunpack.c.l.b16 %v528
      %v595 = vunpack.c.l.b16 %v529
      %v596 = vunpack.c.l.b16 %v530
      %v597 = vunpack.c.l.b16 %v531
      %v598 = vunpack.c.l.b16 %v532
      %v599 = vunpack.c.l.b16 %v533
      %v600 = vunpack.c.l.b16 %v534
      %v601 = vunpack.c.l.b16 %v535
      %v602 = vunpack.c.l.b16 %v536
      %v603 = vunpack.c.l.b16 %v537
      %v604 = vunpack.c.l.b16 %v538
      %v605 = vunpack.c.l.b16 %v539
      %v606 = vunpack.c.l.b16 %v540
      %v607 = vunpack.c.l.b16 %v541
      %v608 = vunpack.c.l.b16 %v542
      %v609 = vunpack.c.l.b16 %v543
      %v610 = vunpack.c.l.b16 %v544
      %v611 = vunpack.c.l.b16 %v545
      %v612 = vunpack.c.l.b16 %v546
      %v613 = vunpack.c.l.b16 %v547
      %v614 = vunpack.c.l.b16 %v548
      %v615 = vunpack.c.l.b16 %v549
      %v616 = vunpack.c.l.b16 %v550
      %v617 = vunpack.c.l.b16 %v551
      %v618 = vunpack.c.l.b16 %v552
      %v619 = vunpack.c.l.b16 %v553
      %v620 = vunpack.c.l.b16 %v554
      %v621 = vunpack.c.l.b16 %v555
      %v622 = vpack.c.b16 %v591, %v590
      %v623 = vpack.c.b16 %v593, %v592
      %v624 = vpack.c.b16 %v595, %v594
      %v625 = vpack.c.b16 %v597, %v596
      %v626 = vpack.c.b16 %v599, %v598
      %v627 = vpack.c.b16 %v601, %v600
      %v628 = vpack.c.b16 %v603, %v602
      %v629 = vpack.c.b16 %v605, %v604
      %v630 = vpack.c.b16 %v607, %v606
      %v631 = vpack.c.b16 %v609, %v608
      %v632 = vpack.c.b16 %v611, %v610
      %v633 = vpack.c.b16 %v613, %v612
      %v634 = vpack.c.b16 %v615, %v614
      %v635 = vpack.c.b16 %v617, %v616
      %v636 = vpack.c.b16 %v619, %v618
      %v637 = vpack.c.b16 %v621, %v620
      %v640 = vunpack.c.l.b16 %v556
      %v641 = vunpack.c.l.b16 %v557
      %v642 = vpack.c.b16 %v641, %v640
      %vm644 = vcmask 130048
      %v646 = vsel %vm644, %v622, 0
      %v649 = vsel %vm644, %v623, 0
      %v652 = vsel %vm644, %v624, 0
      %v655 = vsel %vm644, %v625, 0
      %v658 = vsel %vm644, %v626, 0
      %v661 = vsel %vm644, %v627, 0
      %v664 = vsel %vm644, %v628, 0
      %v667 = vsel %vm644, %v629, 0
      %v670 = vsel %vm644, %v630, 0
      %v673 = vsel %vm644, %v631, 0
      %v676 = vsel %vm644, %v632, 0
      %v679 = vsel %vm644, %v633, 0
      %v682 = vsel %vm644, %v634, 0
      %v685 = vsel %vm644, %v635, 0
      %v688 = vsel %vm644, %v636, 0
      %v691 = vsel %vm644, %v637, 0
      %693 = vmatpush.bf16.msra.mxu0 0
      %694 = vmatpush.bf16.msra.mxu0 0
      %695 = vmatpush.bf16.msra.mxu0 0
      %696 = vmatpush.bf16.msra.mxu0 0
      %697 = vmatpush.bf16.msra.mxu0 0
      %698 = vmatpush.bf16.msra.mxu0 0
      %699 = vmatpush.bf16.msra.mxu0 0
      %700 = vmatpush.bf16.msra.mxu0 %v642
      %701 = vmatmul.bf16.gmra.mxu0 %v646
      %v702 = vpop.f32.mrf.mxu0
      %v703 = vadd.f32 0.0, %v702
      %v704 = vpop.f32.mrf.mxu0
      %v705 = vadd.f32 0.0, %v704
      %706 = vmatmul.bf16.gmra.mxu0 %v649
      %v707 = vpop.f32.mrf.mxu0
      %v708 = vadd.f32 0.0, %v707
      %v709 = vpop.f32.mrf.mxu0
      %v710 = vadd.f32 0.0, %v709
      %711 = vmatmul.bf16.gmra.mxu0 %v652
      %v712 = vpop.f32.mrf.mxu0
      %v713 = vadd.f32 0.0, %v712
      %v714 = vpop.f32.mrf.mxu0
      %v715 = vadd.f32 0.0, %v714
      %716 = vmatmul.bf16.gmra.mxu0 %v655
      %v717 = vpop.f32.mrf.mxu0
      %v718 = vadd.f32 0.0, %v717
      %v719 = vpop.f32.mrf.mxu0
      %v720 = vadd.f32 0.0, %v719
      %721 = vmatmul.bf16.gmra.mxu0 %v658
      %v722 = vpop.f32.mrf.mxu0
      %v723 = vadd.f32 0.0, %v722
      %v724 = vpop.f32.mrf.mxu0
      %v725 = vadd.f32 0.0, %v724
      %726 = vmatmul.bf16.gmra.mxu0 %v661
      %v727 = vpop.f32.mrf.mxu0
      %v728 = vadd.f32 0.0, %v727
      %v729 = vpop.f32.mrf.mxu0
      %v730 = vadd.f32 0.0, %v729
      %731 = vmatmul.bf16.gmra.mxu0 %v664
      %v732 = vpop.f32.mrf.mxu0
      %v733 = vadd.f32 0.0, %v732
      %v734 = vpop.f32.mrf.mxu0
      %v735 = vadd.f32 0.0, %v734
      %736 = vmatmul.bf16.gmra.mxu0 %v667
      %v737 = vpop.f32.mrf.mxu0
      %v738 = vadd.f32 0.0, %v737
      %v739 = vpop.f32.mrf.mxu0
      %v740 = vadd.f32 0.0, %v739
      %741 = vmatmul.bf16.gmra.mxu0 %v670
      %v742 = vpop.f32.mrf.mxu0
      %v743 = vadd.f32 0.0, %v742
      %v744 = vpop.f32.mrf.mxu0
      %v745 = vadd.f32 0.0, %v744
      %746 = vmatmul.bf16.gmra.mxu0 %v673
      %v747 = vpop.f32.mrf.mxu0
      %v748 = vadd.f32 0.0, %v747
      %v749 = vpop.f32.mrf.mxu0
      %v750 = vadd.f32 0.0, %v749
      %751 = vmatmul.bf16.gmra.mxu0 %v676
      %v752 = vpop.f32.mrf.mxu0
      %v753 = vadd.f32 0.0, %v752
      %v754 = vpop.f32.mrf.mxu0
      %v755 = vadd.f32 0.0, %v754
      %756 = vmatmul.bf16.gmra.mxu0 %v679
      %v757 = vpop.f32.mrf.mxu0
      %v758 = vadd.f32 0.0, %v757
      %v759 = vpop.f32.mrf.mxu0
      %v760 = vadd.f32 0.0, %v759
      %761 = vmatmul.bf16.gmra.mxu0 %v682
      %v762 = vpop.f32.mrf.mxu0
      %v763 = vadd.f32 0.0, %v762
      %v764 = vpop.f32.mrf.mxu0
      %v765 = vadd.f32 0.0, %v764
      %766 = vmatmul.bf16.gmra.mxu0 %v685
      %v767 = vpop.f32.mrf.mxu0
      %v768 = vadd.f32 0.0, %v767
      %v769 = vpop.f32.mrf.mxu0
      %v770 = vadd.f32 0.0, %v769
      %771 = vmatmul.bf16.gmra.mxu0 %v688
      %v772 = vpop.f32.mrf.mxu0
      %v773 = vadd.f32 0.0, %v772
      %v774 = vpop.f32.mrf.mxu0
      %v775 = vadd.f32 0.0, %v774
      %776 = vmatmul.bf16.gmra.mxu0 %v691
      %v777 = vpop.f32.mrf.mxu0
      %v778 = vadd.f32 0.0, %v777
      %v779 = vpop.f32.mrf.mxu0
      %v780 = vadd.f32 0.0, %v779
      %781 = vdwg.mxu0
      %v782 = vld [vmem:[%s10] sm:$0xf]
      %v783 = vld [vmem:[%s10 + $0x4] sm:$0xf]
      %v786 = vunpack.c.l.b16 %v782
      %v787 = vunpack.c.l.b16 %v783
      %v788 = vpack.c.b16 %v787, %v786
      %790 = vmatpush.bf16.msra.mxu0 0
      %791 = vmatpush.bf16.msra.mxu0 0
      %792 = vmatpush.bf16.msra.mxu0 0
      %793 = vmatpush.bf16.msra.mxu0 0
      %794 = vmatpush.bf16.msra.mxu0 0
      %795 = vmatpush.bf16.msra.mxu0 0
      %796 = vmatpush.bf16.msra.mxu0 0
      %797 = vmatpush.bf16.msra.mxu0 %v788
      %798 = vmatmul.bf16.gmra.mxu0 %v646
      %v799 = vpop.f32.mrf.mxu0
      %v800 = vadd.f32 0.0, %v799
      %v801 = vpop.f32.mrf.mxu0
      %v802 = vadd.f32 0.0, %v801
      %803 = vmatmul.bf16.gmra.mxu0 %v652
      %v804 = vpop.f32.mrf.mxu0
      %v805 = vadd.f32 0.0, %v804
      %v806 = vpop.f32.mrf.mxu0
      %v807 = vadd.f32 0.0, %v806
      %808 = vmatmul.bf16.gmra.mxu0 %v658
      %v809 = vpop.f32.mrf.mxu0
      %v810 = vadd.f32 0.0, %v809
      %v811 = vpop.f32.mrf.mxu0
      %v812 = vadd.f32 0.0, %v811
      %813 = vmatmul.bf16.gmra.mxu0 %v664
      %v814 = vpop.f32.mrf.mxu0
      %v815 = vadd.f32 0.0, %v814
      %v816 = vpop.f32.mrf.mxu0
      %v817 = vadd.f32 0.0, %v816
      %818 = vmatmul.bf16.gmra.mxu0 %v670
      %v819 = vpop.f32.mrf.mxu0
      %v820 = vadd.f32 0.0, %v819
      %v821 = vpop.f32.mrf.mxu0
      %v822 = vadd.f32 0.0, %v821
      %823 = vmatmul.bf16.gmra.mxu0 %v676
      %v824 = vpop.f32.mrf.mxu0
      %v825 = vadd.f32 0.0, %v824
      %v826 = vpop.f32.mrf.mxu0
      %v827 = vadd.f32 0.0, %v826
      %828 = vmatmul.bf16.gmra.mxu0 %v682
      %v829 = vpop.f32.mrf.mxu0
      %v830 = vadd.f32 0.0, %v829
      %v831 = vpop.f32.mrf.mxu0
      %v832 = vadd.f32 0.0, %v831
      %833 = vmatmul.bf16.gmra.mxu0 %v688
      %v834 = vpop.f32.mrf.mxu0
      %v835 = vadd.f32 0.0, %v834
      %v836 = vpop.f32.mrf.mxu0
      %v837 = vadd.f32 0.0, %v836
      %838 = vdwg.mxu0
      %vm839 = vcmask 261120
      %840 = vst.msk [vmem:[%s386] sm:$0xff] %vm839, %v800
      %841 = vst.msk [vmem:[%s386 + $0x8] sm:$0xff] %vm839, %v802
      %842 = vst.msk [vmem:[%s386 + $0x10] sm:$0xff] %vm839, %v805
      %843 = vst.msk [vmem:[%s386 + $0x18] sm:$0xff] %vm839, %v807
      %844 = vst.msk [vmem:[%s386 + $0x20] sm:$0xff] %vm839, %v810
      %845 = vst.msk [vmem:[%s386 + $0x28] sm:$0xff] %vm839, %v812
      %846 = vst.msk [vmem:[%s386 + $0x30] sm:$0xff] %vm839, %v815
      %847 = vst.msk [vmem:[%s386 + $0x38] sm:$0xff] %vm839, %v817
      %848 = vst.msk [vmem:[%s386 + $0x40] sm:$0xff] %vm839, %v820
      %849 = vst.msk [vmem:[%s386 + $0x48] sm:$0xff] %vm839, %v822
      %850 = vst.msk [vmem:[%s386 + $0x50] sm:$0xff] %vm839, %v825
      %851 = vst.msk [vmem:[%s386 + $0x58] sm:$0xff] %vm839, %v827
      %852 = vst.msk [vmem:[%s386 + $0x60] sm:$0xff] %vm839, %v830
      %853 = vst.msk [vmem:[%s386 + $0x68] sm:$0xff] %vm839, %v832
      %854 = vst.msk [vmem:[%s386 + $0x70] sm:$0xff] %vm839, %v835
      %855 = vst.msk [vmem:[%s386 + $0x78] sm:$0xff] %vm839, %v837
      %v856 = vld [vmem:[%s4] sm:$0x1]
      %v858 = vperm.slane %v856, 0
      %v860 = vmul.f32 %v703, %v858
      %v861 = vmul.f32 %v705, %v858
      %v862 = vmul.f32 %v708, %v858
      %v863 = vmul.f32 %v710, %v858
      %v864 = vmul.f32 %v713, %v858
      %v865 = vmul.f32 %v715, %v858
      %v866 = vmul.f32 %v718, %v858
      %v867 = vmul.f32 %v720, %v858
      %v868 = vmul.f32 %v723, %v858
      %v869 = vmul.f32 %v725, %v858
      %v870 = vmul.f32 %v728, %v858
      %v871 = vmul.f32 %v730, %v858
      %v872 = vmul.f32 %v733, %v858
      %v873 = vmul.f32 %v735, %v858
      %v874 = vmul.f32 %v738, %v858
      %v875 = vmul.f32 %v740, %v858
      %v876 = vmul.f32 %v743, %v858
      %v877 = vmul.f32 %v745, %v858
      %v878 = vmul.f32 %v748, %v858
      %v879 = vmul.f32 %v750, %v858
      %v880 = vmul.f32 %v753, %v858
      %v881 = vmul.f32 %v755, %v858
      %v882 = vmul.f32 %v758, %v858
      %v883 = vmul.f32 %v760, %v858
      %v884 = vmul.f32 %v763, %v858
      %v885 = vmul.f32 %v765, %v858
      %v886 = vmul.f32 %v768, %v858
      %v887 = vmul.f32 %v770, %v858
      %v888 = vmul.f32 %v773, %v858
      %v889 = vmul.f32 %v775, %v858
      %v890 = vmul.f32 %v778, %v858
      %v891 = vmul.f32 %v780, %v858
      %v892 = vld [vmem:[%s5] sm:$0x1]
      %v894 = vperm.slane %v892, 0
      %v896 = vadd.f32 %v860, %v894
      %v897 = vadd.f32 %v861, %v894
      %v898 = vadd.f32 %v862, %v894
      %v899 = vadd.f32 %v863, %v894
      %v900 = vadd.f32 %v864, %v894
      %v901 = vadd.f32 %v865, %v894
      %v902 = vadd.f32 %v866, %v894
      %v903 = vadd.f32 %v867, %v894
      %v904 = vadd.f32 %v868, %v894
      %v905 = vadd.f32 %v869, %v894
      %v906 = vadd.f32 %v870, %v894
      %v907 = vadd.f32 %v871, %v894
      %v908 = vadd.f32 %v872, %v894
      %v909 = vadd.f32 %v873, %v894
      %v910 = vadd.f32 %v874, %v894
      %v911 = vadd.f32 %v875, %v894
      %v912 = vadd.f32 %v876, %v894
      %v913 = vadd.f32 %v877, %v894
      %v914 = vadd.f32 %v878, %v894
      %v915 = vadd.f32 %v879, %v894
      %v916 = vadd.f32 %v880, %v894
      %v917 = vadd.f32 %v881, %v894
      %v918 = vadd.f32 %v882, %v894
      %v919 = vadd.f32 %v883, %v894
      %v920 = vadd.f32 %v884, %v894
      %v921 = vadd.f32 %v885, %v894
      %v922 = vadd.f32 %v886, %v894
      %v923 = vadd.f32 %v887, %v894
      %v924 = vadd.f32 %v888, %v894
      %v925 = vadd.f32 %v889, %v894
      %v926 = vadd.f32 %v890, %v894
      %v927 = vadd.f32 %v891, %v894
      %v928 = vmax.f32 %v896, 0.0
      %v929 = vmax.f32 %v897, 0.0
      %v930 = vmax.f32 %v898, 0.0
      %v931 = vmax.f32 %v899, 0.0
      %v932 = vmax.f32 %v900, 0.0
      %v933 = vmax.f32 %v901, 0.0
      %v934 = vmax.f32 %v902, 0.0
      %v935 = vmax.f32 %v903, 0.0
      %v936 = vmax.f32 %v904, 0.0
      %v937 = vmax.f32 %v905, 0.0
      %v938 = vmax.f32 %v906, 0.0
      %v939 = vmax.f32 %v907, 0.0
      %v940 = vmax.f32 %v908, 0.0
      %v941 = vmax.f32 %v909, 0.0
      %v942 = vmax.f32 %v910, 0.0
      %v943 = vmax.f32 %v911, 0.0
      %v944 = vmax.f32 %v912, 0.0
      %v945 = vmax.f32 %v913, 0.0
      %v946 = vmax.f32 %v914, 0.0
      %v947 = vmax.f32 %v915, 0.0
      %v948 = vmax.f32 %v916, 0.0
      %v949 = vmax.f32 %v917, 0.0
      %v950 = vmax.f32 %v918, 0.0
      %v951 = vmax.f32 %v919, 0.0
      %v952 = vmax.f32 %v920, 0.0
      %v953 = vmax.f32 %v921, 0.0
      %v954 = vmax.f32 %v922, 0.0
      %v955 = vmax.f32 %v923, 0.0
      %v956 = vmax.f32 %v924, 0.0
      %v957 = vmax.f32 %v925, 0.0
      %v958 = vmax.f32 %v926, 0.0
      %v959 = vmax.f32 %v927, 0.0
      %v960 = vlaneseq
      %v961 = vshrl.u32 %v960, 7
      %v962 = vadd.s32 %v961, 8
      %v963 = vadd.s32 %v961, 16
      %v964 = vadd.s32 %v961, 24
      %v965 = vadd.s32 %v961, 32
      %v966 = vadd.s32 %v961, 40
      %v967 = vadd.s32 %v961, 48
      %v968 = vadd.s32 %v961, 56
      %v969 = vadd.s32 %v961, 64
      %v970 = vadd.s32 %v961, 72
      %v971 = vadd.s32 %v961, 80
      %v972 = vadd.s32 %v961, 88
      %v973 = vadd.s32 %v961, 96
      %v974 = vadd.s32 %v961, 104
      %v975 = vadd.s32 %v961, 112
      %v976 = vadd.s32 %v961, 120
      %v977 = vadd.s32 %v961, 128
      %v978 = vadd.s32 %v961, 136
      %v979 = vadd.s32 %v961, 144
      %v980 = vadd.s32 %v961, 152
      %v981 = vadd.s32 %v961, 160
      %v982 = vadd.s32 %v961, 168
      %v983 = vadd.s32 %v961, 176
      %v984 = vadd.s32 %v961, 184
      %v985 = vadd.s32 %v961, 192
      %v986 = vadd.s32 %v961, 200
      %v987 = vadd.s32 %v961, 208
      %v988 = vadd.s32 %v961, 216
      %v989 = vadd.s32 %v961, 224
      %v990 = vadd.s32 %v961, 232
      %v991 = vadd.s32 %v961, 240
      %v992 = vadd.s32 %v961, 248
      %vm993 = vcmp.lt.s32.totalorder %v961, 0
      %v994 = vsub.s32 0, %v961
      %v995 = vsel %vm993, %v994, %v961
      %v996 = vshrl.u32 %v995, 4
      %v997 = vand.u32 %v995, 15
      %v998 = vsub.s32 0, %v997
      %v999 = vsel %vm993, %v998, %v997
      %vm1000 = vcmp.lt.s32.totalorder %v962, 0
      %v1001 = vsub.s32 0, %v962
      %v1002 = vsel %vm1000, %v1001, %v962
      %v1003 = vshrl.u32 %v1002, 4
      %v1004 = vand.u32 %v1002, 15
      %v1005 = vsub.s32 0, %v1004
      %v1006 = vsel %vm1000, %v1005, %v1004
      %vm1007 = vcmp.lt.s32.totalorder %v963, 0
      %v1008 = vsub.s32 0, %v963
      %v1009 = vsel %vm1007, %v1008, %v963
      %v1010 = vshrl.u32 %v1009, 4
      %v1011 = vand.u32 %v1009, 15
      %v1012 = vsub.s32 0, %v1011
      %v1013 = vsel %vm1007, %v1012, %v1011
      %vm1014 = vcmp.lt.s32.totalorder %v964, 0
      %v1015 = vsub.s32 0, %v964
      %v1016 = vsel %vm1014, %v1015, %v964
      %v1017 = vshrl.u32 %v1016, 4
      %v1018 = vand.u32 %v1016, 15
      %v1019 = vsub.s32 0, %v1018
      %v1020 = vsel %vm1014, %v1019, %v1018
      %vm1021 = vcmp.lt.s32.totalorder %v965, 0
      %v1022 = vsub.s32 0, %v965
      %v1023 = vsel %vm1021, %v1022, %v965
      %v1024 = vshrl.u32 %v1023, 4
      %v1025 = vand.u32 %v1023, 15
      %v1026 = vsub.s32 0, %v1025
      %v1027 = vsel %vm1021, %v1026, %v1025
      %vm1028 = vcmp.lt.s32.totalorder %v966, 0
      %v1029 = vsub.s32 0, %v966
      %v1030 = vsel %vm1028, %v1029, %v966
      %v1031 = vshrl.u32 %v1030, 4
      %v1032 = vand.u32 %v1030, 15
      %v1033 = vsub.s32 0, %v1032
      %v1034 = vsel %vm1028, %v1033, %v1032
      %vm1035 = vcmp.lt.s32.totalorder %v967, 0
      %v1036 = vsub.s32 0, %v967
      %v1037 = vsel %vm1035, %v1036, %v967
      %v1038 = vshrl.u32 %v1037, 4
      %v1039 = vand.u32 %v1037, 15
      %v1040 = vsub.s32 0, %v1039
      %v1041 = vsel %vm1035, %v1040, %v1039
      %vm1042 = vcmp.lt.s32.totalorder %v968, 0
      %v1043 = vsub.s32 0, %v968
      %v1044 = vsel %vm1042, %v1043, %v968
      %v1045 = vshrl.u32 %v1044, 4
      %v1046 = vand.u32 %v1044, 15
      %v1047 = vsub.s32 0, %v1046
      %v1048 = vsel %vm1042, %v1047, %v1046
      %vm1049 = vcmp.lt.s32.totalorder %v969, 0
      %v1050 = vsub.s32 0, %v969
      %v1051 = vsel %vm1049, %v1050, %v969
      %v1052 = vshrl.u32 %v1051, 4
      %v1053 = vand.u32 %v1051, 15
      %v1054 = vsub.s32 0, %v1053
      %v1055 = vsel %vm1049, %v1054, %v1053
      %vm1056 = vcmp.lt.s32.totalorder %v970, 0
      %v1057 = vsub.s32 0, %v970
      %v1058 = vsel %vm1056, %v1057, %v970
      %v1059 = vshrl.u32 %v1058, 4
      %v1060 = vand.u32 %v1058, 15
      %v1061 = vsub.s32 0, %v1060
      %v1062 = vsel %vm1056, %v1061, %v1060
      %vm1063 = vcmp.lt.s32.totalorder %v971, 0
      %v1064 = vsub.s32 0, %v971
      %v1065 = vsel %vm1063, %v1064, %v971
      %v1066 = vshrl.u32 %v1065, 4
      %v1067 = vand.u32 %v1065, 15
      %v1068 = vsub.s32 0, %v1067
      %v1069 = vsel %vm1063, %v1068, %v1067
      %vm1070 = vcmp.lt.s32.totalorder %v972, 0
      %v1071 = vsub.s32 0, %v972
      %v1072 = vsel %vm1070, %v1071, %v972
      %v1073 = vshrl.u32 %v1072, 4
      %v1074 = vand.u32 %v1072, 15
      %v1075 = vsub.s32 0, %v1074
      %v1076 = vsel %vm1070, %v1075, %v1074
      %vm1077 = vcmp.lt.s32.totalorder %v973, 0
      %v1078 = vsub.s32 0, %v973
      %v1079 = vsel %vm1077, %v1078, %v973
      %v1080 = vshrl.u32 %v1079, 4
      %v1081 = vand.u32 %v1079, 15
      %v1082 = vsub.s32 0, %v1081
      %v1083 = vsel %vm1077, %v1082, %v1081
      %vm1084 = vcmp.lt.s32.totalorder %v974, 0
      %v1085 = vsub.s32 0, %v974
      %v1086 = vsel %vm1084, %v1085, %v974
      %v1087 = vshrl.u32 %v1086, 4
      %v1088 = vand.u32 %v1086, 15
      %v1089 = vsub.s32 0, %v1088
      %v1090 = vsel %vm1084, %v1089, %v1088
      %vm1091 = vcmp.lt.s32.totalorder %v975, 0
      %v1092 = vsub.s32 0, %v975
      %v1093 = vsel %vm1091, %v1092, %v975
      %v1094 = vshrl.u32 %v1093, 4
      %v1095 = vand.u32 %v1093, 15
      %v1096 = vsub.s32 0, %v1095
      %v1097 = vsel %vm1091, %v1096, %v1095
      %vm1098 = vcmp.lt.s32.totalorder %v976, 0
      %v1099 = vsub.s32 0, %v976
      %v1100 = vsel %vm1098, %v1099, %v976
      %v1101 = vshrl.u32 %v1100, 4
      %v1102 = vand.u32 %v1100, 15
      %v1103 = vsub.s32 0, %v1102
      %v1104 = vsel %vm1098, %v1103, %v1102
      %vm1105 = vcmp.lt.s32.totalorder %v977, 0
      %v1106 = vsub.s32 0, %v977
      %v1107 = vsel %vm1105, %v1106, %v977
      %v1108 = vshrl.u32 %v1107, 4
      %v1109 = vand.u32 %v1107, 15
      %v1110 = vsub.s32 0, %v1109
      %v1111 = vsel %vm1105, %v1110, %v1109
      %vm1112 = vcmp.lt.s32.totalorder %v978, 0
      %v1113 = vsub.s32 0, %v978
      %v1114 = vsel %vm1112, %v1113, %v978
      %v1115 = vshrl.u32 %v1114, 4
      %v1116 = vand.u32 %v1114, 15
      %v1117 = vsub.s32 0, %v1116
      %v1118 = vsel %vm1112, %v1117, %v1116
      %vm1119 = vcmp.lt.s32.totalorder %v979, 0
      %v1120 = vsub.s32 0, %v979
      %v1121 = vsel %vm1119, %v1120, %v979
      %v1122 = vshrl.u32 %v1121, 4
      %v1123 = vand.u32 %v1121, 15
      %v1124 = vsub.s32 0, %v1123
      %v1125 = vsel %vm1119, %v1124, %v1123
      %vm1126 = vcmp.lt.s32.totalorder %v980, 0
      %v1127 = vsub.s32 0, %v980
      %v1128 = vsel %vm1126, %v1127, %v980
      %v1129 = vshrl.u32 %v1128, 4
      %v1130 = vand.u32 %v1128, 15
      %v1131 = vsub.s32 0, %v1130
      %v1132 = vsel %vm1126, %v1131, %v1130
      %vm1133 = vcmp.lt.s32.totalorder %v981, 0
      %v1134 = vsub.s32 0, %v981
      %v1135 = vsel %vm1133, %v1134, %v981
      %v1136 = vshrl.u32 %v1135, 4
      %v1137 = vand.u32 %v1135, 15
      %v1138 = vsub.s32 0, %v1137
      %v1139 = vsel %vm1133, %v1138, %v1137
      %vm1140 = vcmp.lt.s32.totalorder %v982, 0
      %v1141 = vsub.s32 0, %v982
      %v1142 = vsel %vm1140, %v1141, %v982
      %v1143 = vshrl.u32 %v1142, 4
      %v1144 = vand.u32 %v1142, 15
      %v1145 = vsub.s32 0, %v1144
      %v1146 = vsel %vm1140, %v1145, %v1144
      %vm1147 = vcmp.lt.s32.totalorder %v983, 0
      %v1148 = vsub.s32 0, %v983
      %v1149 = vsel %vm1147, %v1148, %v983
      %v1150 = vshrl.u32 %v1149, 4
      %v1151 = vand.u32 %v1149, 15
      %v1152 = vsub.s32 0, %v1151
      %v1153 = vsel %vm1147, %v1152, %v1151
      %vm1154 = vcmp.lt.s32.totalorder %v984, 0
      %v1155 = vsub.s32 0, %v984
      %v1156 = vsel %vm1154, %v1155, %v984
      %v1157 = vshrl.u32 %v1156, 4
      %v1158 = vand.u32 %v1156, 15
      %v1159 = vsub.s32 0, %v1158
      %v1160 = vsel %vm1154, %v1159, %v1158
      %vm1161 = vcmp.lt.s32.totalorder %v985, 0
      %v1162 = vsub.s32 0, %v985
      %v1163 = vsel %vm1161, %v1162, %v985
      %v1164 = vshrl.u32 %v1163, 4
      %v1165 = vand.u32 %v1163, 15
      %v1166 = vsub.s32 0, %v1165
      %v1167 = vsel %vm1161, %v1166, %v1165
      %vm1168 = vcmp.lt.s32.totalorder %v986, 0
      %v1169 = vsub.s32 0, %v986
      %v1170 = vsel %vm1168, %v1169, %v986
      %v1171 = vshrl.u32 %v1170, 4
      %v1172 = vand.u32 %v1170, 15
      %v1173 = vsub.s32 0, %v1172
      %v1174 = vsel %vm1168, %v1173, %v1172
      %vm1175 = vcmp.lt.s32.totalorder %v987, 0
      %v1176 = vsub.s32 0, %v987
      %v1177 = vsel %vm1175, %v1176, %v987
      %v1178 = vshrl.u32 %v1177, 4
      %v1179 = vand.u32 %v1177, 15
      %v1180 = vsub.s32 0, %v1179
      %v1181 = vsel %vm1175, %v1180, %v1179
      %vm1182 = vcmp.lt.s32.totalorder %v988, 0
      %v1183 = vsub.s32 0, %v988
      %v1184 = vsel %vm1182, %v1183, %v988
      %v1185 = vshrl.u32 %v1184, 4
      %v1186 = vand.u32 %v1184, 15
      %v1187 = vsub.s32 0, %v1186
      %v1188 = vsel %vm1182, %v1187, %v1186
      %vm1189 = vcmp.lt.s32.totalorder %v989, 0
      %v1190 = vsub.s32 0, %v989
      %v1191 = vsel %vm1189, %v1190, %v989
      %v1192 = vshrl.u32 %v1191, 4
      %v1193 = vand.u32 %v1191, 15
      %v1194 = vsub.s32 0, %v1193
      %v1195 = vsel %vm1189, %v1194, %v1193
      %vm1196 = vcmp.lt.s32.totalorder %v990, 0
      %v1197 = vsub.s32 0, %v990
      %v1198 = vsel %vm1196, %v1197, %v990
      %v1199 = vshrl.u32 %v1198, 4
      %v1200 = vand.u32 %v1198, 15
      %v1201 = vsub.s32 0, %v1200
      %v1202 = vsel %vm1196, %v1201, %v1200
      %vm1203 = vcmp.lt.s32.totalorder %v991, 0
      %v1204 = vsub.s32 0, %v991
      %v1205 = vsel %vm1203, %v1204, %v991
      %v1206 = vshrl.u32 %v1205, 4
      %v1207 = vand.u32 %v1205, 15
      %v1208 = vsub.s32 0, %v1207
      %v1209 = vsel %vm1203, %v1208, %v1207
      %vm1210 = vcmp.lt.s32.totalorder %v992, 0
      %v1211 = vsub.s32 0, %v992
      %v1212 = vsel %vm1210, %v1211, %v992
      %v1213 = vshrl.u32 %v1212, 4
      %v1214 = vand.u32 %v1212, 15
      %v1215 = vsub.s32 0, %v1214
      %v1216 = vsel %vm1210, %v1215, %v1214
      %vm1217 = vcmp.ne.s32.totalorder %v999, 0
      %vm1218 = vcmp.ne.s32.totalorder %v1006, 0
      %vm1219 = vcmp.ne.s32.totalorder %v1013, 0
      %vm1220 = vcmp.ne.s32.totalorder %v1020, 0
      %vm1221 = vcmp.ne.s32.totalorder %v1027, 0
      %vm1222 = vcmp.ne.s32.totalorder %v1034, 0
      %vm1223 = vcmp.ne.s32.totalorder %v1041, 0
      %vm1224 = vcmp.ne.s32.totalorder %v1048, 0
      %vm1225 = vcmp.ne.s32.totalorder %v1055, 0
      %vm1226 = vcmp.ne.s32.totalorder %v1062, 0
      %vm1227 = vcmp.ne.s32.totalorder %v1069, 0
      %vm1228 = vcmp.ne.s32.totalorder %v1076, 0
      %vm1229 = vcmp.ne.s32.totalorder %v1083, 0
      %vm1230 = vcmp.ne.s32.totalorder %v1090, 0
      %vm1231 = vcmp.ne.s32.totalorder %v1097, 0
      %vm1232 = vcmp.ne.s32.totalorder %v1104, 0
      %vm1233 = vcmp.ne.s32.totalorder %v1111, 0
      %vm1234 = vcmp.ne.s32.totalorder %v1118, 0
      %vm1235 = vcmp.ne.s32.totalorder %v1125, 0
      %vm1236 = vcmp.ne.s32.totalorder %v1132, 0
      %vm1237 = vcmp.ne.s32.totalorder %v1139, 0
      %vm1238 = vcmp.ne.s32.totalorder %v1146, 0
      %vm1239 = vcmp.ne.s32.totalorder %v1153, 0
      %vm1240 = vcmp.ne.s32.totalorder %v1160, 0
      %vm1241 = vcmp.ne.s32.totalorder %v1167, 0
      %vm1242 = vcmp.ne.s32.totalorder %v1174, 0
      %vm1243 = vcmp.ne.s32.totalorder %v1181, 0
      %vm1244 = vcmp.ne.s32.totalorder %v1188, 0
      %vm1245 = vcmp.ne.s32.totalorder %v1195, 0
      %vm1246 = vcmp.ne.s32.totalorder %v1202, 0
      %vm1247 = vcmp.ne.s32.totalorder %v1209, 0
      %vm1248 = vcmp.ne.s32.totalorder %v1216, 0
      %vm1249 = vcmp.lt.s32.totalorder %v999, 0
      %vm1250 = vcmp.lt.s32.totalorder %v1006, 0
      %vm1251 = vcmp.lt.s32.totalorder %v1013, 0
      %vm1252 = vcmp.lt.s32.totalorder %v1020, 0
      %vm1253 = vcmp.lt.s32.totalorder %v1027, 0
      %vm1254 = vcmp.lt.s32.totalorder %v1034, 0
      %vm1255 = vcmp.lt.s32.totalorder %v1041, 0
      %vm1256 = vcmp.lt.s32.totalorder %v1048, 0
      %vm1257 = vcmp.lt.s32.totalorder %v1055, 0
      %vm1258 = vcmp.lt.s32.totalorder %v1062, 0
      %vm1259 = vcmp.lt.s32.totalorder %v1069, 0
      %vm1260 = vcmp.lt.s32.totalorder %v1076, 0
      %vm1261 = vcmp.lt.s32.totalorder %v1083, 0
      %vm1262 = vcmp.lt.s32.totalorder %v1090, 0
      %vm1263 = vcmp.lt.s32.totalorder %v1097, 0
      %vm1264 = vcmp.lt.s32.totalorder %v1104, 0
      %vm1265 = vcmp.lt.s32.totalorder %v1111, 0
      %vm1266 = vcmp.lt.s32.totalorder %v1118, 0
      %vm1267 = vcmp.lt.s32.totalorder %v1125, 0
      %vm1268 = vcmp.lt.s32.totalorder %v1132, 0
      %vm1269 = vcmp.lt.s32.totalorder %v1139, 0
      %vm1270 = vcmp.lt.s32.totalorder %v1146, 0
      %vm1271 = vcmp.lt.s32.totalorder %v1153, 0
      %vm1272 = vcmp.lt.s32.totalorder %v1160, 0
      %vm1273 = vcmp.lt.s32.totalorder %v1167, 0
      %vm1274 = vcmp.lt.s32.totalorder %v1174, 0
      %vm1275 = vcmp.lt.s32.totalorder %v1181, 0
      %vm1276 = vcmp.lt.s32.totalorder %v1188, 0
      %vm1277 = vcmp.lt.s32.totalorder %v1195, 0
      %vm1278 = vcmp.lt.s32.totalorder %v1202, 0
      %vm1279 = vcmp.lt.s32.totalorder %v1209, 0
      %vm1280 = vcmp.lt.s32.totalorder %v1216, 0
      %vm1281 = vmand %vm1249, %vm1217
      %vm1282 = vmand %vm1250, %vm1218
      %vm1283 = vmand %vm1251, %vm1219
      %vm1284 = vmand %vm1252, %vm1220
      %vm1285 = vmand %vm1253, %vm1221
      %vm1286 = vmand %vm1254, %vm1222
      %vm1287 = vmand %vm1255, %vm1223
      %vm1288 = vmand %vm1256, %vm1224
      %vm1289 = vmand %vm1257, %vm1225
      %vm1290 = vmand %vm1258, %vm1226
      %vm1291 = vmand %vm1259, %vm1227
      %vm1292 = vmand %vm1260, %vm1228
      %vm1293 = vmand %vm1261, %vm1229
      %vm1294 = vmand %vm1262, %vm1230
      %vm1295 = vmand %vm1263, %vm1231
      %vm1296 = vmand %vm1264, %vm1232
      %vm1297 = vmand %vm1265, %vm1233
      %vm1298 = vmand %vm1266, %vm1234
      %vm1299 = vmand %vm1267, %vm1235
      %vm1300 = vmand %vm1268, %vm1236
      %vm1301 = vmand %vm1269, %vm1237
      %vm1302 = vmand %vm1270, %vm1238
      %vm1303 = vmand %vm1271, %vm1239
      %vm1304 = vmand %vm1272, %vm1240
      %vm1305 = vmand %vm1273, %vm1241
      %vm1306 = vmand %vm1274, %vm1242
      %vm1307 = vmand %vm1275, %vm1243
      %vm1308 = vmand %vm1276, %vm1244
      %vm1309 = vmand %vm1277, %vm1245
      %vm1310 = vmand %vm1278, %vm1246
      %vm1311 = vmand %vm1279, %vm1247
      %vm1312 = vmand %vm1280, %vm1248
      %v1313 = vadd.s32 %v999, 16
      %v1314 = vadd.s32 %v1006, 16
      %v1315 = vadd.s32 %v1013, 16
      %v1316 = vadd.s32 %v1020, 16
      %v1317 = vadd.s32 %v1027, 16
      %v1318 = vadd.s32 %v1034, 16
      %v1319 = vadd.s32 %v1041, 16
      %v1320 = vadd.s32 %v1048, 16
      %v1321 = vadd.s32 %v1055, 16
      %v1322 = vadd.s32 %v1062, 16
      %v1323 = vadd.s32 %v1069, 16
      %v1324 = vadd.s32 %v1076, 16
      %v1325 = vadd.s32 %v1083, 16
      %v1326 = vadd.s32 %v1090, 16
      %v1327 = vadd.s32 %v1097, 16
      %v1328 = vadd.s32 %v1104, 16
      %v1329 = vadd.s32 %v1111, 16
      %v1330 = vadd.s32 %v1118, 16
      %v1331 = vadd.s32 %v1125, 16
      %v1332 = vadd.s32 %v1132, 16
      %v1333 = vadd.s32 %v1139, 16
      %v1334 = vadd.s32 %v1146, 16
      %v1335 = vadd.s32 %v1153, 16
      %v1336 = vadd.s32 %v1160, 16
      %v1337 = vadd.s32 %v1167, 16
      %v1338 = vadd.s32 %v1174, 16
      %v1339 = vadd.s32 %v1181, 16
      %v1340 = vadd.s32 %v1188, 16
      %v1341 = vadd.s32 %v1195, 16
      %v1342 = vadd.s32 %v1202, 16
      %v1343 = vadd.s32 %v1209, 16
      %v1344 = vadd.s32 %v1216, 16
      %v1345 = vsel %vm1281, %v1313, %v999
      %v1346 = vsel %vm1282, %v1314, %v1006
      %v1347 = vsel %vm1283, %v1315, %v1013
      %v1348 = vsel %vm1284, %v1316, %v1020
      %v1349 = vsel %vm1285, %v1317, %v1027
      %v1350 = vsel %vm1286, %v1318, %v1034
      %v1351 = vsel %vm1287, %v1319, %v1041
      %v1352 = vsel %vm1288, %v1320, %v1048
      %v1353 = vsel %vm1289, %v1321, %v1055
      %v1354 = vsel %vm1290, %v1322, %v1062
      %v1355 = vsel %vm1291, %v1323, %v1069
      %v1356 = vsel %vm1292, %v1324, %v1076
      %v1357 = vsel %vm1293, %v1325, %v1083
      %v1358 = vsel %vm1294, %v1326, %v1090
      %v1359 = vsel %vm1295, %v1327, %v1097
      %v1360 = vsel %vm1296, %v1328, %v1104
      %v1361 = vsel %vm1297, %v1329, %v1111
      %v1362 = vsel %vm1298, %v1330, %v1118
      %v1363 = vsel %vm1299, %v1331, %v1125
      %v1364 = vsel %vm1300, %v1332, %v1132
      %v1365 = vsel %vm1301, %v1333, %v1139
      %v1366 = vsel %vm1302, %v1334, %v1146
      %v1367 = vsel %vm1303, %v1335, %v1153
      %v1368 = vsel %vm1304, %v1336, %v1160
      %v1369 = vsel %vm1305, %v1337, %v1167
      %v1370 = vsel %vm1306, %v1338, %v1174
      %v1371 = vsel %vm1307, %v1339, %v1181
      %v1372 = vsel %vm1308, %v1340, %v1188
      %v1373 = vsel %vm1309, %v1341, %v1195
      %v1374 = vsel %vm1310, %v1342, %v1202
      %v1375 = vsel %vm1311, %v1343, %v1209
      %v1376 = vsel %vm1312, %v1344, %v1216
      %vm1377 = vcmp.le.s32.totalorder %v1345, 14
      %vm1378 = vcmp.le.s32.totalorder %v1346, 14
      %vm1379 = vcmp.le.s32.totalorder %v1347, 14
      %vm1380 = vcmp.le.s32.totalorder %v1348, 14
      %vm1381 = vcmp.le.s32.totalorder %v1349, 14
      %vm1382 = vcmp.le.s32.totalorder %v1350, 14
      %vm1383 = vcmp.le.s32.totalorder %v1351, 14
      %vm1384 = vcmp.le.s32.totalorder %v1352, 14
      %vm1385 = vcmp.le.s32.totalorder %v1353, 14
      %vm1386 = vcmp.le.s32.totalorder %v1354, 14
      %vm1387 = vcmp.le.s32.totalorder %v1355, 14
      %vm1388 = vcmp.le.s32.totalorder %v1356, 14
      %vm1389 = vcmp.le.s32.totalorder %v1357, 14
      %vm1390 = vcmp.le.s32.totalorder %v1358, 14
      %vm1391 = vcmp.le.s32.totalorder %v1359, 14
      %vm1392 = vcmp.le.s32.totalorder %v1360, 14
      %vm1393 = vcmp.le.s32.totalorder %v1361, 14
      %vm1394 = vcmp.le.s32.totalorder %v1362, 14
      %vm1395 = vcmp.le.s32.totalorder %v1363, 14
      %vm1396 = vcmp.le.s32.totalorder %v1364, 14
      %vm1397 = vcmp.le.s32.totalorder %v1365, 14
      %vm1398 = vcmp.le.s32.totalorder %v1366, 14
      %vm1399 = vcmp.le.s32.totalorder %v1367, 14
      %vm1400 = vcmp.le.s32.totalorder %v1368, 14
      %vm1401 = vcmp.le.s32.totalorder %v1369, 14
      %vm1402 = vcmp.le.s32.totalorder %v1370, 14
      %vm1403 = vcmp.le.s32.totalorder %v1371, 14
      %vm1404 = vcmp.le.s32.totalorder %v1372, 14
      %vm1405 = vcmp.le.s32.totalorder %v1373, 14
      %vm1406 = vcmp.le.s32.totalorder %v1374, 14
      %vm1407 = vcmp.le.s32.totalorder %v1375, 14
      %vm1408 = vcmp.le.s32.totalorder %v1376, 14
      %v1409 = vsel %vm1377, 1, 0
      %v1410 = vsel %vm1378, 1, 0
      %v1411 = vsel %vm1379, 1, 0
      %v1412 = vsel %vm1380, 1, 0
      %v1413 = vsel %vm1381, 1, 0
      %v1414 = vsel %vm1382, 1, 0
      %v1415 = vsel %vm1383, 1, 0
      %v1416 = vsel %vm1384, 1, 0
      %v1417 = vsel %vm1385, 1, 0
      %v1418 = vsel %vm1386, 1, 0
      %v1419 = vsel %vm1387, 1, 0
      %v1420 = vsel %vm1388, 1, 0
      %v1421 = vsel %vm1389, 1, 0
      %v1422 = vsel %vm1390, 1, 0
      %v1423 = vsel %vm1391, 1, 0
      %v1424 = vsel %vm1392, 1, 0
      %v1425 = vsel %vm1393, 1, 0
      %v1426 = vsel %vm1394, 1, 0
      %v1427 = vsel %vm1395, 1, 0
      %v1428 = vsel %vm1396, 1, 0
      %v1429 = vsel %vm1397, 1, 0
      %v1430 = vsel %vm1398, 1, 0
      %v1431 = vsel %vm1399, 1, 0
      %v1432 = vsel %vm1400, 1, 0
      %v1433 = vsel %vm1401, 1, 0
      %v1434 = vsel %vm1402, 1, 0
      %v1435 = vsel %vm1403, 1, 0
      %v1436 = vsel %vm1404, 1, 0
      %v1437 = vsel %vm1405, 1, 0
      %v1438 = vsel %vm1406, 1, 0
      %v1439 = vsel %vm1407, 1, 0
      %v1440 = vsel %vm1408, 1, 0
      %vm1441 = vcmp.eq.s32.totalorder %v1409, 1
      %vm1442 = vcmp.eq.s32.totalorder %v1410, 1
      %vm1443 = vcmp.eq.s32.totalorder %v1411, 1
      %vm1444 = vcmp.eq.s32.totalorder %v1412, 1
      %vm1445 = vcmp.eq.s32.totalorder %v1413, 1
      %vm1446 = vcmp.eq.s32.totalorder %v1414, 1
      %vm1447 = vcmp.eq.s32.totalorder %v1415, 1
      %vm1448 = vcmp.eq.s32.totalorder %v1416, 1
      %vm1449 = vcmp.eq.s32.totalorder %v1417, 1
      %vm1450 = vcmp.eq.s32.totalorder %v1418, 1
      %vm1451 = vcmp.eq.s32.totalorder %v1419, 1
      %vm1452 = vcmp.eq.s32.totalorder %v1420, 1
      %vm1453 = vcmp.eq.s32.totalorder %v1421, 1
      %vm1454 = vcmp.eq.s32.totalorder %v1422, 1
      %vm1455 = vcmp.eq.s32.totalorder %v1423, 1
      %vm1456 = vcmp.eq.s32.totalorder %v1424, 1
      %vm1457 = vcmp.eq.s32.totalorder %v1425, 1
      %vm1458 = vcmp.eq.s32.totalorder %v1426, 1
      %vm1459 = vcmp.eq.s32.totalorder %v1427, 1
      %vm1460 = vcmp.eq.s32.totalorder %v1428, 1
      %vm1461 = vcmp.eq.s32.totalorder %v1429, 1
      %vm1462 = vcmp.eq.s32.totalorder %v1430, 1
      %vm1463 = vcmp.eq.s32.totalorder %v1431, 1
      %vm1464 = vcmp.eq.s32.totalorder %v1432, 1
      %vm1465 = vcmp.eq.s32.totalorder %v1433, 1
      %vm1466 = vcmp.eq.s32.totalorder %v1434, 1
      %vm1467 = vcmp.eq.s32.totalorder %v1435, 1
      %vm1468 = vcmp.eq.s32.totalorder %v1436, 1
      %vm1469 = vcmp.eq.s32.totalorder %v1437, 1
      %vm1470 = vcmp.eq.s32.totalorder %v1438, 1
      %vm1471 = vcmp.eq.s32.totalorder %v1439, 1
      %vm1472 = vcmp.eq.s32.totalorder %v1440, 1
      %v1473 = vsel %vm1441, %v928, 0.0
      %v1474 = vsel %vm1442, %v929, 0.0
      %v1475 = vsel %vm1443, %v930, 0.0
      %v1476 = vsel %vm1444, %v931, 0.0
      %v1477 = vsel %vm1445, %v932, 0.0
      %v1478 = vsel %vm1446, %v933, 0.0
      %v1479 = vsel %vm1447, %v934, 0.0
      %v1480 = vsel %vm1448, %v935, 0.0
      %v1481 = vsel %vm1449, %v936, 0.0
      %v1482 = vsel %vm1450, %v937, 0.0
      %v1483 = vsel %vm1451, %v938, 0.0
      %v1484 = vsel %vm1452, %v939, 0.0
      %v1485 = vsel %vm1453, %v940, 0.0
      %v1486 = vsel %vm1454, %v941, 0.0
      %v1487 = vsel %vm1455, %v942, 0.0
      %v1488 = vsel %vm1456, %v943, 0.0
      %v1489 = vsel %vm1457, %v944, 0.0
      %v1490 = vsel %vm1458, %v945, 0.0
      %v1491 = vsel %vm1459, %v946, 0.0
      %v1492 = vsel %vm1460, %v947, 0.0
      %v1493 = vsel %vm1461, %v948, 0.0
      %v1494 = vsel %vm1462, %v949, 0.0
      %v1495 = vsel %vm1463, %v950, 0.0
      %v1496 = vsel %vm1464, %v951, 0.0
      %v1497 = vsel %vm1465, %v952, 0.0
      %v1498 = vsel %vm1466, %v953, 0.0
      %v1499 = vsel %vm1467, %v954, 0.0
      %v1500 = vsel %vm1468, %v955, 0.0
      %v1501 = vsel %vm1469, %v956, 0.0
      %v1502 = vsel %vm1470, %v957, 0.0
      %v1503 = vsel %vm1471, %v958, 0.0
      %v1504 = vsel %vm1472, %v959, 0.0
      %vm1505 = vcmp.ge.s32.totalorder %v1345, 1
      %vm1506 = vcmp.ge.s32.totalorder %v1346, 1
      %vm1507 = vcmp.ge.s32.totalorder %v1347, 1
      %vm1508 = vcmp.ge.s32.totalorder %v1348, 1
      %vm1509 = vcmp.ge.s32.totalorder %v1349, 1
      %vm1510 = vcmp.ge.s32.totalorder %v1350, 1
      %vm1511 = vcmp.ge.s32.totalorder %v1351, 1
      %vm1512 = vcmp.ge.s32.totalorder %v1352, 1
      %vm1513 = vcmp.ge.s32.totalorder %v1353, 1
      %vm1514 = vcmp.ge.s32.totalorder %v1354, 1
      %vm1515 = vcmp.ge.s32.totalorder %v1355, 1
      %vm1516 = vcmp.ge.s32.totalorder %v1356, 1
      %vm1517 = vcmp.ge.s32.totalorder %v1357, 1
      %vm1518 = vcmp.ge.s32.totalorder %v1358, 1
      %vm1519 = vcmp.ge.s32.totalorder %v1359, 1
      %vm1520 = vcmp.ge.s32.totalorder %v1360, 1
      %vm1521 = vcmp.ge.s32.totalorder %v1361, 1
      %vm1522 = vcmp.ge.s32.totalorder %v1362, 1
      %vm1523 = vcmp.ge.s32.totalorder %v1363, 1
      %vm1524 = vcmp.ge.s32.totalorder %v1364, 1
      %vm1525 = vcmp.ge.s32.totalorder %v1365, 1
      %vm1526 = vcmp.ge.s32.totalorder %v1366, 1
      %vm1527 = vcmp.ge.s32.totalorder %v1367, 1
      %vm1528 = vcmp.ge.s32.totalorder %v1368, 1
      %vm1529 = vcmp.ge.s32.totalorder %v1369, 1
      %vm1530 = vcmp.ge.s32.totalorder %v1370, 1
      %vm1531 = vcmp.ge.s32.totalorder %v1371, 1
      %vm1532 = vcmp.ge.s32.totalorder %v1372, 1
      %vm1533 = vcmp.ge.s32.totalorder %v1373, 1
      %vm1534 = vcmp.ge.s32.totalorder %v1374, 1
      %vm1535 = vcmp.ge.s32.totalorder %v1375, 1
      %vm1536 = vcmp.ge.s32.totalorder %v1376, 1
      %v1537 = vsel %vm1505, 1, 0
      %v1538 = vsel %vm1506, 1, 0
      %v1539 = vsel %vm1507, 1, 0
      %v1540 = vsel %vm1508, 1, 0
      %v1541 = vsel %vm1509, 1, 0
      %v1542 = vsel %vm1510, 1, 0
      %v1543 = vsel %vm1511, 1, 0
      %v1544 = vsel %vm1512, 1, 0
      %v1545 = vsel %vm1513, 1, 0
      %v1546 = vsel %vm1514, 1, 0
      %v1547 = vsel %vm1515, 1, 0
      %v1548 = vsel %vm1516, 1, 0
      %v1549 = vsel %vm1517, 1, 0
      %v1550 = vsel %vm1518, 1, 0
      %v1551 = vsel %vm1519, 1, 0
      %v1552 = vsel %vm1520, 1, 0
      %v1553 = vsel %vm1521, 1, 0
      %v1554 = vsel %vm1522, 1, 0
      %v1555 = vsel %vm1523, 1, 0
      %v1556 = vsel %vm1524, 1, 0
      %v1557 = vsel %vm1525, 1, 0
      %v1558 = vsel %vm1526, 1, 0
      %v1559 = vsel %vm1527, 1, 0
      %v1560 = vsel %vm1528, 1, 0
      %v1561 = vsel %vm1529, 1, 0
      %v1562 = vsel %vm1530, 1, 0
      %v1563 = vsel %vm1531, 1, 0
      %v1564 = vsel %vm1532, 1, 0
      %v1565 = vsel %vm1533, 1, 0
      %v1566 = vsel %vm1534, 1, 0
      %v1567 = vsel %vm1535, 1, 0
      %v1568 = vsel %vm1536, 1, 0
      %vm1569 = vcmp.eq.s32.totalorder %v1537, 1
      %vm1570 = vcmp.eq.s32.totalorder %v1538, 1
      %vm1571 = vcmp.eq.s32.totalorder %v1539, 1
      %vm1572 = vcmp.eq.s32.totalorder %v1540, 1
      %vm1573 = vcmp.eq.s32.totalorder %v1541, 1
      %vm1574 = vcmp.eq.s32.totalorder %v1542, 1
      %vm1575 = vcmp.eq.s32.totalorder %v1543, 1
      %vm1576 = vcmp.eq.s32.totalorder %v1544, 1
      %vm1577 = vcmp.eq.s32.totalorder %v1545, 1
      %vm1578 = vcmp.eq.s32.totalorder %v1546, 1
      %vm1579 = vcmp.eq.s32.totalorder %v1547, 1
      %vm1580 = vcmp.eq.s32.totalorder %v1548, 1
      %vm1581 = vcmp.eq.s32.totalorder %v1549, 1
      %vm1582 = vcmp.eq.s32.totalorder %v1550, 1
      %vm1583 = vcmp.eq.s32.totalorder %v1551, 1
      %vm1584 = vcmp.eq.s32.totalorder %v1552, 1
      %vm1585 = vcmp.eq.s32.totalorder %v1553, 1
      %vm1586 = vcmp.eq.s32.totalorder %v1554, 1
      %vm1587 = vcmp.eq.s32.totalorder %v1555, 1
      %vm1588 = vcmp.eq.s32.totalorder %v1556, 1
      %vm1589 = vcmp.eq.s32.totalorder %v1557, 1
      %vm1590 = vcmp.eq.s32.totalorder %v1558, 1
      %vm1591 = vcmp.eq.s32.totalorder %v1559, 1
      %vm1592 = vcmp.eq.s32.totalorder %v1560, 1
      %vm1593 = vcmp.eq.s32.totalorder %v1561, 1
      %vm1594 = vcmp.eq.s32.totalorder %v1562, 1
      %vm1595 = vcmp.eq.s32.totalorder %v1563, 1
      %vm1596 = vcmp.eq.s32.totalorder %v1564, 1
      %vm1597 = vcmp.eq.s32.totalorder %v1565, 1
      %vm1598 = vcmp.eq.s32.totalorder %v1566, 1
      %vm1599 = vcmp.eq.s32.totalorder %v1567, 1
      %vm1600 = vcmp.eq.s32.totalorder %v1568, 1
      %v1601 = vsel %vm1569, %v928, 0.0
      %v1602 = vsel %vm1570, %v929, 0.0
      %v1603 = vsel %vm1571, %v930, 0.0
      %v1604 = vsel %vm1572, %v931, 0.0
      %v1605 = vsel %vm1573, %v932, 0.0
      %v1606 = vsel %vm1574, %v933, 0.0
      %v1607 = vsel %vm1575, %v934, 0.0
      %v1608 = vsel %vm1576, %v935, 0.0
      %v1609 = vsel %vm1577, %v936, 0.0
      %v1610 = vsel %vm1578, %v937, 0.0
      %v1611 = vsel %vm1579, %v938, 0.0
      %v1612 = vsel %vm1580, %v939, 0.0
      %v1613 = vsel %vm1581, %v940, 0.0
      %v1614 = vsel %vm1582, %v941, 0.0
      %v1615 = vsel %vm1583, %v942, 0.0
      %v1616 = vsel %vm1584, %v943, 0.0
      %v1617 = vsel %vm1585, %v944, 0.0
      %v1618 = vsel %vm1586, %v945, 0.0
      %v1619 = vsel %vm1587, %v946, 0.0
      %v1620 = vsel %vm1588, %v947, 0.0
      %v1621 = vsel %vm1589, %v948, 0.0
      %v1622 = vsel %vm1590, %v949, 0.0
      %v1623 = vsel %vm1591, %v950, 0.0
      %v1624 = vsel %vm1592, %v951, 0.0
      %v1625 = vsel %vm1593, %v952, 0.0
      %v1626 = vsel %vm1594, %v953, 0.0
      %v1627 = vsel %vm1595, %v954, 0.0
      %v1628 = vsel %vm1596, %v955, 0.0
      %v1629 = vsel %vm1597, %v956, 0.0
      %v1630 = vsel %vm1598, %v957, 0.0
      %v1631 = vsel %vm1599, %v958, 0.0
      %v1632 = vsel %vm1600, %v959, 0.0
      %vm1633 = vcmask 64512
      %1634 = vst.msk [vmem:[#allocation2] sm:$0xff] %vm1633, 0.0
      %1635 = vst.msk [vmem:[#allocation2 + $0x8] sm:$0xff] %vm1633, 0.0
      %1636 = vst.msk [vmem:[#allocation2 + $0x10] sm:$0xff] %vm1633, 0.0
      %1637 = vst.msk [vmem:[#allocation2 + $0x118] sm:$0xff] %vm1633, 0.0
      %1638 = vst.msk [vmem:[#allocation2 + $0x120] sm:$0xff] %vm1633, 0.0
      %1639 = vst.msk [vmem:[#allocation2 + $0x128] sm:$0xff] %vm1633, 0.0
      %1640 = vst.msk [vmem:[#allocation2 + $0x18] sm:$0xff] %vm1633, %v1473
      %1641 = vst.msk [vmem:[#allocation2 + $0x20] sm:$0xff] %vm1633, %v1474
      %1642 = vst.msk [vmem:[#allocation2 + $0x28] sm:$0xff] %vm1633, %v1475
      %1643 = vst.msk [vmem:[#allocation2 + $0x30] sm:$0xff] %vm1633, %v1476
      %1644 = vst.msk [vmem:[#allocation2 + $0x38] sm:$0xff] %vm1633, %v1477
      %1645 = vst.msk [vmem:[#allocation2 + $0x40] sm:$0xff] %vm1633, %v1478
      %1646 = vst.msk [vmem:[#allocation2 + $0x48] sm:$0xff] %vm1633, %v1479
      %1647 = vst.msk [vmem:[#allocation2 + $0x50] sm:$0xff] %vm1633, %v1480
      %1648 = vst.msk [vmem:[#allocation2 + $0x58] sm:$0xff] %vm1633, %v1481
      %1649 = vst.msk [vmem:[#allocation2 + $0x60] sm:$0xff] %vm1633, %v1482
      %1650 = vst.msk [vmem:[#allocation2 + $0x68] sm:$0xff] %vm1633, %v1483
      %1651 = vst.msk [vmem:[#allocation2 + $0x70] sm:$0xff] %vm1633, %v1484
      %1652 = vst.msk [vmem:[#allocation2 + $0x78] sm:$0xff] %vm1633, %v1485
      %1653 = vst.msk [vmem:[#allocation2 + $0x80] sm:$0xff] %vm1633, %v1486
      %1654 = vst.msk [vmem:[#allocation2 + $0x88] sm:$0xff] %vm1633, %v1487
      %1655 = vst.msk [vmem:[#allocation2 + $0x90] sm:$0xff] %vm1633, %v1488
      %1656 = vst.msk [vmem:[#allocation2 + $0x98] sm:$0xff] %vm1633, %v1489
      %1657 = vst.msk [vmem:[#allocation2 + $0xa0] sm:$0xff] %vm1633, %v1490
      %1658 = vst.msk [vmem:[#allocation2 + $0xa8] sm:$0xff] %vm1633, %v1491
      %1659 = vst.msk [vmem:[#allocation2 + $0xb0] sm:$0xff] %vm1633, %v1492
      %1660 = vst.msk [vmem:[#allocation2 + $0xb8] sm:$0xff] %vm1633, %v1493
      %1661 = vst.msk [vmem:[#allocation2 + $0xc0] sm:$0xff] %vm1633, %v1494
      %1662 = vst.msk [vmem:[#allocation2 + $0xc8] sm:$0xff] %vm1633, %v1495
      %1663 = vst.msk [vmem:[#allocation2 + $0xd0] sm:$0xff] %vm1633, %v1496
      %1664 = vst.msk [vmem:[#allocation2 + $0xd8] sm:$0xff] %vm1633, %v1497
      %1665 = vst.msk [vmem:[#allocation2 + $0xe0] sm:$0xff] %vm1633, %v1498
      %1666 = vst.msk [vmem:[#allocation2 + $0xe8] sm:$0xff] %vm1633, %v1499
      %1667 = vst.msk [vmem:[#allocation2 + $0xf0] sm:$0xff] %vm1633, %v1500
      %1668 = vst.msk [vmem:[#allocation2 + $0xf8] sm:$0xff] %vm1633, %v1501
      %1669 = vst.msk [vmem:[#allocation2 + $0x100] sm:$0xff] %vm1633, %v1502
      %1670 = vst.msk [vmem:[#allocation2 + $0x108] sm:$0xff] %vm1633, %v1503
      %1671 = vst.msk [vmem:[#allocation2 + $0x110] sm:$0xff] %vm1633, %v1504
      %1672 = vst.msk [vmem:[#allocation3] sm:$0xff] %vm1633, 0.0
      %1673 = vst.msk [vmem:[#allocation3 + $0x8] sm:$0xff] %vm1633, 0.0
      %1674 = vst.msk [vmem:[#allocation3 + $0x10] sm:$0xff] %vm1633, 0.0
      %1675 = vst.msk [vmem:[#allocation3 + $0x118] sm:$0xff] %vm1633, 0.0
      %1676 = vst.msk [vmem:[#allocation3 + $0x120] sm:$0xff] %vm1633, 0.0
      %1677 = vst.msk [vmem:[#allocation3 + $0x128] sm:$0xff] %vm1633, 0.0
      %1678 = vst.msk [vmem:[#allocation3 + $0x18] sm:$0xff] %vm1633, %v928
      %1679 = vst.msk [vmem:[#allocation3 + $0x20] sm:$0xff] %vm1633, %v929
      %1680 = vst.msk [vmem:[#allocation3 + $0x28] sm:$0xff] %vm1633, %v930
      %1681 = vst.msk [vmem:[#allocation3 + $0x30] sm:$0xff] %vm1633, %v931
      %1682 = vst.msk [vmem:[#allocation3 + $0x38] sm:$0xff] %vm1633, %v932
      %1683 = vst.msk [vmem:[#allocation3 + $0x40] sm:$0xff] %vm1633, %v933
      %1684 = vst.msk [vmem:[#allocation3 + $0x48] sm:$0xff] %vm1633, %v934
      %1685 = vst.msk [vmem:[#allocation3 + $0x50] sm:$0xff] %vm1633, %v935
      %1686 = vst.msk [vmem:[#allocation3 + $0x58] sm:$0xff] %vm1633, %v936
      %1687 = vst.msk [vmem:[#allocation3 + $0x60] sm:$0xff] %vm1633, %v937
      %1688 = vst.msk [vmem:[#allocation3 + $0x68] sm:$0xff] %vm1633, %v938
      %1689 = vst.msk [vmem:[#allocation3 + $0x70] sm:$0xff] %vm1633, %v939
      %1690 = vst.msk [vmem:[#allocation3 + $0x78] sm:$0xff] %vm1633, %v940
      %1691 = vst.msk [vmem:[#allocation3 + $0x80] sm:$0xff] %vm1633, %v941
      %1692 = vst.msk [vmem:[#allocation3 + $0x88] sm:$0xff] %vm1633, %v942
      %1693 = vst.msk [vmem:[#allocation3 + $0x90] sm:$0xff] %vm1633, %v943
      %1694 = vst.msk [vmem:[#allocation3 + $0x98] sm:$0xff] %vm1633, %v944
      %1695 = vst.msk [vmem:[#allocation3 + $0xa0] sm:$0xff] %vm1633, %v945
      %1696 = vst.msk [vmem:[#allocation3 + $0xa8] sm:$0xff] %vm1633, %v946
      %1697 = vst.msk [vmem:[#allocation3 + $0xb0] sm:$0xff] %vm1633, %v947
      %1698 = vst.msk [vmem:[#allocation3 + $0xb8] sm:$0xff] %vm1633, %v948
      %1699 = vst.msk [vmem:[#allocation3 + $0xc0] sm:$0xff] %vm1633, %v949
      %1700 = vst.msk [vmem:[#allocation3 + $0xc8] sm:$0xff] %vm1633, %v950
      %1701 = vst.msk [vmem:[#allocation3 + $0xd0] sm:$0xff] %vm1633, %v951
      %1702 = vst.msk [vmem:[#allocation3 + $0xd8] sm:$0xff] %vm1633, %v952
      %1703 = vst.msk [vmem:[#allocation3 + $0xe0] sm:$0xff] %vm1633, %v953
      %1704 = vst.msk [vmem:[#allocation3 + $0xe8] sm:$0xff] %vm1633, %v954
      %1705 = vst.msk [vmem:[#allocation3 + $0xf0] sm:$0xff] %vm1633, %v955
      %1706 = vst.msk [vmem:[#allocation3 + $0xf8] sm:$0xff] %vm1633, %v956
      %1707 = vst.msk [vmem:[#allocation3 + $0x100] sm:$0xff] %vm1633, %v957
      %1708 = vst.msk [vmem:[#allocation3 + $0x108] sm:$0xff] %vm1633, %v958
      %1709 = vst.msk [vmem:[#allocation3 + $0x110] sm:$0xff] %vm1633, %v959
      %1710 = vst.msk [vmem:[#allocation4] sm:$0xff] %vm1633, 0.0
      %1711 = vst.msk [vmem:[#allocation4 + $0x8] sm:$0xff] %vm1633, 0.0
      %1712 = vst.msk [vmem:[#allocation4 + $0x10] sm:$0xff] %vm1633, 0.0
      %1713 = vst.msk [vmem:[#allocation4 + $0x118] sm:$0xff] %vm1633, 0.0
      %1714 = vst.msk [vmem:[#allocation4 + $0x120] sm:$0xff] %vm1633, 0.0
      %1715 = vst.msk [vmem:[#allocation4 + $0x128] sm:$0xff] %vm1633, 0.0
      %1716 = vst.msk [vmem:[#allocation4 + $0x18] sm:$0xff] %vm1633, %v1601
      %1717 = vst.msk [vmem:[#allocation4 + $0x20] sm:$0xff] %vm1633, %v1602
      %1718 = vst.msk [vmem:[#allocation4 + $0x28] sm:$0xff] %vm1633, %v1603
      %1719 = vst.msk [vmem:[#allocation4 + $0x30] sm:$0xff] %vm1633, %v1604
      %1720 = vst.msk [vmem:[#allocation4 + $0x38] sm:$0xff] %vm1633, %v1605
      %1721 = vst.msk [vmem:[#allocation4 + $0x40] sm:$0xff] %vm1633, %v1606
      %1722 = vst.msk [vmem:[#allocation4 + $0x48] sm:$0xff] %vm1633, %v1607
      %1723 = vst.msk [vmem:[#allocation4 + $0x50] sm:$0xff] %vm1633, %v1608
      %1724 = vst.msk [vmem:[#allocation4 + $0x58] sm:$0xff] %vm1633, %v1609
      %1725 = vst.msk [vmem:[#allocation4 + $0x60] sm:$0xff] %vm1633, %v1610
      %1726 = vst.msk [vmem:[#allocation4 + $0x68] sm:$0xff] %vm1633, %v1611
      %1727 = vst.msk [vmem:[#allocation4 + $0x70] sm:$0xff] %vm1633, %v1612
      %1728 = vst.msk [vmem:[#allocation4 + $0x78] sm:$0xff] %vm1633, %v1613
      %1729 = vst.msk [vmem:[#allocation4 + $0x80] sm:$0xff] %vm1633, %v1614
      %1730 = vst.msk [vmem:[#allocation4 + $0x88] sm:$0xff] %vm1633, %v1615
      %1731 = vst.msk [vmem:[#allocation4 + $0x90] sm:$0xff] %vm1633, %v1616
      %1732 = vst.msk [vmem:[#allocation4 + $0x98] sm:$0xff] %vm1633, %v1617
      %1733 = vst.msk [vmem:[#allocation4 + $0xa0] sm:$0xff] %vm1633, %v1618
      %1734 = vst.msk [vmem:[#allocation4 + $0xa8] sm:$0xff] %vm1633, %v1619
      %1735 = vst.msk [vmem:[#allocation4 + $0xb0] sm:$0xff] %vm1633, %v1620
      %1736 = vst.msk [vmem:[#allocation4 + $0xb8] sm:$0xff] %vm1633, %v1621
      %1737 = vst.msk [vmem:[#allocation4 + $0xc0] sm:$0xff] %vm1633, %v1622
      %1738 = vst.msk [vmem:[#allocation4 + $0xc8] sm:$0xff] %vm1633, %v1623
      %1739 = vst.msk [vmem:[#allocation4 + $0xd0] sm:$0xff] %vm1633, %v1624
      %1740 = vst.msk [vmem:[#allocation4 + $0xd8] sm:$0xff] %vm1633, %v1625
      %1741 = vst.msk [vmem:[#allocation4 + $0xe0] sm:$0xff] %vm1633, %v1626
      %1742 = vst.msk [vmem:[#allocation4 + $0xe8] sm:$0xff] %vm1633, %v1627
      %1743 = vst.msk [vmem:[#allocation4 + $0xf0] sm:$0xff] %vm1633, %v1628
      %1744 = vst.msk [vmem:[#allocation4 + $0xf8] sm:$0xff] %vm1633, %v1629
      %1745 = vst.msk [vmem:[#allocation4 + $0x100] sm:$0xff] %vm1633, %v1630
      %1746 = vst.msk [vmem:[#allocation4 + $0x108] sm:$0xff] %vm1633, %v1631
      %1747 = vst.msk [vmem:[#allocation4 + $0x110] sm:$0xff] %vm1633, %v1632
      %v1748 = vld [vmem:[#allocation2 + $0x7] sm:$0xff]
      %v1749 = vld [vmem:[#allocation2 + $0xf] sm:$0xff]
      %v1750 = vld [vmem:[#allocation2 + $0x17] sm:$0xff]
      %v1751 = vld [vmem:[#allocation2 + $0x1f] sm:$0xff]
      %v1752 = vld [vmem:[#allocation2 + $0x27] sm:$0xff]
      %v1753 = vld [vmem:[#allocation2 + $0x2f] sm:$0xff]
      %v1754 = vld [vmem:[#allocation2 + $0x37] sm:$0xff]
      %v1755 = vld [vmem:[#allocation2 + $0x3f] sm:$0xff]
      %v1756 = vld [vmem:[#allocation2 + $0x47] sm:$0xff]
      %v1757 = vld [vmem:[#allocation2 + $0x4f] sm:$0xff]
      %v1758 = vld [vmem:[#allocation2 + $0x57] sm:$0xff]
      %v1759 = vld [vmem:[#allocation2 + $0x5f] sm:$0xff]
      %v1760 = vld [vmem:[#allocation2 + $0x67] sm:$0xff]
      %v1761 = vld [vmem:[#allocation2 + $0x6f] sm:$0xff]
      %v1762 = vld [vmem:[#allocation2 + $0x77] sm:$0xff]
      %v1763 = vld [vmem:[#allocation2 + $0x7f] sm:$0xff]
      %v1764 = vld [vmem:[#allocation2 + $0x87] sm:$0xff]
      %v1765 = vld [vmem:[#allocation2 + $0x8f] sm:$0xff]
      %v1766 = vld [vmem:[#allocation2 + $0x97] sm:$0xff]
      %v1767 = vld [vmem:[#allocation2 + $0x9f] sm:$0xff]
      %v1768 = vld [vmem:[#allocation2 + $0xa7] sm:$0xff]
      %v1769 = vld [vmem:[#allocation2 + $0xaf] sm:$0xff]
      %v1770 = vld [vmem:[#allocation2 + $0xb7] sm:$0xff]
      %v1771 = vld [vmem:[#allocation2 + $0xbf] sm:$0xff]
      %v1772 = vld [vmem:[#allocation2 + $0xc7] sm:$0xff]
      %v1773 = vld [vmem:[#allocation2 + $0xcf] sm:$0xff]
      %v1774 = vld [vmem:[#allocation2 + $0xd7] sm:$0xff]
      %v1775 = vld [vmem:[#allocation2 + $0xdf] sm:$0xff]
      %v1776 = vld [vmem:[#allocation2 + $0xe7] sm:$0xff]
      %v1777 = vld [vmem:[#allocation2 + $0xef] sm:$0xff]
      %v1778 = vld [vmem:[#allocation2 + $0xf7] sm:$0xff]
      %v1779 = vld [vmem:[#allocation2 + $0xff] sm:$0xff]
      %v1780 = vpack.c.bf16 %v1748, %v1748
      %v1781 = vpack.c.bf16 %v1749, %v1749
      %v1782 = vpack.c.bf16 %v1750, %v1750
      %v1783 = vpack.c.bf16 %v1751, %v1751
      %v1784 = vpack.c.bf16 %v1752, %v1752
      %v1785 = vpack.c.bf16 %v1753, %v1753
      %v1786 = vpack.c.bf16 %v1754, %v1754
      %v1787 = vpack.c.bf16 %v1755, %v1755
      %v1788 = vpack.c.bf16 %v1756, %v1756
      %v1789 = vpack.c.bf16 %v1757, %v1757
      %v1790 = vpack.c.bf16 %v1758, %v1758
      %v1791 = vpack.c.bf16 %v1759, %v1759
      %v1792 = vpack.c.bf16 %v1760, %v1760
      %v1793 = vpack.c.bf16 %v1761, %v1761
      %v1794 = vpack.c.bf16 %v1762, %v1762
      %v1795 = vpack.c.bf16 %v1763, %v1763
      %v1796 = vpack.c.bf16 %v1764, %v1764
      %v1797 = vpack.c.bf16 %v1765, %v1765
      %v1798 = vpack.c.bf16 %v1766, %v1766
      %v1799 = vpack.c.bf16 %v1767, %v1767
      %v1800 = vpack.c.bf16 %v1768, %v1768
      %v1801 = vpack.c.bf16 %v1769, %v1769
      %v1802 = vpack.c.bf16 %v1770, %v1770
      %v1803 = vpack.c.bf16 %v1771, %v1771
      %v1804 = vpack.c.bf16 %v1772, %v1772
      %v1805 = vpack.c.bf16 %v1773, %v1773
      %v1806 = vpack.c.bf16 %v1774, %v1774
      %v1807 = vpack.c.bf16 %v1775, %v1775
      %v1808 = vpack.c.bf16 %v1776, %v1776
      %v1809 = vpack.c.bf16 %v1777, %v1777
      %v1810 = vpack.c.bf16 %v1778, %v1778
      %v1811 = vpack.c.bf16 %v1779, %v1779
      %vm1812 = vcmask 60416
      %1813 = vst.msk [vmem:[#allocation5] sm:$0xf] %vm1812, %v1780
      %1814 = vst.msk [vmem:[#allocation5 + $0x4] sm:$0xf] %vm1812, %v1781
      %1815 = vst.msk [vmem:[#allocation5 + $0x8] sm:$0xf] %vm1812, %v1782
      %1816 = vst.msk [vmem:[#allocation5 + $0xc] sm:$0xf] %vm1812, %v1783
      %1817 = vst.msk [vmem:[#allocation5 + $0x10] sm:$0xf] %vm1812, %v1784
      %1818 = vst.msk [vmem:[#allocation5 + $0x14] sm:$0xf] %vm1812, %v1785
      %1819 = vst.msk [vmem:[#allocation5 + $0x18] sm:$0xf] %vm1812, %v1786
      %1820 = vst.msk [vmem:[#allocation5 + $0x1c] sm:$0xf] %vm1812, %v1787
      %1821 = vst.msk [vmem:[#allocation5 + $0x20] sm:$0xf] %vm1812, %v1788
      %1822 = vst.msk [vmem:[#allocation5 + $0x24] sm:$0xf] %vm1812, %v1789
      %1823 = vst.msk [vmem:[#allocation5 + $0x28] sm:$0xf] %vm1812, %v1790
      %1824 = vst.msk [vmem:[#allocation5 + $0x2c] sm:$0xf] %vm1812, %v1791
      %1825 = vst.msk [vmem:[#allocation5 + $0x30] sm:$0xf] %vm1812, %v1792
      %1826 = vst.msk [vmem:[#allocation5 + $0x34] sm:$0xf] %vm1812, %v1793
      %1827 = vst.msk [vmem:[#allocation5 + $0x38] sm:$0xf] %vm1812, %v1794
      %1828 = vst.msk [vmem:[#allocation5 + $0x3c] sm:$0xf] %vm1812, %v1795
      %1829 = vst.msk [vmem:[#allocation5 + $0x40] sm:$0xf] %vm1812, %v1796
      %1830 = vst.msk [vmem:[#allocation5 + $0x44] sm:$0xf] %vm1812, %v1797
      %1831 = vst.msk [vmem:[#allocation5 + $0x48] sm:$0xf] %vm1812, %v1798
      %1832 = vst.msk [vmem:[#allocation5 + $0x4c] sm:$0xf] %vm1812, %v1799
      %1833 = vst.msk [vmem:[#allocation5 + $0x50] sm:$0xf] %vm1812, %v1800
      %1834 = vst.msk [vmem:[#allocation5 + $0x54] sm:$0xf] %vm1812, %v1801
      %1835 = vst.msk [vmem:[#allocation5 + $0x58] sm:$0xf] %vm1812, %v1802
      %1836 = vst.msk [vmem:[#allocation5 + $0x5c] sm:$0xf] %vm1812, %v1803
      %1837 = vst.msk [vmem:[#allocation5 + $0x60] sm:$0xf] %vm1812, %v1804
      %1838 = vst.msk [vmem:[#allocation5 + $0x64] sm:$0xf] %vm1812, %v1805
      %1839 = vst.msk [vmem:[#allocation5 + $0x68] sm:$0xf] %vm1812, %v1806
      %1840 = vst.msk [vmem:[#allocation5 + $0x6c] sm:$0xf] %vm1812, %v1807
      %1841 = vst.msk [vmem:[#allocation5 + $0x70] sm:$0xf] %vm1812, %v1808
      %1842 = vst.msk [vmem:[#allocation5 + $0x74] sm:$0xf] %vm1812, %v1809
      %1843 = vst.msk [vmem:[#allocation5 + $0x78] sm:$0xf] %vm1812, %v1810
      %1844 = vst.msk [vmem:[#allocation5 + $0x7c] sm:$0xf] %vm1812, %v1811
      %v1845 = vld [vmem:[#allocation3 + $0x8] sm:$0xff]
      %v1846 = vld [vmem:[#allocation3 + $0x10] sm:$0xff]
      %v1847 = vld [vmem:[#allocation3 + $0x18] sm:$0xff]
      %v1848 = vld [vmem:[#allocation3 + $0x20] sm:$0xff]
      %v1849 = vld [vmem:[#allocation3 + $0x28] sm:$0xff]
      %v1850 = vld [vmem:[#allocation3 + $0x30] sm:$0xff]
      %v1851 = vld [vmem:[#allocation3 + $0x38] sm:$0xff]
      %v1852 = vld [vmem:[#allocation3 + $0x40] sm:$0xff]
      %v1853 = vld [vmem:[#allocation3 + $0x48] sm:$0xff]
      %v1854 = vld [vmem:[#allocation3 + $0x50] sm:$0xff]
      %v1855 = vld [vmem:[#allocation3 + $0x58] sm:$0xff]
      %v1856 = vld [vmem:[#allocation3 + $0x60] sm:$0xff]
      %v1857 = vld [vmem:[#allocation3 + $0x68] sm:$0xff]
      %v1858 = vld [vmem:[#allocation3 + $0x70] sm:$0xff]
      %v1859 = vld [vmem:[#allocation3 + $0x78] sm:$0xff]
      %v1860 = vld [vmem:[#allocation3 + $0x80] sm:$0xff]
      %v1861 = vld [vmem:[#allocation3 + $0x88] sm:$0xff]
      %v1862 = vld [vmem:[#allocation3 + $0x90] sm:$0xff]
      %v1863 = vld [vmem:[#allocation3 + $0x98] sm:$0xff]
      %v1864 = vld [vmem:[#allocation3 + $0xa0] sm:$0xff]
      %v1865 = vld [vmem:[#allocation3 + $0xa8] sm:$0xff]
      %v1866 = vld [vmem:[#allocation3 + $0xb0] sm:$0xff]
      %v1867 = vld [vmem:[#allocation3 + $0xb8] sm:$0xff]
      %v1868 = vld [vmem:[#allocation3 + $0xc0] sm:$0xff]
      %v1869 = vld [vmem:[#allocation3 + $0xc8] sm:$0xff]
      %v1870 = vld [vmem:[#allocation3 + $0xd0] sm:$0xff]
      %v1871 = vld [vmem:[#allocation3 + $0xd8] sm:$0xff]
      %v1872 = vld [vmem:[#allocation3 + $0xe0] sm:$0xff]
      %v1873 = vld [vmem:[#allocation3 + $0xe8] sm:$0xff]
      %v1874 = vld [vmem:[#allocation3 + $0xf0] sm:$0xff]
      %v1875 = vld [vmem:[#allocation3 + $0xf8] sm:$0xff]
      %v1876 = vld [vmem:[#allocation3 + $0x100] sm:$0xff]
      %v1877 = vpack.c.bf16 %v1845, %v1845
      %v1878 = vpack.c.bf16 %v1846, %v1846
      %v1879 = vpack.c.bf16 %v1847, %v1847
      %v1880 = vpack.c.bf16 %v1848, %v1848
      %v1881 = vpack.c.bf16 %v1849, %v1849
      %v1882 = vpack.c.bf16 %v1850, %v1850
      %v1883 = vpack.c.bf16 %v1851, %v1851
      %v1884 = vpack.c.bf16 %v1852, %v1852
      %v1885 = vpack.c.bf16 %v1853, %v1853
      %v1886 = vpack.c.bf16 %v1854, %v1854
      %v1887 = vpack.c.bf16 %v1855, %v1855
      %v1888 = vpack.c.bf16 %v1856, %v1856
      %v1889 = vpack.c.bf16 %v1857, %v1857
      %v1890 = vpack.c.bf16 %v1858, %v1858
      %v1891 = vpack.c.bf16 %v1859, %v1859
      %v1892 = vpack.c.bf16 %v1860, %v1860
      %v1893 = vpack.c.bf16 %v1861, %v1861
      %v1894 = vpack.c.bf16 %v1862, %v1862
      %v1895 = vpack.c.bf16 %v1863, %v1863
      %v1896 = vpack.c.bf16 %v1864, %v1864
      %v1897 = vpack.c.bf16 %v1865, %v1865
      %v1898 = vpack.c.bf16 %v1866, %v1866
      %v1899 = vpack.c.bf16 %v1867, %v1867
      %v1900 = vpack.c.bf16 %v1868, %v1868
      %v1901 = vpack.c.bf16 %v1869, %v1869
      %v1902 = vpack.c.bf16 %v1870, %v1870
      %v1903 = vpack.c.bf16 %v1871, %v1871
      %v1904 = vpack.c.bf16 %v1872, %v1872
      %v1905 = vpack.c.bf16 %v1873, %v1873
      %v1906 = vpack.c.bf16 %v1874, %v1874
      %v1907 = vpack.c.bf16 %v1875, %v1875
      %v1908 = vpack.c.bf16 %v1876, %v1876
      %1941 = vrot.lane.b32.xlu0 %v1877, 8
      %v1942 = vpop.permute.xlu0 %1941
      %1943 = vrot.lane.b32.xlu0 %v1878, 8
      %v1944 = vpop.permute.xlu0 %1943
      %1945 = vrot.lane.b32.xlu0 %v1879, 8
      %v1946 = vpop.permute.xlu0 %1945
      %1947 = vrot.lane.b32.xlu0 %v1880, 8
      %v1948 = vpop.permute.xlu0 %1947
      %1949 = vrot.lane.b32.xlu0 %v1881, 8
      %v1950 = vpop.permute.xlu0 %1949
      %1951 = vrot.lane.b32.xlu0 %v1882, 8
      %v1952 = vpop.permute.xlu0 %1951
      %1953 = vrot.lane.b32.xlu0 %v1883, 8
      %v1954 = vpop.permute.xlu0 %1953
      %1955 = vrot.lane.b32.xlu0 %v1884, 8
      %v1956 = vpop.permute.xlu0 %1955
      %1957 = vrot.lane.b32.xlu0 %v1885, 8
      %v1958 = vpop.permute.xlu0 %1957
      %1959 = vrot.lane.b32.xlu0 %v1886, 8
      %v1960 = vpop.permute.xlu0 %1959
      %1961 = vrot.lane.b32.xlu0 %v1887, 8
      %v1962 = vpop.permute.xlu0 %1961
      %1963 = vrot.lane.b32.xlu0 %v1888, 8
      %v1964 = vpop.permute.xlu0 %1963
      %1965 = vrot.lane.b32.xlu0 %v1889, 8
      %v1966 = vpop.permute.xlu0 %1965
      %1967 = vrot.lane.b32.xlu0 %v1890, 8
      %v1968 = vpop.permute.xlu0 %1967
      %1969 = vrot.lane.b32.xlu0 %v1891, 8
      %v1970 = vpop.permute.xlu0 %1969
      %1971 = vrot.lane.b32.xlu0 %v1892, 8
      %v1972 = vpop.permute.xlu0 %1971
      %1973 = vrot.lane.b32.xlu0 %v1893, 8
      %v1974 = vpop.permute.xlu0 %1973
      %1975 = vrot.lane.b32.xlu0 %v1894, 8
      %v1976 = vpop.permute.xlu0 %1975
      %1977 = vrot.lane.b32.xlu0 %v1895, 8
      %v1978 = vpop.permute.xlu0 %1977
      %1979 = vrot.lane.b32.xlu0 %v1896, 8
      %v1980 = vpop.permute.xlu0 %1979
      %1981 = vrot.lane.b32.xlu0 %v1897, 8
      %v1982 = vpop.permute.xlu0 %1981
      %1983 = vrot.lane.b32.xlu0 %v1898, 8
      %v1984 = vpop.permute.xlu0 %1983
      %1985 = vrot.lane.b32.xlu0 %v1899, 8
      %v1986 = vpop.permute.xlu0 %1985
      %1987 = vrot.lane.b32.xlu0 %v1900, 8
      %v1988 = vpop.permute.xlu0 %1987
      %1989 = vrot.lane.b32.xlu0 %v1901, 8
      %v1990 = vpop.permute.xlu0 %1989
      %1991 = vrot.lane.b32.xlu0 %v1902, 8
      %v1992 = vpop.permute.xlu0 %1991
      %1993 = vrot.lane.b32.xlu0 %v1903, 8
      %v1994 = vpop.permute.xlu0 %1993
      %1995 = vrot.lane.b32.xlu0 %v1904, 8
      %v1996 = vpop.permute.xlu0 %1995
      %1997 = vrot.lane.b32.xlu0 %v1905, 8
      %v1998 = vpop.permute.xlu0 %1997
      %1999 = vrot.lane.b32.xlu0 %v1906, 8
      %v2000 = vpop.permute.xlu0 %1999
      %2001 = vrot.lane.b32.xlu0 %v1907, 8
      %v2002 = vpop.permute.xlu0 %2001
      %2003 = vrot.lane.b32.xlu0 %v1908, 8
      %v2004 = vpop.permute.xlu0 %2003
      %vm2037 = vcmask 126016
      %2038 = vst.msk [vmem:[#allocation5] sm:$0xf] %vm2037, %v1942
      %2039 = vst.msk [vmem:[#allocation5 + $0x4] sm:$0xf] %vm2037, %v1944
      %2040 = vst.msk [vmem:[#allocation5 + $0x8] sm:$0xf] %vm2037, %v1946
      %2041 = vst.msk [vmem:[#allocation5 + $0xc] sm:$0xf] %vm2037, %v1948
      %2042 = vst.msk [vmem:[#allocation5 + $0x10] sm:$0xf] %vm2037, %v1950
      %2043 = vst.msk [vmem:[#allocation5 + $0x14] sm:$0xf] %vm2037, %v1952
      %2044 = vst.msk [vmem:[#allocation5 + $0x18] sm:$0xf] %vm2037, %v1954
      %2045 = vst.msk [vmem:[#allocation5 + $0x1c] sm:$0xf] %vm2037, %v1956
      %2046 = vst.msk [vmem:[#allocation5 + $0x20] sm:$0xf] %vm2037, %v1958
      %2047 = vst.msk [vmem:[#allocation5 + $0x24] sm:$0xf] %vm2037, %v1960
      %2048 = vst.msk [vmem:[#allocation5 + $0x28] sm:$0xf] %vm2037, %v1962
      %2049 = vst.msk [vmem:[#allocation5 + $0x2c] sm:$0xf] %vm2037, %v1964
      %2050 = vst.msk [vmem:[#allocation5 + $0x30] sm:$0xf] %vm2037, %v1966
      %2051 = vst.msk [vmem:[#allocation5 + $0x34] sm:$0xf] %vm2037, %v1968
      %2052 = vst.msk [vmem:[#allocation5 + $0x38] sm:$0xf] %vm2037, %v1970
      %2053 = vst.msk [vmem:[#allocation5 + $0x3c] sm:$0xf] %vm2037, %v1972
      %2054 = vst.msk [vmem:[#allocation5 + $0x40] sm:$0xf] %vm2037, %v1974
      %2055 = vst.msk [vmem:[#allocation5 + $0x44] sm:$0xf] %vm2037, %v1976
      %2056 = vst.msk [vmem:[#allocation5 + $0x48] sm:$0xf] %vm2037, %v1978
      %2057 = vst.msk [vmem:[#allocation5 + $0x4c] sm:$0xf] %vm2037, %v1980
      %2058 = vst.msk [vmem:[#allocation5 + $0x50] sm:$0xf] %vm2037, %v1982
      %2059 = vst.msk [vmem:[#allocation5 + $0x54] sm:$0xf] %vm2037, %v1984
      %2060 = vst.msk [vmem:[#allocation5 + $0x58] sm:$0xf] %vm2037, %v1986
      %2061 = vst.msk [vmem:[#allocation5 + $0x5c] sm:$0xf] %vm2037, %v1988
      %2062 = vst.msk [vmem:[#allocation5 + $0x60] sm:$0xf] %vm2037, %v1990
      %2063 = vst.msk [vmem:[#allocation5 + $0x64] sm:$0xf] %vm2037, %v1992
      %2064 = vst.msk [vmem:[#allocation5 + $0x68] sm:$0xf] %vm2037, %v1994
      %2065 = vst.msk [vmem:[#allocation5 + $0x6c] sm:$0xf] %vm2037, %v1996
      %2066 = vst.msk [vmem:[#allocation5 + $0x70] sm:$0xf] %vm2037, %v1998
      %2067 = vst.msk [vmem:[#allocation5 + $0x74] sm:$0xf] %vm2037, %v2000
      %2068 = vst.msk [vmem:[#allocation5 + $0x78] sm:$0xf] %vm2037, %v2002
      %2069 = vst.msk [vmem:[#allocation5 + $0x7c] sm:$0xf] %vm2037, %v2004
      %v2070 = vld [vmem:[#allocation4 + $0x9] sm:$0xff]
      %v2071 = vld [vmem:[#allocation4 + $0x11] sm:$0xff]
      %v2072 = vld [vmem:[#allocation4 + $0x19] sm:$0xff]
      %v2073 = vld [vmem:[#allocation4 + $0x21] sm:$0xff]
      %v2074 = vld [vmem:[#allocation4 + $0x29] sm:$0xff]
      %v2075 = vld [vmem:[#allocation4 + $0x31] sm:$0xff]
      %v2076 = vld [vmem:[#allocation4 + $0x39] sm:$0xff]
      %v2077 = vld [vmem:[#allocation4 + $0x41] sm:$0xff]
      %v2078 = vld [vmem:[#allocation4 + $0x49] sm:$0xff]
      %v2079 = vld [vmem:[#allocation4 + $0x51] sm:$0xff]
      %v2080 = vld [vmem:[#allocation4 + $0x59] sm:$0xff]
      %v2081 = vld [vmem:[#allocation4 + $0x61] sm:$0xff]
      %v2082 = vld [vmem:[#allocation4 + $0x69] sm:$0xff]
      %v2083 = vld [vmem:[#allocation4 + $0x71] sm:$0xff]
      %v2084 = vld [vmem:[#allocation4 + $0x79] sm:$0xff]
      %v2085 = vld [vmem:[#allocation4 + $0x81] sm:$0xff]
      %v2086 = vld [vmem:[#allocation4 + $0x89] sm:$0xff]
      %v2087 = vld [vmem:[#allocation4 + $0x91] sm:$0xff]
      %v2088 = vld [vmem:[#allocation4 + $0x99] sm:$0xff]
      %v2089 = vld [vmem:[#allocation4 + $0xa1] sm:$0xff]
      %v2090 = vld [vmem:[#allocation4 + $0xa9] sm:$0xff]
      %v2091 = vld [vmem:[#allocation4 + $0xb1] sm:$0xff]
      %v2092 = vld [vmem:[#allocation4 + $0xb9] sm:$0xff]
      %v2093 = vld [vmem:[#allocation4 + $0xc1] sm:$0xff]
      %v2094 = vld [vmem:[#allocation4 + $0xc9] sm:$0xff]
      %v2095 = vld [vmem:[#allocation4 + $0xd1] sm:$0xff]
      %v2096 = vld [vmem:[#allocation4 + $0xd9] sm:$0xff]
      %v2097 = vld [vmem:[#allocation4 + $0xe1] sm:$0xff]
      %v2098 = vld [vmem:[#allocation4 + $0xe9] sm:$0xff]
      %v2099 = vld [vmem:[#allocation4 + $0xf1] sm:$0xff]
      %v2100 = vld [vmem:[#allocation4 + $0xf9] sm:$0xff]
      %v2101 = vld [vmem:[#allocation4 + $0x101] sm:$0xff]
      %v2102 = vpack.c.bf16 %v2070, %v2070
      %v2103 = vpack.c.bf16 %v2071, %v2071
      %v2104 = vpack.c.bf16 %v2072, %v2072
      %v2105 = vpack.c.bf16 %v2073, %v2073
      %v2106 = vpack.c.bf16 %v2074, %v2074
      %v2107 = vpack.c.bf16 %v2075, %v2075
      %v2108 = vpack.c.bf16 %v2076, %v2076
      %v2109 = vpack.c.bf16 %v2077, %v2077
      %v2110 = vpack.c.bf16 %v2078, %v2078
      %v2111 = vpack.c.bf16 %v2079, %v2079
      %v2112 = vpack.c.bf16 %v2080, %v2080
      %v2113 = vpack.c.bf16 %v2081, %v2081
      %v2114 = vpack.c.bf16 %v2082, %v2082
      %v2115 = vpack.c.bf16 %v2083, %v2083
      %v2116 = vpack.c.bf16 %v2084, %v2084
      %v2117 = vpack.c.bf16 %v2085, %v2085
      %v2118 = vpack.c.bf16 %v2086, %v2086
      %v2119 = vpack.c.bf16 %v2087, %v2087
      %v2120 = vpack.c.bf16 %v2088, %v2088
      %v2121 = vpack.c.bf16 %v2089, %v2089
      %v2122 = vpack.c.bf16 %v2090, %v2090
      %v2123 = vpack.c.bf16 %v2091, %v2091
      %v2124 = vpack.c.bf16 %v2092, %v2092
      %v2125 = vpack.c.bf16 %v2093, %v2093
      %v2126 = vpack.c.bf16 %v2094, %v2094
      %v2127 = vpack.c.bf16 %v2095, %v2095
      %v2128 = vpack.c.bf16 %v2096, %v2096
      %v2129 = vpack.c.bf16 %v2097, %v2097
      %v2130 = vpack.c.bf16 %v2098, %v2098
      %v2131 = vpack.c.bf16 %v2099, %v2099
      %v2132 = vpack.c.bf16 %v2100, %v2100
      %v2133 = vpack.c.bf16 %v2101, %v2101
      %2166 = vrot.lane.b32.xlu0 %v2102, 16
      %v2167 = vpop.permute.xlu0 %2166
      %2168 = vrot.lane.b32.xlu0 %v2103, 16
      %v2169 = vpop.permute.xlu0 %2168
      %2170 = vrot.lane.b32.xlu0 %v2104, 16
      %v2171 = vpop.permute.xlu0 %2170
      %2172 = vrot.lane.b32.xlu0 %v2105, 16
      %v2173 = vpop.permute.xlu0 %2172
      %2174 = vrot.lane.b32.xlu0 %v2106, 16
      %v2175 = vpop.permute.xlu0 %2174
      %2176 = vrot.lane.b32.xlu0 %v2107, 16
      %v2177 = vpop.permute.xlu0 %2176
      %2178 = vrot.lane.b32.xlu0 %v2108, 16
      %v2179 = vpop.permute.xlu0 %2178
      %2180 = vrot.lane.b32.xlu0 %v2109, 16
      %v2181 = vpop.permute.xlu0 %2180
      %2182 = vrot.lane.b32.xlu0 %v2110, 16
      %v2183 = vpop.permute.xlu0 %2182
      %2184 = vrot.lane.b32.xlu0 %v2111, 16
      %v2185 = vpop.permute.xlu0 %2184
      %2186 = vrot.lane.b32.xlu0 %v2112, 16
      %v2187 = vpop.permute.xlu0 %2186
      %2188 = vrot.lane.b32.xlu0 %v2113, 16
      %v2189 = vpop.permute.xlu0 %2188
      %2190 = vrot.lane.b32.xlu0 %v2114, 16
      %v2191 = vpop.permute.xlu0 %2190
      %2192 = vrot.lane.b32.xlu0 %v2115, 16
      %v2193 = vpop.permute.xlu0 %2192
      %2194 = vrot.lane.b32.xlu0 %v2116, 16
      %v2195 = vpop.permute.xlu0 %2194
      %2196 = vrot.lane.b32.xlu0 %v2117, 16
      %v2197 = vpop.permute.xlu0 %2196
      %2198 = vrot.lane.b32.xlu0 %v2118, 16
      %v2199 = vpop.permute.xlu0 %2198
      %2200 = vrot.lane.b32.xlu0 %v2119, 16
      %v2201 = vpop.permute.xlu0 %2200
      %2202 = vrot.lane.b32.xlu0 %v2120, 16
      %v2203 = vpop.permute.xlu0 %2202
      %2204 = vrot.lane.b32.xlu0 %v2121, 16
      %v2205 = vpop.permute.xlu0 %2204
      %2206 = vrot.lane.b32.xlu0 %v2122, 16
      %v2207 = vpop.permute.xlu0 %2206
      %2208 = vrot.lane.b32.xlu0 %v2123, 16
      %v2209 = vpop.permute.xlu0 %2208
      %2210 = vrot.lane.b32.xlu0 %v2124, 16
      %v2211 = vpop.permute.xlu0 %2210
      %2212 = vrot.lane.b32.xlu0 %v2125, 16
      %v2213 = vpop.permute.xlu0 %2212
      %2214 = vrot.lane.b32.xlu0 %v2126, 16
      %v2215 = vpop.permute.xlu0 %2214
      %2216 = vrot.lane.b32.xlu0 %v2127, 16
      %v2217 = vpop.permute.xlu0 %2216
      %2218 = vrot.lane.b32.xlu0 %v2128, 16
      %v2219 = vpop.permute.xlu0 %2218
      %2220 = vrot.lane.b32.xlu0 %v2129, 16
      %v2221 = vpop.permute.xlu0 %2220
      %2222 = vrot.lane.b32.xlu0 %v2130, 16
      %v2223 = vpop.permute.xlu0 %2222
      %2224 = vrot.lane.b32.xlu0 %v2131, 16
      %v2225 = vpop.permute.xlu0 %2224
      %2226 = vrot.lane.b32.xlu0 %v2132, 16
      %v2227 = vpop.permute.xlu0 %2226
      %2228 = vrot.lane.b32.xlu0 %v2133, 16
      %v2229 = vpop.permute.xlu0 %2228
      %vm2262 = vcmask 191616
      %2263 = vst.msk [vmem:[#allocation5] sm:$0xf] %vm2262, %v2167
      %2264 = vst.msk [vmem:[#allocation5 + $0x4] sm:$0xf] %vm2262, %v2169
      %2265 = vst.msk [vmem:[#allocation5 + $0x8] sm:$0xf] %vm2262, %v2171
      %2266 = vst.msk [vmem:[#allocation5 + $0xc] sm:$0xf] %vm2262, %v2173
      %2267 = vst.msk [vmem:[#allocation5 + $0x10] sm:$0xf] %vm2262, %v2175
      %2268 = vst.msk [vmem:[#allocation5 + $0x14] sm:$0xf] %vm2262, %v2177
      %2269 = vst.msk [vmem:[#allocation5 + $0x18] sm:$0xf] %vm2262, %v2179
      %2270 = vst.msk [vmem:[#allocation5 + $0x1c] sm:$0xf] %vm2262, %v2181
      %2271 = vst.msk [vmem:[#allocation5 + $0x20] sm:$0xf] %vm2262, %v2183
      %2272 = vst.msk [vmem:[#allocation5 + $0x24] sm:$0xf] %vm2262, %v2185
      %2273 = vst.msk [vmem:[#allocation5 + $0x28] sm:$0xf] %vm2262, %v2187
      %2274 = vst.msk [vmem:[#allocation5 + $0x2c] sm:$0xf] %vm2262, %v2189
      %2275 = vst.msk [vmem:[#allocation5 + $0x30] sm:$0xf] %vm2262, %v2191
      %2276 = vst.msk [vmem:[#allocation5 + $0x34] sm:$0xf] %vm2262, %v2193
      %2277 = vst.msk [vmem:[#allocation5 + $0x38] sm:$0xf] %vm2262, %v2195
      %2278 = vst.msk [vmem:[#allocation5 + $0x3c] sm:$0xf] %vm2262, %v2197
      %2279 = vst.msk [vmem:[#allocation5 + $0x40] sm:$0xf] %vm2262, %v2199
      %2280 = vst.msk [vmem:[#allocation5 + $0x44] sm:$0xf] %vm2262, %v2201
      %2281 = vst.msk [vmem:[#allocation5 + $0x48] sm:$0xf] %vm2262, %v2203
      %2282 = vst.msk [vmem:[#allocation5 + $0x4c] sm:$0xf] %vm2262, %v2205
      %2283 = vst.msk [vmem:[#allocation5 + $0x50] sm:$0xf] %vm2262, %v2207
      %2284 = vst.msk [vmem:[#allocation5 + $0x54] sm:$0xf] %vm2262, %v2209
      %2285 = vst.msk [vmem:[#allocation5 + $0x58] sm:$0xf] %vm2262, %v2211
      %2286 = vst.msk [vmem:[#allocation5 + $0x5c] sm:$0xf] %vm2262, %v2213
      %2287 = vst.msk [vmem:[#allocation5 + $0x60] sm:$0xf] %vm2262, %v2215
      %2288 = vst.msk [vmem:[#allocation5 + $0x64] sm:$0xf] %vm2262, %v2217
      %2289 = vst.msk [vmem:[#allocation5 + $0x68] sm:$0xf] %vm2262, %v2219
      %2290 = vst.msk [vmem:[#allocation5 + $0x6c] sm:$0xf] %vm2262, %v2221
      %2291 = vst.msk [vmem:[#allocation5 + $0x70] sm:$0xf] %vm2262, %v2223
      %2292 = vst.msk [vmem:[#allocation5 + $0x74] sm:$0xf] %vm2262, %v2225
      %2293 = vst.msk [vmem:[#allocation5 + $0x78] sm:$0xf] %vm2262, %v2227
      %2294 = vst.msk [vmem:[#allocation5 + $0x7c] sm:$0xf] %vm2262, %v2229
      %v2295 = vld [vmem:[#allocation2 + $0x17] sm:$0xff]
      %v2296 = vld [vmem:[#allocation2 + $0x1f] sm:$0xff]
      %v2297 = vld [vmem:[#allocation2 + $0x27] sm:$0xff]
      %v2298 = vld [vmem:[#allocation2 + $0x2f] sm:$0xff]
      %v2299 = vld [vmem:[#allocation2 + $0x37] sm:$0xff]
      %v2300 = vld [vmem:[#allocation2 + $0x3f] sm:$0xff]
      %v2301 = vld [vmem:[#allocation2 + $0x47] sm:$0xff]
      %v2302 = vld [vmem:[#allocation2 + $0x4f] sm:$0xff]
      %v2303 = vld [vmem:[#allocation2 + $0x57] sm:$0xff]
      %v2304 = vld [vmem:[#allocation2 + $0x5f] sm:$0xff]
      %v2305 = vld [vmem:[#allocation2 + $0x67] sm:$0xff]
      %v2306 = vld [vmem:[#allocation2 + $0x6f] sm:$0xff]
      %v2307 = vld [vmem:[#allocation2 + $0x77] sm:$0xff]
      %v2308 = vld [vmem:[#allocation2 + $0x7f] sm:$0xff]
      %v2309 = vld [vmem:[#allocation2 + $0x87] sm:$0xff]
      %v2310 = vld [vmem:[#allocation2 + $0x8f] sm:$0xff]
      %v2311 = vld [vmem:[#allocation2 + $0x97] sm:$0xff]
      %v2312 = vld [vmem:[#allocation2 + $0x9f] sm:$0xff]
      %v2313 = vld [vmem:[#allocation2 + $0xa7] sm:$0xff]
      %v2314 = vld [vmem:[#allocation2 + $0xaf] sm:$0xff]
      %v2315 = vld [vmem:[#allocation2 + $0xb7] sm:$0xff]
      %v2316 = vld [vmem:[#allocation2 + $0xbf] sm:$0xff]
      %v2317 = vld [vmem:[#allocation2 + $0xc7] sm:$0xff]
      %v2318 = vld [vmem:[#allocation2 + $0xcf] sm:$0xff]
      %v2319 = vld [vmem:[#allocation2 + $0xd7] sm:$0xff]
      %v2320 = vld [vmem:[#allocation2 + $0xdf] sm:$0xff]
      %v2321 = vld [vmem:[#allocation2 + $0xe7] sm:$0xff]
      %v2322 = vld [vmem:[#allocation2 + $0xef] sm:$0xff]
      %v2323 = vld [vmem:[#allocation2 + $0xf7] sm:$0xff]
      %v2324 = vld [vmem:[#allocation2 + $0xff] sm:$0xff]
      %v2325 = vld [vmem:[#allocation2 + $0x107] sm:$0xff]
      %v2326 = vld [vmem:[#allocation2 + $0x10f] sm:$0xff]
      %v2327 = vpack.c.bf16 %v2295, %v2295
      %v2328 = vpack.c.bf16 %v2296, %v2296
      %v2329 = vpack.c.bf16 %v2297, %v2297
      %v2330 = vpack.c.bf16 %v2298, %v2298
      %v2331 = vpack.c.bf16 %v2299, %v2299
      %v2332 = vpack.c.bf16 %v2300, %v2300
      %v2333 = vpack.c.bf16 %v2301, %v2301
      %v2334 = vpack.c.bf16 %v2302, %v2302
      %v2335 = vpack.c.bf16 %v2303, %v2303
      %v2336 = vpack.c.bf16 %v2304, %v2304
      %v2337 = vpack.c.bf16 %v2305, %v2305
      %v2338 = vpack.c.bf16 %v2306, %v2306
      %v2339 = vpack.c.bf16 %v2307, %v2307
      %v2340 = vpack.c.bf16 %v2308, %v2308
      %v2341 = vpack.c.bf16 %v2309, %v2309
      %v2342 = vpack.c.bf16 %v2310, %v2310
      %v2343 = vpack.c.bf16 %v2311, %v2311
      %v2344 = vpack.c.bf16 %v2312, %v2312
      %v2345 = vpack.c.bf16 %v2313, %v2313
      %v2346 = vpack.c.bf16 %v2314, %v2314
      %v2347 = vpack.c.bf16 %v2315, %v2315
      %v2348 = vpack.c.bf16 %v2316, %v2316
      %v2349 = vpack.c.bf16 %v2317, %v2317
      %v2350 = vpack.c.bf16 %v2318, %v2318
      %v2351 = vpack.c.bf16 %v2319, %v2319
      %v2352 = vpack.c.bf16 %v2320, %v2320
      %v2353 = vpack.c.bf16 %v2321, %v2321
      %v2354 = vpack.c.bf16 %v2322, %v2322
      %v2355 = vpack.c.bf16 %v2323, %v2323
      %v2356 = vpack.c.bf16 %v2324, %v2324
      %v2357 = vpack.c.bf16 %v2325, %v2325
      %v2358 = vpack.c.bf16 %v2326, %v2326
      %2391 = vrot.lane.b32.xlu0 %v2327, 24
      %v2392 = vpop.permute.xlu0 %2391
      %2393 = vrot.lane.b32.xlu0 %v2328, 24
      %v2394 = vpop.permute.xlu0 %2393
      %2395 = vrot.lane.b32.xlu0 %v2329, 24
      %v2396 = vpop.permute.xlu0 %2395
      %2397 = vrot.lane.b32.xlu0 %v2330, 24
      %v2398 = vpop.permute.xlu0 %2397
      %2399 = vrot.lane.b32.xlu0 %v2331, 24
      %v2400 = vpop.permute.xlu0 %2399
      %2401 = vrot.lane.b32.xlu0 %v2332, 24
      %v2402 = vpop.permute.xlu0 %2401
      %2403 = vrot.lane.b32.xlu0 %v2333, 24
      %v2404 = vpop.permute.xlu0 %2403
      %2405 = vrot.lane.b32.xlu0 %v2334, 24
      %v2406 = vpop.permute.xlu0 %2405
      %2407 = vrot.lane.b32.xlu0 %v2335, 24
      %v2408 = vpop.permute.xlu0 %2407
      %2409 = vrot.lane.b32.xlu0 %v2336, 24
      %v2410 = vpop.permute.xlu0 %2409
      %2411 = vrot.lane.b32.xlu0 %v2337, 24
      %v2412 = vpop.permute.xlu0 %2411
      %2413 = vrot.lane.b32.xlu0 %v2338, 24
      %v2414 = vpop.permute.xlu0 %2413
      %2415 = vrot.lane.b32.xlu0 %v2339, 24
      %v2416 = vpop.permute.xlu0 %2415
      %2417 = vrot.lane.b32.xlu0 %v2340, 24
      %v2418 = vpop.permute.xlu0 %2417
      %2419 = vrot.lane.b32.xlu0 %v2341, 24
      %v2420 = vpop.permute.xlu0 %2419
      %2421 = vrot.lane.b32.xlu0 %v2342, 24
      %v2422 = vpop.permute.xlu0 %2421
      %2423 = vrot.lane.b32.xlu0 %v2343, 24
      %v2424 = vpop.permute.xlu0 %2423
      %2425 = vrot.lane.b32.xlu0 %v2344, 24
      %v2426 = vpop.permute.xlu0 %2425
      %2427 = vrot.lane.b32.xlu0 %v2345, 24
      %v2428 = vpop.permute.xlu0 %2427
      %2429 = vrot.lane.b32.xlu0 %v2346, 24
      %v2430 = vpop.permute.xlu0 %2429
      %2431 = vrot.lane.b32.xlu0 %v2347, 24
      %v2432 = vpop.permute.xlu0 %2431
      %2433 = vrot.lane.b32.xlu0 %v2348, 24
      %v2434 = vpop.permute.xlu0 %2433
      %2435 = vrot.lane.b32.xlu0 %v2349, 24
      %v2436 = vpop.permute.xlu0 %2435
      %2437 = vrot.lane.b32.xlu0 %v2350, 24
      %v2438 = vpop.permute.xlu0 %2437
      %2439 = vrot.lane.b32.xlu0 %v2351, 24
      %v2440 = vpop.permute.xlu0 %2439
      %2441 = vrot.lane.b32.xlu0 %v2352, 24
      %v2442 = vpop.permute.xlu0 %2441
      %2443 = vrot.lane.b32.xlu0 %v2353, 24
      %v2444 = vpop.permute.xlu0 %2443
      %2445 = vrot.lane.b32.xlu0 %v2354, 24
      %v2446 = vpop.permute.xlu0 %2445
      %2447 = vrot.lane.b32.xlu0 %v2355, 24
      %v2448 = vpop.permute.xlu0 %2447
      %2449 = vrot.lane.b32.xlu0 %v2356, 24
      %v2450 = vpop.permute.xlu0 %2449
      %2451 = vrot.lane.b32.xlu0 %v2357, 24
      %v2452 = vpop.permute.xlu0 %2451
      %2453 = vrot.lane.b32.xlu0 %v2358, 24
      %v2454 = vpop.permute.xlu0 %2453
      %vm2487 = vcmask 257216
      %2488 = vst.msk [vmem:[#allocation5] sm:$0xf] %vm2487, %v2392
      %2489 = vst.msk [vmem:[#allocation5 + $0x4] sm:$0xf] %vm2487, %v2394
      %2490 = vst.msk [vmem:[#allocation5 + $0x8] sm:$0xf] %vm2487, %v2396
      %2491 = vst.msk [vmem:[#allocation5 + $0xc] sm:$0xf] %vm2487, %v2398
      %2492 = vst.msk [vmem:[#allocation5 + $0x10] sm:$0xf] %vm2487, %v2400
      %2493 = vst.msk [vmem:[#allocation5 + $0x14] sm:$0xf] %vm2487, %v2402
      %2494 = vst.msk [vmem:[#allocation5 + $0x18] sm:$0xf] %vm2487, %v2404
      %2495 = vst.msk [vmem:[#allocation5 + $0x1c] sm:$0xf] %vm2487, %v2406
      %2496 = vst.msk [vmem:[#allocation5 + $0x20] sm:$0xf] %vm2487, %v2408
      %2497 = vst.msk [vmem:[#allocation5 + $0x24] sm:$0xf] %vm2487, %v2410
      %2498 = vst.msk [vmem:[#allocation5 + $0x28] sm:$0xf] %vm2487, %v2412
      %2499 = vst.msk [vmem:[#allocation5 + $0x2c] sm:$0xf] %vm2487, %v2414
      %2500 = vst.msk [vmem:[#allocation5 + $0x30] sm:$0xf] %vm2487, %v2416
      %2501 = vst.msk [vmem:[#allocation5 + $0x34] sm:$0xf] %vm2487, %v2418
      %2502 = vst.msk [vmem:[#allocation5 + $0x38] sm:$0xf] %vm2487, %v2420
      %2503 = vst.msk [vmem:[#allocation5 + $0x3c] sm:$0xf] %vm2487, %v2422
      %2504 = vst.msk [vmem:[#allocation5 + $0x40] sm:$0xf] %vm2487, %v2424
      %2505 = vst.msk [vmem:[#allocation5 + $0x44] sm:$0xf] %vm2487, %v2426
      %2506 = vst.msk [vmem:[#allocation5 + $0x48] sm:$0xf] %vm2487, %v2428
      %2507 = vst.msk [vmem:[#allocation5 + $0x4c] sm:$0xf] %vm2487, %v2430
      %2508 = vst.msk [vmem:[#allocation5 + $0x50] sm:$0xf] %vm2487, %v2432
      %2509 = vst.msk [vmem:[#allocation5 + $0x54] sm:$0xf] %vm2487, %v2434
      %2510 = vst.msk [vmem:[#allocation5 + $0x58] sm:$0xf] %vm2487, %v2436
      %2511 = vst.msk [vmem:[#allocation5 + $0x5c] sm:$0xf] %vm2487, %v2438
      %2512 = vst.msk [vmem:[#allocation5 + $0x60] sm:$0xf] %vm2487, %v2440
      %2513 = vst.msk [vmem:[#allocation5 + $0x64] sm:$0xf] %vm2487, %v2442
      %2514 = vst.msk [vmem:[#allocation5 + $0x68] sm:$0xf] %vm2487, %v2444
      %2515 = vst.msk [vmem:[#allocation5 + $0x6c] sm:$0xf] %vm2487, %v2446
      %2516 = vst.msk [vmem:[#allocation5 + $0x70] sm:$0xf] %vm2487, %v2448
      %2517 = vst.msk [vmem:[#allocation5 + $0x74] sm:$0xf] %vm2487, %v2450
      %2518 = vst.msk [vmem:[#allocation5 + $0x78] sm:$0xf] %vm2487, %v2452
      %2519 = vst.msk [vmem:[#allocation5 + $0x7c] sm:$0xf] %vm2487, %v2454
      %v2520 = vld [vmem:[#allocation3 + $0x18] sm:$0xff]
      %v2521 = vld [vmem:[#allocation3 + $0x20] sm:$0xff]
      %v2522 = vld [vmem:[#allocation3 + $0x28] sm:$0xff]
      %v2523 = vld [vmem:[#allocation3 + $0x30] sm:$0xff]
      %v2524 = vld [vmem:[#allocation3 + $0x38] sm:$0xff]
      %v2525 = vld [vmem:[#allocation3 + $0x40] sm:$0xff]
      %v2526 = vld [vmem:[#allocation3 + $0x48] sm:$0xff]
      %v2527 = vld [vmem:[#allocation3 + $0x50] sm:$0xff]
      %v2528 = vld [vmem:[#allocation3 + $0x58] sm:$0xff]
      %v2529 = vld [vmem:[#allocation3 + $0x60] sm:$0xff]
      %v2530 = vld [vmem:[#allocation3 + $0x68] sm:$0xff]
      %v2531 = vld [vmem:[#allocation3 + $0x70] sm:$0xff]
      %v2532 = vld [vmem:[#allocation3 + $0x78] sm:$0xff]
      %v2533 = vld [vmem:[#allocation3 + $0x80] sm:$0xff]
      %v2534 = vld [vmem:[#allocation3 + $0x88] sm:$0xff]
      %v2535 = vld [vmem:[#allocation3 + $0x90] sm:$0xff]
      %v2536 = vld [vmem:[#allocation3 + $0x98] sm:$0xff]
      %v2537 = vld [vmem:[#allocation3 + $0xa0] sm:$0xff]
      %v2538 = vld [vmem:[#allocation3 + $0xa8] sm:$0xff]
      %v2539 = vld [vmem:[#allocation3 + $0xb0] sm:$0xff]
      %v2540 = vld [vmem:[#allocation3 + $0xb8] sm:$0xff]
      %v2541 = vld [vmem:[#allocation3 + $0xc0] sm:$0xff]
      %v2542 = vld [vmem:[#allocation3 + $0xc8] sm:$0xff]
      %v2543 = vld [vmem:[#allocation3 + $0xd0] sm:$0xff]
      %v2544 = vld [vmem:[#allocation3 + $0xd8] sm:$0xff]
      %v2545 = vld [vmem:[#allocation3 + $0xe0] sm:$0xff]
      %v2546 = vld [vmem:[#allocation3 + $0xe8] sm:$0xff]
      %v2547 = vld [vmem:[#allocation3 + $0xf0] sm:$0xff]
      %v2548 = vld [vmem:[#allocation3 + $0xf8] sm:$0xff]
      %v2549 = vld [vmem:[#allocation3 + $0x100] sm:$0xff]
      %v2550 = vld [vmem:[#allocation3 + $0x108] sm:$0xff]
      %v2551 = vld [vmem:[#allocation3 + $0x110] sm:$0xff]
      %v2552 = vpack.c.bf16 %v2520, %v2520
      %v2553 = vpack.c.bf16 %v2521, %v2521
      %v2554 = vpack.c.bf16 %v2522, %v2522
      %v2555 = vpack.c.bf16 %v2523, %v2523
      %v2556 = vpack.c.bf16 %v2524, %v2524
      %v2557 = vpack.c.bf16 %v2525, %v2525
      %v2558 = vpack.c.bf16 %v2526, %v2526
      %v2559 = vpack.c.bf16 %v2527, %v2527
      %v2560 = vpack.c.bf16 %v2528, %v2528
      %v2561 = vpack.c.bf16 %v2529, %v2529
      %v2562 = vpack.c.bf16 %v2530, %v2530
      %v2563 = vpack.c.bf16 %v2531, %v2531
      %v2564 = vpack.c.bf16 %v2532, %v2532
      %v2565 = vpack.c.bf16 %v2533, %v2533
      %v2566 = vpack.c.bf16 %v2534, %v2534
      %v2567 = vpack.c.bf16 %v2535, %v2535
      %v2568 = vpack.c.bf16 %v2536, %v2536
      %v2569 = vpack.c.bf16 %v2537, %v2537
      %v2570 = vpack.c.bf16 %v2538, %v2538
      %v2571 = vpack.c.bf16 %v2539, %v2539
      %v2572 = vpack.c.bf16 %v2540, %v2540
      %v2573 = vpack.c.bf16 %v2541, %v2541
      %v2574 = vpack.c.bf16 %v2542, %v2542
      %v2575 = vpack.c.bf16 %v2543, %v2543
      %v2576 = vpack.c.bf16 %v2544, %v2544
      %v2577 = vpack.c.bf16 %v2545, %v2545
      %v2578 = vpack.c.bf16 %v2546, %v2546
      %v2579 = vpack.c.bf16 %v2547, %v2547
      %v2580 = vpack.c.bf16 %v2548, %v2548
      %v2581 = vpack.c.bf16 %v2549, %v2549
      %v2582 = vpack.c.bf16 %v2550, %v2550
      %v2583 = vpack.c.bf16 %v2551, %v2551
      %2616 = vrot.lane.b32.xlu0 %v2552, 32
      %v2617 = vpop.permute.xlu0 %2616
      %2618 = vrot.lane.b32.xlu0 %v2553, 32
      %v2619 = vpop.permute.xlu0 %2618
      %2620 = vrot.lane.b32.xlu0 %v2554, 32
      %v2621 = vpop.permute.xlu0 %2620
      %2622 = vrot.lane.b32.xlu0 %v2555, 32
      %v2623 = vpop.permute.xlu0 %2622
      %2624 = vrot.lane.b32.xlu0 %v2556, 32
      %v2625 = vpop.permute.xlu0 %2624
      %2626 = vrot.lane.b32.xlu0 %v2557, 32
      %v2627 = vpop.permute.xlu0 %2626
      %2628 = vrot.lane.b32.xlu0 %v2558, 32
      %v2629 = vpop.permute.xlu0 %2628
      %2630 = vrot.lane.b32.xlu0 %v2559, 32
      %v2631 = vpop.permute.xlu0 %2630
      %2632 = vrot.lane.b32.xlu0 %v2560, 32
      %v2633 = vpop.permute.xlu0 %2632
      %2634 = vrot.lane.b32.xlu0 %v2561, 32
      %v2635 = vpop.permute.xlu0 %2634
      %2636 = vrot.lane.b32.xlu0 %v2562, 32
      %v2637 = vpop.permute.xlu0 %2636
      %2638 = vrot.lane.b32.xlu0 %v2563, 32
      %v2639 = vpop.permute.xlu0 %2638
      %2640 = vrot.lane.b32.xlu0 %v2564, 32
      %v2641 = vpop.permute.xlu0 %2640
      %2642 = vrot.lane.b32.xlu0 %v2565, 32
      %v2643 = vpop.permute.xlu0 %2642
      %2644 = vrot.lane.b32.xlu0 %v2566, 32
      %v2645 = vpop.permute.xlu0 %2644
      %2646 = vrot.lane.b32.xlu0 %v2567, 32
      %v2647 = vpop.permute.xlu0 %2646
      %2648 = vrot.lane.b32.xlu0 %v2568, 32
      %v2649 = vpop.permute.xlu0 %2648
      %2650 = vrot.lane.b32.xlu0 %v2569, 32
      %v2651 = vpop.permute.xlu0 %2650
      %2652 = vrot.lane.b32.xlu0 %v2570, 32
      %v2653 = vpop.permute.xlu0 %2652
      %2654 = vrot.lane.b32.xlu0 %v2571, 32
      %v2655 = vpop.permute.xlu0 %2654
      %2656 = vrot.lane.b32.xlu0 %v2572, 32
      %v2657 = vpop.permute.xlu0 %2656
      %2658 = vrot.lane.b32.xlu0 %v2573, 32
      %v2659 = vpop.permute.xlu0 %2658
      %2660 = vrot.lane.b32.xlu0 %v2574, 32
      %v2661 = vpop.permute.xlu0 %2660
      %2662 = vrot.lane.b32.xlu0 %v2575, 32
      %v2663 = vpop.permute.xlu0 %2662
      %2664 = vrot.lane.b32.xlu0 %v2576, 32
      %v2665 = vpop.permute.xlu0 %2664
      %2666 = vrot.lane.b32.xlu0 %v2577, 32
      %v2667 = vpop.permute.xlu0 %2666
      %2668 = vrot.lane.b32.xlu0 %v2578, 32
      %v2669 = vpop.permute.xlu0 %2668
      %2670 = vrot.lane.b32.xlu0 %v2579, 32
      %v2671 = vpop.permute.xlu0 %2670
      %2672 = vrot.lane.b32.xlu0 %v2580, 32
      %v2673 = vpop.permute.xlu0 %2672
      %2674 = vrot.lane.b32.xlu0 %v2581, 32
      %v2675 = vpop.permute.xlu0 %2674
      %2676 = vrot.lane.b32.xlu0 %v2582, 32
      %v2677 = vpop.permute.xlu0 %2676
      %2678 = vrot.lane.b32.xlu0 %v2583, 32
      %v2679 = vpop.permute.xlu0 %2678
      %vm2712 = vcmask 322816
      %2713 = vst.msk [vmem:[#allocation5] sm:$0xf] %vm2712, %v2617
      %2714 = vst.msk [vmem:[#allocation5 + $0x4] sm:$0xf] %vm2712, %v2619
      %2715 = vst.msk [vmem:[#allocation5 + $0x8] sm:$0xf] %vm2712, %v2621
      %2716 = vst.msk [vmem:[#allocation5 + $0xc] sm:$0xf] %vm2712, %v2623
      %2717 = vst.msk [vmem:[#allocation5 + $0x10] sm:$0xf] %vm2712, %v2625
      %2718 = vst.msk [vmem:[#allocation5 + $0x14] sm:$0xf] %vm2712, %v2627
      %2719 = vst.msk [vmem:[#allocation5 + $0x18] sm:$0xf] %vm2712, %v2629
      %2720 = vst.msk [vmem:[#allocation5 + $0x1c] sm:$0xf] %vm2712, %v2631
      %2721 = vst.msk [vmem:[#allocation5 + $0x20] sm:$0xf] %vm2712, %v2633
      %2722 = vst.msk [vmem:[#allocation5 + $0x24] sm:$0xf] %vm2712, %v2635
      %2723 = vst.msk [vmem:[#allocation5 + $0x28] sm:$0xf] %vm2712, %v2637
      %2724 = vst.msk [vmem:[#allocation5 + $0x2c] sm:$0xf] %vm2712, %v2639
      %2725 = vst.msk [vmem:[#allocation5 + $0x30] sm:$0xf] %vm2712, %v2641
      %2726 = vst.msk [vmem:[#allocation5 + $0x34] sm:$0xf] %vm2712, %v2643
      %2727 = vst.msk [vmem:[#allocation5 + $0x38] sm:$0xf] %vm2712, %v2645
      %2728 = vst.msk [vmem:[#allocation5 + $0x3c] sm:$0xf] %vm2712, %v2647
      %2729 = vst.msk [vmem:[#allocation5 + $0x40] sm:$0xf] %vm2712, %v2649
      %2730 = vst.msk [vmem:[#allocation5 + $0x44] sm:$0xf] %vm2712, %v2651
      %2731 = vst.msk [vmem:[#allocation5 + $0x48] sm:$0xf] %vm2712, %v2653
      %2732 = vst.msk [vmem:[#allocation5 + $0x4c] sm:$0xf] %vm2712, %v2655
      %2733 = vst.msk [vmem:[#allocation5 + $0x50] sm:$0xf] %vm2712, %v2657
      %2734 = vst.msk [vmem:[#allocation5 + $0x54] sm:$0xf] %vm2712, %v2659
      %2735 = vst.msk [vmem:[#allocation5 + $0x58] sm:$0xf] %vm2712, %v2661
      %2736 = vst.msk [vmem:[#allocation5 + $0x5c] sm:$0xf] %vm2712, %v2663
      %2737 = vst.msk [vmem:[#allocation5 + $0x60] sm:$0xf] %vm2712, %v2665
      %2738 = vst.msk [vmem:[#allocation5 + $0x64] sm:$0xf] %vm2712, %v2667
      %2739 = vst.msk [vmem:[#allocation5 + $0x68] sm:$0xf] %vm2712, %v2669
      %2740 = vst.msk [vmem:[#allocation5 + $0x6c] sm:$0xf] %vm2712, %v2671
      %2741 = vst.msk [vmem:[#allocation5 + $0x70] sm:$0xf] %vm2712, %v2673
      %2742 = vst.msk [vmem:[#allocation5 + $0x74] sm:$0xf] %vm2712, %v2675
      %2743 = vst.msk [vmem:[#allocation5 + $0x78] sm:$0xf] %vm2712, %v2677
      %2744 = vst.msk [vmem:[#allocation5 + $0x7c] sm:$0xf] %vm2712, %v2679
      %v2745 = vld [vmem:[#allocation4 + $0x19] sm:$0xff]
      %v2746 = vld [vmem:[#allocation4 + $0x21] sm:$0xff]
      %v2747 = vld [vmem:[#allocation4 + $0x29] sm:$0xff]
      %v2748 = vld [vmem:[#allocation4 + $0x31] sm:$0xff]
      %v2749 = vld [vmem:[#allocation4 + $0x39] sm:$0xff]
      %v2750 = vld [vmem:[#allocation4 + $0x41] sm:$0xff]
      %v2751 = vld [vmem:[#allocation4 + $0x49] sm:$0xff]
      %v2752 = vld [vmem:[#allocation4 + $0x51] sm:$0xff]
      %v2753 = vld [vmem:[#allocation4 + $0x59] sm:$0xff]
      %v2754 = vld [vmem:[#allocation4 + $0x61] sm:$0xff]
      %v2755 = vld [vmem:[#allocation4 + $0x69] sm:$0xff]
      %v2756 = vld [vmem:[#allocation4 + $0x71] sm:$0xff]
      %v2757 = vld [vmem:[#allocation4 + $0x79] sm:$0xff]
      %v2758 = vld [vmem:[#allocation4 + $0x81] sm:$0xff]
      %v2759 = vld [vmem:[#allocation4 + $0x89] sm:$0xff]
      %v2760 = vld [vmem:[#allocation4 + $0x91] sm:$0xff]
      %v2761 = vld [vmem:[#allocation4 + $0x99] sm:$0xff]
      %v2762 = vld [vmem:[#allocation4 + $0xa1] sm:$0xff]
      %v2763 = vld [vmem:[#allocation4 + $0xa9] sm:$0xff]
      %v2764 = vld [vmem:[#allocation4 + $0xb1] sm:$0xff]
      %v2765 = vld [vmem:[#allocation4 + $0xb9] sm:$0xff]
      %v2766 = vld [vmem:[#allocation4 + $0xc1] sm:$0xff]
      %v2767 = vld [vmem:[#allocation4 + $0xc9] sm:$0xff]
      %v2768 = vld [vmem:[#allocation4 + $0xd1] sm:$0xff]
      %v2769 = vld [vmem:[#allocation4 + $0xd9] sm:$0xff]
      %v2770 = vld [vmem:[#allocation4 + $0xe1] sm:$0xff]
      %v2771 = vld [vmem:[#allocation4 + $0xe9] sm:$0xff]
      %v2772 = vld [vmem:[#allocation4 + $0xf1] sm:$0xff]
      %v2773 = vld [vmem:[#allocation4 + $0xf9] sm:$0xff]
      %v2774 = vld [vmem:[#allocation4 + $0x101] sm:$0xff]
      %v2775 = vld [vmem:[#allocation4 + $0x109] sm:$0xff]
      %v2776 = vld [vmem:[#allocation4 + $0x111] sm:$0xff]
      %v2777 = vpack.c.bf16 %v2745, %v2745
      %v2778 = vpack.c.bf16 %v2746, %v2746
      %v2779 = vpack.c.bf16 %v2747, %v2747
      %v2780 = vpack.c.bf16 %v2748, %v2748
      %v2781 = vpack.c.bf16 %v2749, %v2749
      %v2782 = vpack.c.bf16 %v2750, %v2750
      %v2783 = vpack.c.bf16 %v2751, %v2751
      %v2784 = vpack.c.bf16 %v2752, %v2752
      %v2785 = vpack.c.bf16 %v2753, %v2753
      %v2786 = vpack.c.bf16 %v2754, %v2754
      %v2787 = vpack.c.bf16 %v2755, %v2755
      %v2788 = vpack.c.bf16 %v2756, %v2756
      %v2789 = vpack.c.bf16 %v2757, %v2757
      %v2790 = vpack.c.bf16 %v2758, %v2758
      %v2791 = vpack.c.bf16 %v2759, %v2759
      %v2792 = vpack.c.bf16 %v2760, %v2760
      %v2793 = vpack.c.bf16 %v2761, %v2761
      %v2794 = vpack.c.bf16 %v2762, %v2762
      %v2795 = vpack.c.bf16 %v2763, %v2763
      %v2796 = vpack.c.bf16 %v2764, %v2764
      %v2797 = vpack.c.bf16 %v2765, %v2765
      %v2798 = vpack.c.bf16 %v2766, %v2766
      %v2799 = vpack.c.bf16 %v2767, %v2767
      %v2800 = vpack.c.bf16 %v2768, %v2768
      %v2801 = vpack.c.bf16 %v2769, %v2769
      %v2802 = vpack.c.bf16 %v2770, %v2770
      %v2803 = vpack.c.bf16 %v2771, %v2771
      %v2804 = vpack.c.bf16 %v2772, %v2772
      %v2805 = vpack.c.bf16 %v2773, %v2773
      %v2806 = vpack.c.bf16 %v2774, %v2774
      %v2807 = vpack.c.bf16 %v2775, %v2775
      %v2808 = vpack.c.bf16 %v2776, %v2776
      %2841 = vrot.lane.b32.xlu0 %v2777, 40
      %v2842 = vpop.permute.xlu0 %2841
      %2843 = vrot.lane.b32.xlu0 %v2778, 40
      %v2844 = vpop.permute.xlu0 %2843
      %2845 = vrot.lane.b32.xlu0 %v2779, 40
      %v2846 = vpop.permute.xlu0 %2845
      %2847 = vrot.lane.b32.xlu0 %v2780, 40
      %v2848 = vpop.permute.xlu0 %2847
      %2849 = vrot.lane.b32.xlu0 %v2781, 40
      %v2850 = vpop.permute.xlu0 %2849
      %2851 = vrot.lane.b32.xlu0 %v2782, 40
      %v2852 = vpop.permute.xlu0 %2851
      %2853 = vrot.lane.b32.xlu0 %v2783, 40
      %v2854 = vpop.permute.xlu0 %2853
      %2855 = vrot.lane.b32.xlu0 %v2784, 40
      %v2856 = vpop.permute.xlu0 %2855
      %2857 = vrot.lane.b32.xlu0 %v2785, 40
      %v2858 = vpop.permute.xlu0 %2857
      %2859 = vrot.lane.b32.xlu0 %v2786, 40
      %v2860 = vpop.permute.xlu0 %2859
      %2861 = vrot.lane.b32.xlu0 %v2787, 40
      %v2862 = vpop.permute.xlu0 %2861
      %2863 = vrot.lane.b32.xlu0 %v2788, 40
      %v2864 = vpop.permute.xlu0 %2863
      %2865 = vrot.lane.b32.xlu0 %v2789, 40
      %v2866 = vpop.permute.xlu0 %2865
      %2867 = vrot.lane.b32.xlu0 %v2790, 40
      %v2868 = vpop.permute.xlu0 %2867
      %2869 = vrot.lane.b32.xlu0 %v2791, 40
      %v2870 = vpop.permute.xlu0 %2869
      %2871 = vrot.lane.b32.xlu0 %v2792, 40
      %v2872 = vpop.permute.xlu0 %2871
      %2873 = vrot.lane.b32.xlu0 %v2793, 40
      %v2874 = vpop.permute.xlu0 %2873
      %2875 = vrot.lane.b32.xlu0 %v2794, 40
      %v2876 = vpop.permute.xlu0 %2875
      %2877 = vrot.lane.b32.xlu0 %v2795, 40
      %v2878 = vpop.permute.xlu0 %2877
      %2879 = vrot.lane.b32.xlu0 %v2796, 40
      %v2880 = vpop.permute.xlu0 %2879
      %2881 = vrot.lane.b32.xlu0 %v2797, 40
      %v2882 = vpop.permute.xlu0 %2881
      %2883 = vrot.lane.b32.xlu0 %v2798, 40
      %v2884 = vpop.permute.xlu0 %2883
      %2885 = vrot.lane.b32.xlu0 %v2799, 40
      %v2886 = vpop.permute.xlu0 %2885
      %2887 = vrot.lane.b32.xlu0 %v2800, 40
      %v2888 = vpop.permute.xlu0 %2887
      %2889 = vrot.lane.b32.xlu0 %v2801, 40
      %v2890 = vpop.permute.xlu0 %2889
      %2891 = vrot.lane.b32.xlu0 %v2802, 40
      %v2892 = vpop.permute.xlu0 %2891
      %2893 = vrot.lane.b32.xlu0 %v2803, 40
      %v2894 = vpop.permute.xlu0 %2893
      %2895 = vrot.lane.b32.xlu0 %v2804, 40
      %v2896 = vpop.permute.xlu0 %2895
      %2897 = vrot.lane.b32.xlu0 %v2805, 40
      %v2898 = vpop.permute.xlu0 %2897
      %2899 = vrot.lane.b32.xlu0 %v2806, 40
      %v2900 = vpop.permute.xlu0 %2899
      %2901 = vrot.lane.b32.xlu0 %v2807, 40
      %v2902 = vpop.permute.xlu0 %2901
      %2903 = vrot.lane.b32.xlu0 %v2808, 40
      %v2904 = vpop.permute.xlu0 %2903
      %vm2937 = vcmask 388416
      %2938 = vst.msk [vmem:[#allocation5] sm:$0xf] %vm2937, %v2842
      %2939 = vst.msk [vmem:[#allocation5 + $0x4] sm:$0xf] %vm2937, %v2844
      %2940 = vst.msk [vmem:[#allocation5 + $0x8] sm:$0xf] %vm2937, %v2846
      %2941 = vst.msk [vmem:[#allocation5 + $0xc] sm:$0xf] %vm2937, %v2848
      %2942 = vst.msk [vmem:[#allocation5 + $0x10] sm:$0xf] %vm2937, %v2850
      %2943 = vst.msk [vmem:[#allocation5 + $0x14] sm:$0xf] %vm2937, %v2852
      %2944 = vst.msk [vmem:[#allocation5 + $0x18] sm:$0xf] %vm2937, %v2854
      %2945 = vst.msk [vmem:[#allocation5 + $0x1c] sm:$0xf] %vm2937, %v2856
      %2946 = vst.msk [vmem:[#allocation5 + $0x20] sm:$0xf] %vm2937, %v2858
      %2947 = vst.msk [vmem:[#allocation5 + $0x24] sm:$0xf] %vm2937, %v2860
      %2948 = vst.msk [vmem:[#allocation5 + $0x28] sm:$0xf] %vm2937, %v2862
      %2949 = vst.msk [vmem:[#allocation5 + $0x2c] sm:$0xf] %vm2937, %v2864
      %2950 = vst.msk [vmem:[#allocation5 + $0x30] sm:$0xf] %vm2937, %v2866
      %2951 = vst.msk [vmem:[#allocation5 + $0x34] sm:$0xf] %vm2937, %v2868
      %2952 = vst.msk [vmem:[#allocation5 + $0x38] sm:$0xf] %vm2937, %v2870
      %2953 = vst.msk [vmem:[#allocation5 + $0x3c] sm:$0xf] %vm2937, %v2872
      %2954 = vst.msk [vmem:[#allocation5 + $0x40] sm:$0xf] %vm2937, %v2874
      %2955 = vst.msk [vmem:[#allocation5 + $0x44] sm:$0xf] %vm2937, %v2876
      %2956 = vst.msk [vmem:[#allocation5 + $0x48] sm:$0xf] %vm2937, %v2878
      %2957 = vst.msk [vmem:[#allocation5 + $0x4c] sm:$0xf] %vm2937, %v2880
      %2958 = vst.msk [vmem:[#allocation5 + $0x50] sm:$0xf] %vm2937, %v2882
      %2959 = vst.msk [vmem:[#allocation5 + $0x54] sm:$0xf] %vm2937, %v2884
      %2960 = vst.msk [vmem:[#allocation5 + $0x58] sm:$0xf] %vm2937, %v2886
      %2961 = vst.msk [vmem:[#allocation5 + $0x5c] sm:$0xf] %vm2937, %v2888
      %2962 = vst.msk [vmem:[#allocation5 + $0x60] sm:$0xf] %vm2937, %v2890
      %2963 = vst.msk [vmem:[#allocation5 + $0x64] sm:$0xf] %vm2937, %v2892
      %2964 = vst.msk [vmem:[#allocation5 + $0x68] sm:$0xf] %vm2937, %v2894
      %2965 = vst.msk [vmem:[#allocation5 + $0x6c] sm:$0xf] %vm2937, %v2896
      %2966 = vst.msk [vmem:[#allocation5 + $0x70] sm:$0xf] %vm2937, %v2898
      %2967 = vst.msk [vmem:[#allocation5 + $0x74] sm:$0xf] %vm2937, %v2900
      %2968 = vst.msk [vmem:[#allocation5 + $0x78] sm:$0xf] %vm2937, %v2902
      %2969 = vst.msk [vmem:[#allocation5 + $0x7c] sm:$0xf] %vm2937, %v2904
      %v2970 = vld [vmem:[#allocation2 + $0x27] sm:$0xff]
      %v2971 = vld [vmem:[#allocation2 + $0x2f] sm:$0xff]
      %v2972 = vld [vmem:[#allocation2 + $0x37] sm:$0xff]
      %v2973 = vld [vmem:[#allocation2 + $0x3f] sm:$0xff]
      %v2974 = vld [vmem:[#allocation2 + $0x47] sm:$0xff]
      %v2975 = vld [vmem:[#allocation2 + $0x4f] sm:$0xff]
      %v2976 = vld [vmem:[#allocation2 + $0x57] sm:$0xff]
      %v2977 = vld [vmem:[#allocation2 + $0x5f] sm:$0xff]
      %v2978 = vld [vmem:[#allocation2 + $0x67] sm:$0xff]
      %v2979 = vld [vmem:[#allocation2 + $0x6f] sm:$0xff]
      %v2980 = vld [vmem:[#allocation2 + $0x77] sm:$0xff]
      %v2981 = vld [vmem:[#allocation2 + $0x7f] sm:$0xff]
      %v2982 = vld [vmem:[#allocation2 + $0x87] sm:$0xff]
      %v2983 = vld [vmem:[#allocation2 + $0x8f] sm:$0xff]
      %v2984 = vld [vmem:[#allocation2 + $0x97] sm:$0xff]
      %v2985 = vld [vmem:[#allocation2 + $0x9f] sm:$0xff]
      %v2986 = vld [vmem:[#allocation2 + $0xa7] sm:$0xff]
      %v2987 = vld [vmem:[#allocation2 + $0xaf] sm:$0xff]
      %v2988 = vld [vmem:[#allocation2 + $0xb7] sm:$0xff]
      %v2989 = vld [vmem:[#allocation2 + $0xbf] sm:$0xff]
      %v2990 = vld [vmem:[#allocation2 + $0xc7] sm:$0xff]
      %v2991 = vld [vmem:[#allocation2 + $0xcf] sm:$0xff]
      %v2992 = vld [vmem:[#allocation2 + $0xd7] sm:$0xff]
      %v2993 = vld [vmem:[#allocation2 + $0xdf] sm:$0xff]
      %v2994 = vld [vmem:[#allocation2 + $0xe7] sm:$0xff]
      %v2995 = vld [vmem:[#allocation2 + $0xef] sm:$0xff]
      %v2996 = vld [vmem:[#allocation2 + $0xf7] sm:$0xff]
      %v2997 = vld [vmem:[#allocation2 + $0xff] sm:$0xff]
      %v2998 = vld [vmem:[#allocation2 + $0x107] sm:$0xff]
      %v2999 = vld [vmem:[#allocation2 + $0x10f] sm:$0xff]
      %v3000 = vld [vmem:[#allocation2 + $0x117] sm:$0xff]
      %v3001 = vld [vmem:[#allocation2 + $0x11f] sm:$0xff]
      %v3002 = vpack.c.bf16 %v2970, %v2970
      %v3003 = vpack.c.bf16 %v2971, %v2971
      %v3004 = vpack.c.bf16 %v2972, %v2972
      %v3005 = vpack.c.bf16 %v2973, %v2973
      %v3006 = vpack.c.bf16 %v2974, %v2974
      %v3007 = vpack.c.bf16 %v2975, %v2975
      %v3008 = vpack.c.bf16 %v2976, %v2976
      %v3009 = vpack.c.bf16 %v2977, %v2977
      %v3010 = vpack.c.bf16 %v2978, %v2978
      %v3011 = vpack.c.bf16 %v2979, %v2979
      %v3012 = vpack.c.bf16 %v2980, %v2980
      %v3013 = vpack.c.bf16 %v2981, %v2981
      %v3014 = vpack.c.bf16 %v2982, %v2982
      %v3015 = vpack.c.bf16 %v2983, %v2983
      %v3016 = vpack.c.bf16 %v2984, %v2984
      %v3017 = vpack.c.bf16 %v2985, %v2985
      %v3018 = vpack.c.bf16 %v2986, %v2986
      %v3019 = vpack.c.bf16 %v2987, %v2987
      %v3020 = vpack.c.bf16 %v2988, %v2988
      %v3021 = vpack.c.bf16 %v2989, %v2989
      %v3022 = vpack.c.bf16 %v2990, %v2990
      %v3023 = vpack.c.bf16 %v2991, %v2991
      %v3024 = vpack.c.bf16 %v2992, %v2992
      %v3025 = vpack.c.bf16 %v2993, %v2993
      %v3026 = vpack.c.bf16 %v2994, %v2994
      %v3027 = vpack.c.bf16 %v2995, %v2995
      %v3028 = vpack.c.bf16 %v2996, %v2996
      %v3029 = vpack.c.bf16 %v2997, %v2997
      %v3030 = vpack.c.bf16 %v2998, %v2998
      %v3031 = vpack.c.bf16 %v2999, %v2999
      %v3032 = vpack.c.bf16 %v3000, %v3000
      %v3033 = vpack.c.bf16 %v3001, %v3001
      %3066 = vrot.lane.b32.xlu0 %v3002, 48
      %v3067 = vpop.permute.xlu0 %3066
      %3068 = vrot.lane.b32.xlu0 %v3003, 48
      %v3069 = vpop.permute.xlu0 %3068
      %3070 = vrot.lane.b32.xlu0 %v3004, 48
      %v3071 = vpop.permute.xlu0 %3070
      %3072 = vrot.lane.b32.xlu0 %v3005, 48
      %v3073 = vpop.permute.xlu0 %3072
      %3074 = vrot.lane.b32.xlu0 %v3006, 48
      %v3075 = vpop.permute.xlu0 %3074
      %3076 = vrot.lane.b32.xlu0 %v3007, 48
      %v3077 = vpop.permute.xlu0 %3076
      %3078 = vrot.lane.b32.xlu0 %v3008, 48
      %v3079 = vpop.permute.xlu0 %3078
      %3080 = vrot.lane.b32.xlu0 %v3009, 48
      %v3081 = vpop.permute.xlu0 %3080
      %3082 = vrot.lane.b32.xlu0 %v3010, 48
      %v3083 = vpop.permute.xlu0 %3082
      %3084 = vrot.lane.b32.xlu0 %v3011, 48
      %v3085 = vpop.permute.xlu0 %3084
      %3086 = vrot.lane.b32.xlu0 %v3012, 48
      %v3087 = vpop.permute.xlu0 %3086
      %3088 = vrot.lane.b32.xlu0 %v3013, 48
      %v3089 = vpop.permute.xlu0 %3088
      %3090 = vrot.lane.b32.xlu0 %v3014, 48
      %v3091 = vpop.permute.xlu0 %3090
      %3092 = vrot.lane.b32.xlu0 %v3015, 48
      %v3093 = vpop.permute.xlu0 %3092
      %3094 = vrot.lane.b32.xlu0 %v3016, 48
      %v3095 = vpop.permute.xlu0 %3094
      %3096 = vrot.lane.b32.xlu0 %v3017, 48
      %v3097 = vpop.permute.xlu0 %3096
      %3098 = vrot.lane.b32.xlu0 %v3018, 48
      %v3099 = vpop.permute.xlu0 %3098
      %3100 = vrot.lane.b32.xlu0 %v3019, 48
      %v3101 = vpop.permute.xlu0 %3100
      %3102 = vrot.lane.b32.xlu0 %v3020, 48
      %v3103 = vpop.permute.xlu0 %3102
      %3104 = vrot.lane.b32.xlu0 %v3021, 48
      %v3105 = vpop.permute.xlu0 %3104
      %3106 = vrot.lane.b32.xlu0 %v3022, 48
      %v3107 = vpop.permute.xlu0 %3106
      %3108 = vrot.lane.b32.xlu0 %v3023, 48
      %v3109 = vpop.permute.xlu0 %3108
      %3110 = vrot.lane.b32.xlu0 %v3024, 48
      %v3111 = vpop.permute.xlu0 %3110
      %3112 = vrot.lane.b32.xlu0 %v3025, 48
      %v3113 = vpop.permute.xlu0 %3112
      %3114 = vrot.lane.b32.xlu0 %v3026, 48
      %v3115 = vpop.permute.xlu0 %3114
      %3116 = vrot.lane.b32.xlu0 %v3027, 48
      %v3117 = vpop.permute.xlu0 %3116
      %3118 = vrot.lane.b32.xlu0 %v3028, 48
      %v3119 = vpop.permute.xlu0 %3118
      %3120 = vrot.lane.b32.xlu0 %v3029, 48
      %v3121 = vpop.permute.xlu0 %3120
      %3122 = vrot.lane.b32.xlu0 %v3030, 48
      %v3123 = vpop.permute.xlu0 %3122
      %3124 = vrot.lane.b32.xlu0 %v3031, 48
      %v3125 = vpop.permute.xlu0 %3124
      %3126 = vrot.lane.b32.xlu0 %v3032, 48
      %v3127 = vpop.permute.xlu0 %3126
      %3128 = vrot.lane.b32.xlu0 %v3033, 48
      %v3129 = vpop.permute.xlu0 %3128
      %vm3162 = vcmask 454016
      %3163 = vst.msk [vmem:[#allocation5] sm:$0xf] %vm3162, %v3067
      %3164 = vst.msk [vmem:[#allocation5 + $0x4] sm:$0xf] %vm3162, %v3069
      %3165 = vst.msk [vmem:[#allocation5 + $0x8] sm:$0xf] %vm3162, %v3071
      %3166 = vst.msk [vmem:[#allocation5 + $0xc] sm:$0xf] %vm3162, %v3073
      %3167 = vst.msk [vmem:[#allocation5 + $0x10] sm:$0xf] %vm3162, %v3075
      %3168 = vst.msk [vmem:[#allocation5 + $0x14] sm:$0xf] %vm3162, %v3077
      %3169 = vst.msk [vmem:[#allocation5 + $0x18] sm:$0xf] %vm3162, %v3079
      %3170 = vst.msk [vmem:[#allocation5 + $0x1c] sm:$0xf] %vm3162, %v3081
      %3171 = vst.msk [vmem:[#allocation5 + $0x20] sm:$0xf] %vm3162, %v3083
      %3172 = vst.msk [vmem:[#allocation5 + $0x24] sm:$0xf] %vm3162, %v3085
      %3173 = vst.msk [vmem:[#allocation5 + $0x28] sm:$0xf] %vm3162, %v3087
      %3174 = vst.msk [vmem:[#allocation5 + $0x2c] sm:$0xf] %vm3162, %v3089
      %3175 = vst.msk [vmem:[#allocation5 + $0x30] sm:$0xf] %vm3162, %v3091
      %3176 = vst.msk [vmem:[#allocation5 + $0x34] sm:$0xf] %vm3162, %v3093
      %3177 = vst.msk [vmem:[#allocation5 + $0x38] sm:$0xf] %vm3162, %v3095
      %3178 = vst.msk [vmem:[#allocation5 + $0x3c] sm:$0xf] %vm3162, %v3097
      %3179 = vst.msk [vmem:[#allocation5 + $0x40] sm:$0xf] %vm3162, %v3099
      %3180 = vst.msk [vmem:[#allocation5 + $0x44] sm:$0xf] %vm3162, %v3101
      %3181 = vst.msk [vmem:[#allocation5 + $0x48] sm:$0xf] %vm3162, %v3103
      %3182 = vst.msk [vmem:[#allocation5 + $0x4c] sm:$0xf] %vm3162, %v3105
      %3183 = vst.msk [vmem:[#allocation5 + $0x50] sm:$0xf] %vm3162, %v3107
      %3184 = vst.msk [vmem:[#allocation5 + $0x54] sm:$0xf] %vm3162, %v3109
      %3185 = vst.msk [vmem:[#allocation5 + $0x58] sm:$0xf] %vm3162, %v3111
      %3186 = vst.msk [vmem:[#allocation5 + $0x5c] sm:$0xf] %vm3162, %v3113
      %3187 = vst.msk [vmem:[#allocation5 + $0x60] sm:$0xf] %vm3162, %v3115
      %3188 = vst.msk [vmem:[#allocation5 + $0x64] sm:$0xf] %vm3162, %v3117
      %3189 = vst.msk [vmem:[#allocation5 + $0x68] sm:$0xf] %vm3162, %v3119
      %3190 = vst.msk [vmem:[#allocation5 + $0x6c] sm:$0xf] %vm3162, %v3121
      %3191 = vst.msk [vmem:[#allocation5 + $0x70] sm:$0xf] %vm3162, %v3123
      %3192 = vst.msk [vmem:[#allocation5 + $0x74] sm:$0xf] %vm3162, %v3125
      %3193 = vst.msk [vmem:[#allocation5 + $0x78] sm:$0xf] %vm3162, %v3127
      %3194 = vst.msk [vmem:[#allocation5 + $0x7c] sm:$0xf] %vm3162, %v3129
      %v3195 = vld [vmem:[#allocation3 + $0x28] sm:$0xff]
      %v3196 = vld [vmem:[#allocation3 + $0x30] sm:$0xff]
      %v3197 = vld [vmem:[#allocation3 + $0x38] sm:$0xff]
      %v3198 = vld [vmem:[#allocation3 + $0x40] sm:$0xff]
      %v3199 = vld [vmem:[#allocation3 + $0x48] sm:$0xff]
      %v3200 = vld [vmem:[#allocation3 + $0x50] sm:$0xff]
      %v3201 = vld [vmem:[#allocation3 + $0x58] sm:$0xff]
      %v3202 = vld [vmem:[#allocation3 + $0x60] sm:$0xff]
      %v3203 = vld [vmem:[#allocation3 + $0x68] sm:$0xff]
      %v3204 = vld [vmem:[#allocation3 + $0x70] sm:$0xff]
      %v3205 = vld [vmem:[#allocation3 + $0x78] sm:$0xff]
      %v3206 = vld [vmem:[#allocation3 + $0x80] sm:$0xff]
      %v3207 = vld [vmem:[#allocation3 + $0x88] sm:$0xff]
      %v3208 = vld [vmem:[#allocation3 + $0x90] sm:$0xff]
      %v3209 = vld [vmem:[#allocation3 + $0x98] sm:$0xff]
      %v3210 = vld [vmem:[#allocation3 + $0xa0] sm:$0xff]
      %v3211 = vld [vmem:[#allocation3 + $0xa8] sm:$0xff]
      %v3212 = vld [vmem:[#allocation3 + $0xb0] sm:$0xff]
      %v3213 = vld [vmem:[#allocation3 + $0xb8] sm:$0xff]
      %v3214 = vld [vmem:[#allocation3 + $0xc0] sm:$0xff]
      %v3215 = vld [vmem:[#allocation3 + $0xc8] sm:$0xff]
      %v3216 = vld [vmem:[#allocation3 + $0xd0] sm:$0xff]
      %v3217 = vld [vmem:[#allocation3 + $0xd8] sm:$0xff]
      %v3218 = vld [vmem:[#allocation3 + $0xe0] sm:$0xff]
      %v3219 = vld [vmem:[#allocation3 + $0xe8] sm:$0xff]
      %v3220 = vld [vmem:[#allocation3 + $0xf0] sm:$0xff]
      %v3221 = vld [vmem:[#allocation3 + $0xf8] sm:$0xff]
      %v3222 = vld [vmem:[#allocation3 + $0x100] sm:$0xff]
      %v3223 = vld [vmem:[#allocation3 + $0x108] sm:$0xff]
      %v3224 = vld [vmem:[#allocation3 + $0x110] sm:$0xff]
      %v3225 = vld [vmem:[#allocation3 + $0x118] sm:$0xff]
      %v3226 = vld [vmem:[#allocation3 + $0x120] sm:$0xff]
      %v3227 = vpack.c.bf16 %v3195, %v3195
      %v3228 = vpack.c.bf16 %v3196, %v3196
      %v3229 = vpack.c.bf16 %v3197, %v3197
      %v3230 = vpack.c.bf16 %v3198, %v3198
      %v3231 = vpack.c.bf16 %v3199, %v3199
      %v3232 = vpack.c.bf16 %v3200, %v3200
      %v3233 = vpack.c.bf16 %v3201, %v3201
      %v3234 = vpack.c.bf16 %v3202, %v3202
      %v3235 = vpack.c.bf16 %v3203, %v3203
      %v3236 = vpack.c.bf16 %v3204, %v3204
      %v3237 = vpack.c.bf16 %v3205, %v3205
      %v3238 = vpack.c.bf16 %v3206, %v3206
      %v3239 = vpack.c.bf16 %v3207, %v3207
      %v3240 = vpack.c.bf16 %v3208, %v3208
      %v3241 = vpack.c.bf16 %v3209, %v3209
      %v3242 = vpack.c.bf16 %v3210, %v3210
      %v3243 = vpack.c.bf16 %v3211, %v3211
      %v3244 = vpack.c.bf16 %v3212, %v3212
      %v3245 = vpack.c.bf16 %v3213, %v3213
      %v3246 = vpack.c.bf16 %v3214, %v3214
      %v3247 = vpack.c.bf16 %v3215, %v3215
      %v3248 = vpack.c.bf16 %v3216, %v3216
      %v3249 = vpack.c.bf16 %v3217, %v3217
      %v3250 = vpack.c.bf16 %v3218, %v3218
      %v3251 = vpack.c.bf16 %v3219, %v3219
      %v3252 = vpack.c.bf16 %v3220, %v3220
      %v3253 = vpack.c.bf16 %v3221, %v3221
      %v3254 = vpack.c.bf16 %v3222, %v3222
      %v3255 = vpack.c.bf16 %v3223, %v3223
      %v3256 = vpack.c.bf16 %v3224, %v3224
      %v3257 = vpack.c.bf16 %v3225, %v3225
      %v3258 = vpack.c.bf16 %v3226, %v3226
      %3291 = vrot.lane.b32.xlu0 %v3227, 56
      %v3292 = vpop.permute.xlu0 %3291
      %3293 = vrot.lane.b32.xlu0 %v3228, 56
      %v3294 = vpop.permute.xlu0 %3293
      %3295 = vrot.lane.b32.xlu0 %v3229, 56
      %v3296 = vpop.permute.xlu0 %3295
      %3297 = vrot.lane.b32.xlu0 %v3230, 56
      %v3298 = vpop.permute.xlu0 %3297
      %3299 = vrot.lane.b32.xlu0 %v3231, 56
      %v3300 = vpop.permute.xlu0 %3299
      %3301 = vrot.lane.b32.xlu0 %v3232, 56
      %v3302 = vpop.permute.xlu0 %3301
      %3303 = vrot.lane.b32.xlu0 %v3233, 56
      %v3304 = vpop.permute.xlu0 %3303
      %3305 = vrot.lane.b32.xlu0 %v3234, 56
      %v3306 = vpop.permute.xlu0 %3305
      %3307 = vrot.lane.b32.xlu0 %v3235, 56
      %v3308 = vpop.permute.xlu0 %3307
      %3309 = vrot.lane.b32.xlu0 %v3236, 56
      %v3310 = vpop.permute.xlu0 %3309
      %3311 = vrot.lane.b32.xlu0 %v3237, 56
      %v3312 = vpop.permute.xlu0 %3311
      %3313 = vrot.lane.b32.xlu0 %v3238, 56
      %v3314 = vpop.permute.xlu0 %3313
      %3315 = vrot.lane.b32.xlu0 %v3239, 56
      %v3316 = vpop.permute.xlu0 %3315
      %3317 = vrot.lane.b32.xlu0 %v3240, 56
      %v3318 = vpop.permute.xlu0 %3317
      %3319 = vrot.lane.b32.xlu0 %v3241, 56
      %v3320 = vpop.permute.xlu0 %3319
      %3321 = vrot.lane.b32.xlu0 %v3242, 56
      %v3322 = vpop.permute.xlu0 %3321
      %3323 = vrot.lane.b32.xlu0 %v3243, 56
      %v3324 = vpop.permute.xlu0 %3323
      %3325 = vrot.lane.b32.xlu0 %v3244, 56
      %v3326 = vpop.permute.xlu0 %3325
      %3327 = vrot.lane.b32.xlu0 %v3245, 56
      %v3328 = vpop.permute.xlu0 %3327
      %3329 = vrot.lane.b32.xlu0 %v3246, 56
      %v3330 = vpop.permute.xlu0 %3329
      %3331 = vrot.lane.b32.xlu0 %v3247, 56
      %v3332 = vpop.permute.xlu0 %3331
      %3333 = vrot.lane.b32.xlu0 %v3248, 56
      %v3334 = vpop.permute.xlu0 %3333
      %3335 = vrot.lane.b32.xlu0 %v3249, 56
      %v3336 = vpop.permute.xlu0 %3335
      %3337 = vrot.lane.b32.xlu0 %v3250, 56
      %v3338 = vpop.permute.xlu0 %3337
      %3339 = vrot.lane.b32.xlu0 %v3251, 56
      %v3340 = vpop.permute.xlu0 %3339
      %3341 = vrot.lane.b32.xlu0 %v3252, 56
      %v3342 = vpop.permute.xlu0 %3341
      %3343 = vrot.lane.b32.xlu0 %v3253, 56
      %v3344 = vpop.permute.xlu0 %3343
      %3345 = vrot.lane.b32.xlu0 %v3254, 56
      %v3346 = vpop.permute.xlu0 %3345
      %3347 = vrot.lane.b32.xlu0 %v3255, 56
      %v3348 = vpop.permute.xlu0 %3347
      %3349 = vrot.lane.b32.xlu0 %v3256, 56
      %v3350 = vpop.permute.xlu0 %3349
      %3351 = vrot.lane.b32.xlu0 %v3257, 56
      %v3352 = vpop.permute.xlu0 %3351
      %3353 = vrot.lane.b32.xlu0 %v3258, 56
      %v3354 = vpop.permute.xlu0 %3353
      %vm3387 = vcmask 519616
      %3388 = vst.msk [vmem:[#allocation5] sm:$0xf] %vm3387, %v3292
      %3389 = vst.msk [vmem:[#allocation5 + $0x4] sm:$0xf] %vm3387, %v3294
      %3390 = vst.msk [vmem:[#allocation5 + $0x8] sm:$0xf] %vm3387, %v3296
      %3391 = vst.msk [vmem:[#allocation5 + $0xc] sm:$0xf] %vm3387, %v3298
      %3392 = vst.msk [vmem:[#allocation5 + $0x10] sm:$0xf] %vm3387, %v3300
      %3393 = vst.msk [vmem:[#allocation5 + $0x14] sm:$0xf] %vm3387, %v3302
      %3394 = vst.msk [vmem:[#allocation5 + $0x18] sm:$0xf] %vm3387, %v3304
      %3395 = vst.msk [vmem:[#allocation5 + $0x1c] sm:$0xf] %vm3387, %v3306
      %3396 = vst.msk [vmem:[#allocation5 + $0x20] sm:$0xf] %vm3387, %v3308
      %3397 = vst.msk [vmem:[#allocation5 + $0x24] sm:$0xf] %vm3387, %v3310
      %3398 = vst.msk [vmem:[#allocation5 + $0x28] sm:$0xf] %vm3387, %v3312
      %3399 = vst.msk [vmem:[#allocation5 + $0x2c] sm:$0xf] %vm3387, %v3314
      %3400 = vst.msk [vmem:[#allocation5 + $0x30] sm:$0xf] %vm3387, %v3316
      %3401 = vst.msk [vmem:[#allocation5 + $0x34] sm:$0xf] %vm3387, %v3318
      %3402 = vst.msk [vmem:[#allocation5 + $0x38] sm:$0xf] %vm3387, %v3320
      %3403 = vst.msk [vmem:[#allocation5 + $0x3c] sm:$0xf] %vm3387, %v3322
      %3404 = vst.msk [vmem:[#allocation5 + $0x40] sm:$0xf] %vm3387, %v3324
      %3405 = vst.msk [vmem:[#allocation5 + $0x44] sm:$0xf] %vm3387, %v3326
      %3406 = vst.msk [vmem:[#allocation5 + $0x48] sm:$0xf] %vm3387, %v3328
      %3407 = vst.msk [vmem:[#allocation5 + $0x4c] sm:$0xf] %vm3387, %v3330
      %3408 = vst.msk [vmem:[#allocation5 + $0x50] sm:$0xf] %vm3387, %v3332
      %3409 = vst.msk [vmem:[#allocation5 + $0x54] sm:$0xf] %vm3387, %v3334
      %3410 = vst.msk [vmem:[#allocation5 + $0x58] sm:$0xf] %vm3387, %v3336
      %3411 = vst.msk [vmem:[#allocation5 + $0x5c] sm:$0xf] %vm3387, %v3338
      %3412 = vst.msk [vmem:[#allocation5 + $0x60] sm:$0xf] %vm3387, %v3340
      %3413 = vst.msk [vmem:[#allocation5 + $0x64] sm:$0xf] %vm3387, %v3342
      %3414 = vst.msk [vmem:[#allocation5 + $0x68] sm:$0xf] %vm3387, %v3344
      %3415 = vst.msk [vmem:[#allocation5 + $0x6c] sm:$0xf] %vm3387, %v3346
      %3416 = vst.msk [vmem:[#allocation5 + $0x70] sm:$0xf] %vm3387, %v3348
      %3417 = vst.msk [vmem:[#allocation5 + $0x74] sm:$0xf] %vm3387, %v3350
      %3418 = vst.msk [vmem:[#allocation5 + $0x78] sm:$0xf] %vm3387, %v3352
      %3419 = vst.msk [vmem:[#allocation5 + $0x7c] sm:$0xf] %vm3387, %v3354
      %v3420 = vld [vmem:[#allocation4 + $0x29] sm:$0xff]
      %v3421 = vld [vmem:[#allocation4 + $0x31] sm:$0xff]
      %v3422 = vld [vmem:[#allocation4 + $0x39] sm:$0xff]
      %v3423 = vld [vmem:[#allocation4 + $0x41] sm:$0xff]
      %v3424 = vld [vmem:[#allocation4 + $0x49] sm:$0xff]
      %v3425 = vld [vmem:[#allocation4 + $0x51] sm:$0xff]
      %v3426 = vld [vmem:[#allocation4 + $0x59] sm:$0xff]
      %v3427 = vld [vmem:[#allocation4 + $0x61] sm:$0xff]
      %v3428 = vld [vmem:[#allocation4 + $0x69] sm:$0xff]
      %v3429 = vld [vmem:[#allocation4 + $0x71] sm:$0xff]
      %v3430 = vld [vmem:[#allocation4 + $0x79] sm:$0xff]
      %v3431 = vld [vmem:[#allocation4 + $0x81] sm:$0xff]
      %v3432 = vld [vmem:[#allocation4 + $0x89] sm:$0xff]
      %v3433 = vld [vmem:[#allocation4 + $0x91] sm:$0xff]
      %v3434 = vld [vmem:[#allocation4 + $0x99] sm:$0xff]
      %v3435 = vld [vmem:[#allocation4 + $0xa1] sm:$0xff]
      %v3436 = vld [vmem:[#allocation4 + $0xa9] sm:$0xff]
      %v3437 = vld [vmem:[#allocation4 + $0xb1] sm:$0xff]
      %v3438 = vld [vmem:[#allocation4 + $0xb9] sm:$0xff]
      %v3439 = vld [vmem:[#allocation4 + $0xc1] sm:$0xff]
      %v3440 = vld [vmem:[#allocation4 + $0xc9] sm:$0xff]
      %v3441 = vld [vmem:[#allocation4 + $0xd1] sm:$0xff]
      %v3442 = vld [vmem:[#allocation4 + $0xd9] sm:$0xff]
      %v3443 = vld [vmem:[#allocation4 + $0xe1] sm:$0xff]
      %v3444 = vld [vmem:[#allocation4 + $0xe9] sm:$0xff]
      %v3445 = vld [vmem:[#allocation4 + $0xf1] sm:$0xff]
      %v3446 = vld [vmem:[#allocation4 + $0xf9] sm:$0xff]
      %v3447 = vld [vmem:[#allocation4 + $0x101] sm:$0xff]
      %v3448 = vld [vmem:[#allocation4 + $0x109] sm:$0xff]
      %v3449 = vld [vmem:[#allocation4 + $0x111] sm:$0xff]
      %v3450 = vld [vmem:[#allocation4 + $0x119] sm:$0xff]
      %v3451 = vld [vmem:[#allocation4 + $0x121] sm:$0xff]
      %v3452 = vpack.c.bf16 %v3420, %v3420
      %v3453 = vpack.c.bf16 %v3421, %v3421
      %v3454 = vpack.c.bf16 %v3422, %v3422
      %v3455 = vpack.c.bf16 %v3423, %v3423
      %v3456 = vpack.c.bf16 %v3424, %v3424
      %v3457 = vpack.c.bf16 %v3425, %v3425
      %v3458 = vpack.c.bf16 %v3426, %v3426
      %v3459 = vpack.c.bf16 %v3427, %v3427
      %v3460 = vpack.c.bf16 %v3428, %v3428
      %v3461 = vpack.c.bf16 %v3429, %v3429
      %v3462 = vpack.c.bf16 %v3430, %v3430
      %v3463 = vpack.c.bf16 %v3431, %v3431
      %v3464 = vpack.c.bf16 %v3432, %v3432
      %v3465 = vpack.c.bf16 %v3433, %v3433
      %v3466 = vpack.c.bf16 %v3434, %v3434
      %v3467 = vpack.c.bf16 %v3435, %v3435
      %v3468 = vpack.c.bf16 %v3436, %v3436
      %v3469 = vpack.c.bf16 %v3437, %v3437
      %v3470 = vpack.c.bf16 %v3438, %v3438
      %v3471 = vpack.c.bf16 %v3439, %v3439
      %v3472 = vpack.c.bf16 %v3440, %v3440
      %v3473 = vpack.c.bf16 %v3441, %v3441
      %v3474 = vpack.c.bf16 %v3442, %v3442
      %v3475 = vpack.c.bf16 %v3443, %v3443
      %v3476 = vpack.c.bf16 %v3444, %v3444
      %v3477 = vpack.c.bf16 %v3445, %v3445
      %v3478 = vpack.c.bf16 %v3446, %v3446
      %v3479 = vpack.c.bf16 %v3447, %v3447
      %v3480 = vpack.c.bf16 %v3448, %v3448
      %v3481 = vpack.c.bf16 %v3449, %v3449
      %v3482 = vpack.c.bf16 %v3450, %v3450
      %v3483 = vpack.c.bf16 %v3451, %v3451
      %3516 = vrot.lane.b32.xlu0 %v3452, 64
      %v3517 = vpop.permute.xlu0 %3516
      %3518 = vrot.lane.b32.xlu0 %v3453, 64
      %v3519 = vpop.permute.xlu0 %3518
      %3520 = vrot.lane.b32.xlu0 %v3454, 64
      %v3521 = vpop.permute.xlu0 %3520
      %3522 = vrot.lane.b32.xlu0 %v3455, 64
      %v3523 = vpop.permute.xlu0 %3522
      %3524 = vrot.lane.b32.xlu0 %v3456, 64
      %v3525 = vpop.permute.xlu0 %3524
      %3526 = vrot.lane.b32.xlu0 %v3457, 64
      %v3527 = vpop.permute.xlu0 %3526
      %3528 = vrot.lane.b32.xlu0 %v3458, 64
      %v3529 = vpop.permute.xlu0 %3528
      %3530 = vrot.lane.b32.xlu0 %v3459, 64
      %v3531 = vpop.permute.xlu0 %3530
      %3532 = vrot.lane.b32.xlu0 %v3460, 64
      %v3533 = vpop.permute.xlu0 %3532
      %3534 = vrot.lane.b32.xlu0 %v3461, 64
      %v3535 = vpop.permute.xlu0 %3534
      %3536 = vrot.lane.b32.xlu0 %v3462, 64
      %v3537 = vpop.permute.xlu0 %3536
      %3538 = vrot.lane.b32.xlu0 %v3463, 64
      %v3539 = vpop.permute.xlu0 %3538
      %3540 = vrot.lane.b32.xlu0 %v3464, 64
      %v3541 = vpop.permute.xlu0 %3540
      %3542 = vrot.lane.b32.xlu0 %v3465, 64
      %v3543 = vpop.permute.xlu0 %3542
      %3544 = vrot.lane.b32.xlu0 %v3466, 64
      %v3545 = vpop.permute.xlu0 %3544
      %3546 = vrot.lane.b32.xlu0 %v3467, 64
      %v3547 = vpop.permute.xlu0 %3546
      %3548 = vrot.lane.b32.xlu0 %v3468, 64
      %v3549 = vpop.permute.xlu0 %3548
      %3550 = vrot.lane.b32.xlu0 %v3469, 64
      %v3551 = vpop.permute.xlu0 %3550
      %3552 = vrot.lane.b32.xlu0 %v3470, 64
      %v3553 = vpop.permute.xlu0 %3552
      %3554 = vrot.lane.b32.xlu0 %v3471, 64
      %v3555 = vpop.permute.xlu0 %3554
      %3556 = vrot.lane.b32.xlu0 %v3472, 64
      %v3557 = vpop.permute.xlu0 %3556
      %3558 = vrot.lane.b32.xlu0 %v3473, 64
      %v3559 = vpop.permute.xlu0 %3558
      %3560 = vrot.lane.b32.xlu0 %v3474, 64
      %v3561 = vpop.permute.xlu0 %3560
      %3562 = vrot.lane.b32.xlu0 %v3475, 64
      %v3563 = vpop.permute.xlu0 %3562
      %3564 = vrot.lane.b32.xlu0 %v3476, 64
      %v3565 = vpop.permute.xlu0 %3564
      %3566 = vrot.lane.b32.xlu0 %v3477, 64
      %v3567 = vpop.permute.xlu0 %3566
      %3568 = vrot.lane.b32.xlu0 %v3478, 64
      %v3569 = vpop.permute.xlu0 %3568
      %3570 = vrot.lane.b32.xlu0 %v3479, 64
      %v3571 = vpop.permute.xlu0 %3570
      %3572 = vrot.lane.b32.xlu0 %v3480, 64
      %v3573 = vpop.permute.xlu0 %3572
      %3574 = vrot.lane.b32.xlu0 %v3481, 64
      %v3575 = vpop.permute.xlu0 %3574
      %3576 = vrot.lane.b32.xlu0 %v3482, 64
      %v3577 = vpop.permute.xlu0 %3576
      %3578 = vrot.lane.b32.xlu0 %v3483, 64
      %v3579 = vpop.permute.xlu0 %3578
      %vm3612 = vcmask 585216
      %3613 = vst.msk [vmem:[#allocation5] sm:$0xf] %vm3612, %v3517
      %3614 = vst.msk [vmem:[#allocation5 + $0x4] sm:$0xf] %vm3612, %v3519
      %3615 = vst.msk [vmem:[#allocation5 + $0x8] sm:$0xf] %vm3612, %v3521
      %3616 = vst.msk [vmem:[#allocation5 + $0xc] sm:$0xf] %vm3612, %v3523
      %3617 = vst.msk [vmem:[#allocation5 + $0x10] sm:$0xf] %vm3612, %v3525
      %3618 = vst.msk [vmem:[#allocation5 + $0x14] sm:$0xf] %vm3612, %v3527
      %3619 = vst.msk [vmem:[#allocation5 + $0x18] sm:$0xf] %vm3612, %v3529
      %3620 = vst.msk [vmem:[#allocation5 + $0x1c] sm:$0xf] %vm3612, %v3531
      %3621 = vst.msk [vmem:[#allocation5 + $0x20] sm:$0xf] %vm3612, %v3533
      %3622 = vst.msk [vmem:[#allocation5 + $0x24] sm:$0xf] %vm3612, %v3535
      %3623 = vst.msk [vmem:[#allocation5 + $0x28] sm:$0xf] %vm3612, %v3537
      %3624 = vst.msk [vmem:[#allocation5 + $0x2c] sm:$0xf] %vm3612, %v3539
      %3625 = vst.msk [vmem:[#allocation5 + $0x30] sm:$0xf] %vm3612, %v3541
      %3626 = vst.msk [vmem:[#allocation5 + $0x34] sm:$0xf] %vm3612, %v3543
      %3627 = vst.msk [vmem:[#allocation5 + $0x38] sm:$0xf] %vm3612, %v3545
      %3628 = vst.msk [vmem:[#allocation5 + $0x3c] sm:$0xf] %vm3612, %v3547
      %3629 = vst.msk [vmem:[#allocation5 + $0x40] sm:$0xf] %vm3612, %v3549
      %3630 = vst.msk [vmem:[#allocation5 + $0x44] sm:$0xf] %vm3612, %v3551
      %3631 = vst.msk [vmem:[#allocation5 + $0x48] sm:$0xf] %vm3612, %v3553
      %3632 = vst.msk [vmem:[#allocation5 + $0x4c] sm:$0xf] %vm3612, %v3555
      %3633 = vst.msk [vmem:[#allocation5 + $0x50] sm:$0xf] %vm3612, %v3557
      %3634 = vst.msk [vmem:[#allocation5 + $0x54] sm:$0xf] %vm3612, %v3559
      %3635 = vst.msk [vmem:[#allocation5 + $0x58] sm:$0xf] %vm3612, %v3561
      %3636 = vst.msk [vmem:[#allocation5 + $0x5c] sm:$0xf] %vm3612, %v3563
      %3637 = vst.msk [vmem:[#allocation5 + $0x60] sm:$0xf] %vm3612, %v3565
      %3638 = vst.msk [vmem:[#allocation5 + $0x64] sm:$0xf] %vm3612, %v3567
      %3639 = vst.msk [vmem:[#allocation5 + $0x68] sm:$0xf] %vm3612, %v3569
      %3640 = vst.msk [vmem:[#allocation5 + $0x6c] sm:$0xf] %vm3612, %v3571
      %3641 = vst.msk [vmem:[#allocation5 + $0x70] sm:$0xf] %vm3612, %v3573
      %3642 = vst.msk [vmem:[#allocation5 + $0x74] sm:$0xf] %vm3612, %v3575
      %3643 = vst.msk [vmem:[#allocation5 + $0x78] sm:$0xf] %vm3612, %v3577
      %3644 = vst.msk [vmem:[#allocation5 + $0x7c] sm:$0xf] %vm3612, %v3579
      %v3645 = vld [vmem:[#allocation5] sm:$0xf]
      %v3646 = vld [vmem:[#allocation5 + $0x4] sm:$0xf]
      %v3647 = vld [vmem:[#allocation5 + $0x8] sm:$0xf]
      %v3648 = vld [vmem:[#allocation5 + $0xc] sm:$0xf]
      %v3649 = vld [vmem:[#allocation5 + $0x10] sm:$0xf]
      %v3650 = vld [vmem:[#allocation5 + $0x14] sm:$0xf]
      %v3651 = vld [vmem:[#allocation5 + $0x18] sm:$0xf]
      %v3652 = vld [vmem:[#allocation5 + $0x1c] sm:$0xf]
      %v3653 = vld [vmem:[#allocation5 + $0x20] sm:$0xf]
      %v3654 = vld [vmem:[#allocation5 + $0x24] sm:$0xf]
      %v3655 = vld [vmem:[#allocation5 + $0x28] sm:$0xf]
      %v3656 = vld [vmem:[#allocation5 + $0x2c] sm:$0xf]
      %v3657 = vld [vmem:[#allocation5 + $0x30] sm:$0xf]
      %v3658 = vld [vmem:[#allocation5 + $0x34] sm:$0xf]
      %v3659 = vld [vmem:[#allocation5 + $0x38] sm:$0xf]
      %v3660 = vld [vmem:[#allocation5 + $0x3c] sm:$0xf]
      %v3661 = vld [vmem:[#allocation5 + $0x40] sm:$0xf]
      %v3662 = vld [vmem:[#allocation5 + $0x44] sm:$0xf]
      %v3663 = vld [vmem:[#allocation5 + $0x48] sm:$0xf]
      %v3664 = vld [vmem:[#allocation5 + $0x4c] sm:$0xf]
      %v3665 = vld [vmem:[#allocation5 + $0x50] sm:$0xf]
      %v3666 = vld [vmem:[#allocation5 + $0x54] sm:$0xf]
      %v3667 = vld [vmem:[#allocation5 + $0x58] sm:$0xf]
      %v3668 = vld [vmem:[#allocation5 + $0x5c] sm:$0xf]
      %v3669 = vld [vmem:[#allocation5 + $0x60] sm:$0xf]
      %v3670 = vld [vmem:[#allocation5 + $0x64] sm:$0xf]
      %v3671 = vld [vmem:[#allocation5 + $0x68] sm:$0xf]
      %v3672 = vld [vmem:[#allocation5 + $0x6c] sm:$0xf]
      %v3673 = vld [vmem:[#allocation5 + $0x70] sm:$0xf]
      %v3674 = vld [vmem:[#allocation5 + $0x74] sm:$0xf]
      %v3675 = vld [vmem:[#allocation5 + $0x78] sm:$0xf]
      %v3676 = vld [vmem:[#allocation5 + $0x7c] sm:$0xf]
      %v3677 = vld [vmem:[%s6] sm:$0xf]
      %v3678 = vld [vmem:[%s6 + $0x4] sm:$0xf]
      %v3679 = vld [vmem:[%s6 + $0x8] sm:$0xf]
      %v3680 = vld [vmem:[%s6 + $0xc] sm:$0xf]
      %v3681 = vld [vmem:[%s6 + $0x10] sm:$0xf]
      %v3682 = vld [vmem:[%s6 + $0x14] sm:$0xf]
      %v3683 = vld [vmem:[%s6 + $0x18] sm:$0xf]
      %v3684 = vld [vmem:[%s6 + $0x1c] sm:$0xf]
      %v3685 = vld [vmem:[%s6 + $0x20] sm:$0xf]
      %v3718 = vunpack.c.l.b16 %v3645
      %v3719 = vunpack.c.l.b16 %v3646
      %v3720 = vunpack.c.l.b16 %v3647
      %v3721 = vunpack.c.l.b16 %v3648
      %v3722 = vunpack.c.l.b16 %v3649
      %v3723 = vunpack.c.l.b16 %v3650
      %v3724 = vunpack.c.l.b16 %v3651
      %v3725 = vunpack.c.l.b16 %v3652
      %v3726 = vunpack.c.l.b16 %v3653
      %v3727 = vunpack.c.l.b16 %v3654
      %v3728 = vunpack.c.l.b16 %v3655
      %v3729 = vunpack.c.l.b16 %v3656
      %v3730 = vunpack.c.l.b16 %v3657
      %v3731 = vunpack.c.l.b16 %v3658
      %v3732 = vunpack.c.l.b16 %v3659
      %v3733 = vunpack.c.l.b16 %v3660
      %v3734 = vunpack.c.l.b16 %v3661
      %v3735 = vunpack.c.l.b16 %v3662
      %v3736 = vunpack.c.l.b16 %v3663
      %v3737 = vunpack.c.l.b16 %v3664
      %v3738 = vunpack.c.l.b16 %v3665
      %v3739 = vunpack.c.l.b16 %v3666
      %v3740 = vunpack.c.l.b16 %v3667
      %v3741 = vunpack.c.l.b16 %v3668
      %v3742 = vunpack.c.l.b16 %v3669
      %v3743 = vunpack.c.l.b16 %v3670
      %v3744 = vunpack.c.l.b16 %v3671
      %v3745 = vunpack.c.l.b16 %v3672
      %v3746 = vunpack.c.l.b16 %v3673
      %v3747 = vunpack.c.l.b16 %v3674
      %v3748 = vunpack.c.l.b16 %v3675
      %v3749 = vunpack.c.l.b16 %v3676
      %v3750 = vpack.c.b16 %v3719, %v3718
      %v3751 = vpack.c.b16 %v3721, %v3720
      %v3752 = vpack.c.b16 %v3723, %v3722
      %v3753 = vpack.c.b16 %v3725, %v3724
      %v3754 = vpack.c.b16 %v3727, %v3726
      %v3755 = vpack.c.b16 %v3729, %v3728
      %v3756 = vpack.c.b16 %v3731, %v3730
      %v3757 = vpack.c.b16 %v3733, %v3732
      %v3758 = vpack.c.b16 %v3735, %v3734
      %v3759 = vpack.c.b16 %v3737, %v3736
      %v3760 = vpack.c.b16 %v3739, %v3738
      %v3761 = vpack.c.b16 %v3741, %v3740
      %v3762 = vpack.c.b16 %v3743, %v3742
      %v3763 = vpack.c.b16 %v3745, %v3744
      %v3764 = vpack.c.b16 %v3747, %v3746
      %v3765 = vpack.c.b16 %v3749, %v3748
      %v3775 = vunpack.c.l.b16 %v3677
      %v3776 = vunpack.c.l.b16 %v3678
      %v3777 = vunpack.c.l.b16 %v3679
      %v3778 = vunpack.c.l.b16 %v3680
      %v3779 = vunpack.c.l.b16 %v3681
      %v3780 = vunpack.c.l.b16 %v3682
      %v3781 = vunpack.c.l.b16 %v3683
      %v3782 = vunpack.c.l.b16 %v3684
      %v3783 = vunpack.c.l.b16 %v3685
      %v3784 = vpack.c.b16 %v3776, %v3775
      %v3785 = vpack.c.b16 %v3778, %v3777
      %v3786 = vpack.c.b16 %v3780, %v3779
      %v3787 = vpack.c.b16 %v3782, %v3781
      %v3788 = vpack.c.b16 %v3783, %v3783
      %vm3793 = vcmask 588800
      %v3795 = vsel %vm3793, %v3750, 0
      %v3798 = vsel %vm3793, %v3751, 0
      %v3801 = vsel %vm3793, %v3752, 0
      %v3804 = vsel %vm3793, %v3753, 0
      %v3807 = vsel %vm3793, %v3754, 0
      %v3810 = vsel %vm3793, %v3755, 0
      %v3813 = vsel %vm3793, %v3756, 0
      %v3816 = vsel %vm3793, %v3757, 0
      %v3819 = vsel %vm3793, %v3758, 0
      %v3822 = vsel %vm3793, %v3759, 0
      %v3825 = vsel %vm3793, %v3760, 0
      %v3828 = vsel %vm3793, %v3761, 0
      %v3831 = vsel %vm3793, %v3762, 0
      %v3834 = vsel %vm3793, %v3763, 0
      %v3837 = vsel %vm3793, %v3764, 0
      %v3840 = vsel %vm3793, %v3765, 0
      %vm3842 = vcmask 1043456
      %v3844 = vsel %vm3842, %v3788, 0
      %3846 = vmatpush.bf16.msra.mxu0 0
      %3847 = vmatpush.bf16.msra.mxu0 0
      %3848 = vmatpush.bf16.msra.mxu0 0
      %3849 = vmatpush.bf16.msra.mxu0 %v3844
      %3850 = vmatpush.bf16.msra.mxu0 %v3787
      %3851 = vmatpush.bf16.msra.mxu0 %v3786
      %3852 = vmatpush.bf16.msra.mxu0 %v3785
      %3853 = vmatpush.bf16.msra.mxu0 %v3784
      %3854 = vmatmul.bf16.gmra.mxu0 %v3795
      %v3855 = vpop.f32.mrf.mxu0
      %v3856 = vadd.f32 0.0, %v3855
      %v3857 = vpop.f32.mrf.mxu0
      %v3858 = vadd.f32 0.0, %v3857
      %3859 = vmatmul.bf16.gmra.mxu0 %v3798
      %v3860 = vpop.f32.mrf.mxu0
      %v3861 = vpop.f32.mrf.mxu0
      %3862 = vmatmul.bf16.gmra.mxu0 %v3801
      %v3863 = vpop.f32.mrf.mxu0
      %v3864 = vadd.f32 0.0, %v3863
      %v3865 = vpop.f32.mrf.mxu0
      %v3866 = vadd.f32 0.0, %v3865
      %3867 = vmatmul.bf16.gmra.mxu0 %v3804
      %v3868 = vpop.f32.mrf.mxu0
      %v3869 = vpop.f32.mrf.mxu0
      %3870 = vmatmul.bf16.gmra.mxu0 %v3807
      %v3871 = vpop.f32.mrf.mxu0
      %v3872 = vadd.f32 0.0, %v3871
      %v3873 = vpop.f32.mrf.mxu0
      %v3874 = vadd.f32 0.0, %v3873
      %3875 = vmatmul.bf16.gmra.mxu0 %v3810
      %v3876 = vpop.f32.mrf.mxu0
      %v3877 = vpop.f32.mrf.mxu0
      %3878 = vmatmul.bf16.gmra.mxu0 %v3813
      %v3879 = vpop.f32.mrf.mxu0
      %v3880 = vadd.f32 0.0, %v3879
      %v3881 = vpop.f32.mrf.mxu0
      %v3882 = vadd.f32 0.0, %v3881
      %3883 = vmatmul.bf16.gmra.mxu0 %v3816
      %v3884 = vpop.f32.mrf.mxu0
      %v3885 = vpop.f32.mrf.mxu0
      %3886 = vmatmul.bf16.gmra.mxu0 %v3819
      %v3887 = vpop.f32.mrf.mxu0
      %v3888 = vadd.f32 0.0, %v3887
      %v3889 = vpop.f32.mrf.mxu0
      %v3890 = vadd.f32 0.0, %v3889
      %3891 = vmatmul.bf16.gmra.mxu0 %v3822
      %v3892 = vpop.f32.mrf.mxu0
      %v3893 = vpop.f32.mrf.mxu0
      %3894 = vmatmul.bf16.gmra.mxu0 %v3825
      %v3895 = vpop.f32.mrf.mxu0
      %v3896 = vadd.f32 0.0, %v3895
      %v3897 = vpop.f32.mrf.mxu0
      %v3898 = vadd.f32 0.0, %v3897
      %3899 = vmatmul.bf16.gmra.mxu0 %v3828
      %v3900 = vpop.f32.mrf.mxu0
      %v3901 = vpop.f32.mrf.mxu0
      %3902 = vmatmul.bf16.gmra.mxu0 %v3831
      %v3903 = vpop.f32.mrf.mxu0
      %v3904 = vadd.f32 0.0, %v3903
      %v3905 = vpop.f32.mrf.mxu0
      %v3906 = vadd.f32 0.0, %v3905
      %3907 = vmatmul.bf16.gmra.mxu0 %v3834
      %v3908 = vpop.f32.mrf.mxu0
      %v3909 = vpop.f32.mrf.mxu0
      %3910 = vmatmul.bf16.gmra.mxu0 %v3837
      %v3911 = vpop.f32.mrf.mxu0
      %v3912 = vadd.f32 0.0, %v3911
      %v3913 = vpop.f32.mrf.mxu0
      %v3914 = vadd.f32 0.0, %v3913
      %3915 = vmatmul.bf16.gmra.mxu0 %v3840
      %v3916 = vpop.f32.mrf.mxu0
      %v3917 = vpop.f32.mrf.mxu0
      %3918 = vdwg.mxu0
      %v3919 = vld [vmem:[%s7] sm:$0x1]
      %v3921 = vperm.slane %v3919, 0
      %v3923 = vmul.f32 %v3856, %v3921
      %v3924 = vmul.f32 %v3858, %v3921
      %v3925 = vmul.f32 %v3864, %v3921
      %v3926 = vmul.f32 %v3866, %v3921
      %v3927 = vmul.f32 %v3872, %v3921
      %v3928 = vmul.f32 %v3874, %v3921
      %v3929 = vmul.f32 %v3880, %v3921
      %v3930 = vmul.f32 %v3882, %v3921
      %v3931 = vmul.f32 %v3888, %v3921
      %v3932 = vmul.f32 %v3890, %v3921
      %v3933 = vmul.f32 %v3896, %v3921
      %v3934 = vmul.f32 %v3898, %v3921
      %v3935 = vmul.f32 %v3904, %v3921
      %v3936 = vmul.f32 %v3906, %v3921
      %v3937 = vmul.f32 %v3912, %v3921
      %v3938 = vmul.f32 %v3914, %v3921
      %v3939 = vld [vmem:[%s8] sm:$0x1]
      %v3941 = vperm.slane %v3939, 0
      %v3943 = vadd.f32 %v3923, %v3941
      %v3944 = vadd.f32 %v3924, %v3941
      %v3945 = vadd.f32 %v3925, %v3941
      %v3946 = vadd.f32 %v3926, %v3941
      %v3947 = vadd.f32 %v3927, %v3941
      %v3948 = vadd.f32 %v3928, %v3941
      %v3949 = vadd.f32 %v3929, %v3941
      %v3950 = vadd.f32 %v3930, %v3941
      %v3951 = vadd.f32 %v3931, %v3941
      %v3952 = vadd.f32 %v3932, %v3941
      %v3953 = vadd.f32 %v3933, %v3941
      %v3954 = vadd.f32 %v3934, %v3941
      %v3955 = vadd.f32 %v3935, %v3941
      %v3956 = vadd.f32 %v3936, %v3941
      %v3957 = vadd.f32 %v3937, %v3941
      %v3958 = vadd.f32 %v3938, %v3941
      %v3959 = vmax.f32 %v3943, 0.0
      %v3960 = vmax.f32 %v3944, 0.0
      %v3961 = vmax.f32 %v3945, 0.0
      %v3962 = vmax.f32 %v3946, 0.0
      %v3963 = vmax.f32 %v3947, 0.0
      %v3964 = vmax.f32 %v3948, 0.0
      %v3965 = vmax.f32 %v3949, 0.0
      %v3966 = vmax.f32 %v3950, 0.0
      %v3967 = vmax.f32 %v3951, 0.0
      %v3968 = vmax.f32 %v3952, 0.0
      %v3969 = vmax.f32 %v3953, 0.0
      %v3970 = vmax.f32 %v3954, 0.0
      %v3971 = vmax.f32 %v3955, 0.0
      %v3972 = vmax.f32 %v3956, 0.0
      %v3973 = vmax.f32 %v3957, 0.0
      %v3974 = vmax.f32 %v3958, 0.0
      %v3975 = vpack.c.bf16 %v3960, %v3959
      %v3976 = vpack.c.bf16 %v3962, %v3961
      %v3977 = vpack.c.bf16 %v3964, %v3963
      %v3978 = vpack.c.bf16 %v3966, %v3965
      %v3979 = vpack.c.bf16 %v3968, %v3967
      %v3980 = vpack.c.bf16 %v3970, %v3969
      %v3981 = vpack.c.bf16 %v3972, %v3971
      %v3982 = vpack.c.bf16 %v3974, %v3973
      %v3983 = vld [vmem:[%s9] sm:$0xf]
      %v3985 = vsel %vm1633, %v3975, 0
      %v3988 = vsel %vm1633, %v3976, 0
      %v3991 = vsel %vm1633, %v3977, 0
      %v3994 = vsel %vm1633, %v3978, 0
      %v3997 = vsel %vm1633, %v3979, 0
      %v4000 = vsel %vm1633, %v3980, 0
      %v4003 = vsel %vm1633, %v3981, 0
      %v4006 = vsel %vm1633, %v3982, 0
      %v4009 = vsel %vm3842, %v3983, 0
      %4011 = vmatpush.bf16.msra.mxu0 0
      %4012 = vmatpush.bf16.msra.mxu0 0
      %4013 = vmatpush.bf16.msra.mxu0 0
      %4014 = vmatpush.bf16.msra.mxu0 0
      %4015 = vmatpush.bf16.msra.mxu0 0
      %4016 = vmatpush.bf16.msra.mxu0 0
      %4017 = vmatpush.bf16.msra.mxu0 0
      %4018 = vmatpush.bf16.msra.mxu0 %v4009
      %4019 = vmatmul.bf16.gmra.mxu0 %v3985
      %v4020 = vpop.f32.mrf.mxu0
      %v4021 = vadd.f32 0.0, %v4020
      %v4022 = vpop.f32.mrf.mxu0
      %v4023 = vadd.f32 0.0, %v4022
      %4024 = vmatmul.bf16.gmra.mxu0 %v3988
      %v4025 = vpop.f32.mrf.mxu0
      %v4026 = vadd.f32 0.0, %v4025
      %v4027 = vpop.f32.mrf.mxu0
      %v4028 = vadd.f32 0.0, %v4027
      %4029 = vmatmul.bf16.gmra.mxu0 %v3991
      %v4030 = vpop.f32.mrf.mxu0
      %v4031 = vadd.f32 0.0, %v4030
      %v4032 = vpop.f32.mrf.mxu0
      %v4033 = vadd.f32 0.0, %v4032
      %4034 = vmatmul.bf16.gmra.mxu0 %v3994
      %v4035 = vpop.f32.mrf.mxu0
      %v4036 = vadd.f32 0.0, %v4035
      %v4037 = vpop.f32.mrf.mxu0
      %v4038 = vadd.f32 0.0, %v4037
      %4039 = vmatmul.bf16.gmra.mxu0 %v3997
      %v4040 = vpop.f32.mrf.mxu0
      %v4041 = vadd.f32 0.0, %v4040
      %v4042 = vpop.f32.mrf.mxu0
      %v4043 = vadd.f32 0.0, %v4042
      %4044 = vmatmul.bf16.gmra.mxu0 %v4000
      %v4045 = vpop.f32.mrf.mxu0
      %v4046 = vadd.f32 0.0, %v4045
      %v4047 = vpop.f32.mrf.mxu0
      %v4048 = vadd.f32 0.0, %v4047
      %4049 = vmatmul.bf16.gmra.mxu0 %v4003
      %v4050 = vpop.f32.mrf.mxu0
      %v4051 = vadd.f32 0.0, %v4050
      %v4052 = vpop.f32.mrf.mxu0
      %v4053 = vadd.f32 0.0, %v4052
      %4054 = vmatmul.bf16.gmra.mxu0 %v4006
      %v4055 = vpop.f32.mrf.mxu0
      %v4056 = vadd.f32 0.0, %v4055
      %v4057 = vpop.f32.mrf.mxu0
      %v4058 = vadd.f32 0.0, %v4057
      %4059 = vdwg.mxu0
      %v4060 = vld [vmem:[%s386] sm:$0xff]
      %v4061 = vld [vmem:[%s386 + $0x8] sm:$0xff]
      %v4062 = vld [vmem:[%s386 + $0x10] sm:$0xff]
      %v4063 = vld [vmem:[%s386 + $0x18] sm:$0xff]
      %v4064 = vld [vmem:[%s386 + $0x20] sm:$0xff]
      %v4065 = vld [vmem:[%s386 + $0x28] sm:$0xff]
      %v4066 = vld [vmem:[%s386 + $0x30] sm:$0xff]
      %v4067 = vld [vmem:[%s386 + $0x38] sm:$0xff]
      %v4068 = vld [vmem:[%s386 + $0x40] sm:$0xff]
      %v4069 = vld [vmem:[%s386 + $0x48] sm:$0xff]
      %v4070 = vld [vmem:[%s386 + $0x50] sm:$0xff]
      %v4071 = vld [vmem:[%s386 + $0x58] sm:$0xff]
      %v4072 = vld [vmem:[%s386 + $0x60] sm:$0xff]
      %v4073 = vld [vmem:[%s386 + $0x68] sm:$0xff]
      %v4074 = vld [vmem:[%s386 + $0x70] sm:$0xff]
      %v4075 = vld [vmem:[%s386 + $0x78] sm:$0xff]
      %v4076 = vadd.f32 %v4060, %v4021
      %v4077 = vadd.f32 %v4061, %v4023
      %v4078 = vadd.f32 %v4062, %v4026
      %v4079 = vadd.f32 %v4063, %v4028
      %v4080 = vadd.f32 %v4064, %v4031
      %v4081 = vadd.f32 %v4065, %v4033
      %v4082 = vadd.f32 %v4066, %v4036
      %v4083 = vadd.f32 %v4067, %v4038
      %v4084 = vadd.f32 %v4068, %v4041
      %v4085 = vadd.f32 %v4069, %v4043
      %v4086 = vadd.f32 %v4070, %v4046
      %v4087 = vadd.f32 %v4071, %v4048
      %v4088 = vadd.f32 %v4072, %v4051
      %v4089 = vadd.f32 %v4073, %v4053
      %v4090 = vadd.f32 %v4074, %v4056
      %v4091 = vadd.f32 %v4075, %v4058
      %4092 = vst.msk [vmem:[%s386] sm:$0xff] %vm839, %v4076
      %4093 = vst.msk [vmem:[%s386 + $0x8] sm:$0xff] %vm839, %v4077
      %4094 = vst.msk [vmem:[%s386 + $0x10] sm:$0xff] %vm839, %v4078
      %4095 = vst.msk [vmem:[%s386 + $0x18] sm:$0xff] %vm839, %v4079
      %4096 = vst.msk [vmem:[%s386 + $0x20] sm:$0xff] %vm839, %v4080
      %4097 = vst.msk [vmem:[%s386 + $0x28] sm:$0xff] %vm839, %v4081
      %4098 = vst.msk [vmem:[%s386 + $0x30] sm:$0xff] %vm839, %v4082
      %4099 = vst.msk [vmem:[%s386 + $0x38] sm:$0xff] %vm839, %v4083
      %4100 = vst.msk [vmem:[%s386 + $0x40] sm:$0xff] %vm839, %v4084
      %4101 = vst.msk [vmem:[%s386 + $0x48] sm:$0xff] %vm839, %v4085
      %4102 = vst.msk [vmem:[%s386 + $0x50] sm:$0xff] %vm839, %v4086
      %4103 = vst.msk [vmem:[%s386 + $0x58] sm:$0xff] %vm839, %v4087
      %4104 = vst.msk [vmem:[%s386 + $0x60] sm:$0xff] %vm839, %v4088
      %4105 = vst.msk [vmem:[%s386 + $0x68] sm:$0xff] %vm839, %v4089
      %4106 = vst.msk [vmem:[%s386 + $0x70] sm:$0xff] %vm839, %v4090
      %4107 = vst.msk [vmem:[%s386 + $0x78] sm:$0xff] %vm839, %v4091
      %p4108 = scmp.lt.s32.totalorder %s22, 1
      %s4109 = scalar_select %p4108, %s22, 1
      %s4110 = smul.addr %s4109, 16
      %s4111 = smul.addr %s4110, 8
      %s4112 = scalar_lea.vmem %s11, %s4111
      // Predicated region
      $region65: #{bottleneck_forward.1} parent=63 // pred_check
        %p4113 = pneg %p276
      $region66: #{bottleneck_forward.1} parent=63 // pred_check_branch
        %4115 = sbr.rel (%p4113) target = $region68
      $region67: #{bottleneck_forward.1} parent=63 // pred_region
        _
      $region68: #{bottleneck_forward.1} parent=63 // pred_fallthru
        _
    $region64: #{bottleneck_forward.1} parent=5 // pred_fallthru
      _
    %p4116 = scmp.le.s32.totalorder 2, %s17
    // Predicated region
    $region69: #{bottleneck_forward.1} parent=5 // pred_check
      %p4117 = pneg %p4116
    $region70: #{bottleneck_forward.1} parent=5 // pred_check_branch
      %4119 = sbr.rel (%p4117) target = $region72
    $region71: #{bottleneck_forward.1} parent=5 // pred_region
      %s4120 = ssub.s32 %s17, 2
      // Predicated region
      $region73: #{bottleneck_forward.1} parent=71 // pred_check
        %p4121 = pneg %p282
      $region74: #{bottleneck_forward.1} parent=71 // pred_check_branch
        %4123 = sbr.rel (%p4121) target = $region76
      $region75: #{bottleneck_forward.1} parent=71 // pred_region
        %p4124 = scmp.lt.s32.totalorder %s23, 1
        %s4125 = scalar_select %p4124, %s23, 1
        %s4126 = smul.addr %s4125, 16
        %s4127 = smul.addr %s4126, 8
        %s4128 = scalar_lea.vmem %s11, %s4127
      $region76: #{bottleneck_forward.1} parent=71 // pred_fallthru
        _
    $region72: #{bottleneck_forward.1} parent=5 // pred_fallthru
      _
  $region6: #{bottleneck_forward.1} parent=0 // loop_footer
    %s21 = sadd.s32 1, %s17
  $region7: #{bottleneck_forward.1} parent=0 // loop_footer_branch
    %16 = sbr.rel target = $region3
  $region8: #{bottleneck_forward.1} parent=0 // loop_exit
    _

</llo_original>
